<compile_context>
chip_gen: v7x
topology: tpu7x:2x2x1
jax: 0.10.0
libtpu: 0.0.40
codegen_flags: <defaults>
</compile_context>

<pallas_src>
import functools

import jax
import jax.numpy as jnp
from jax import lax
from jax.experimental import pallas as pl
from jax.experimental.pallas import tpu as pltpu


def _loss_kernel(scalars_ref, idx_i_ref, idx_j_ref, emb_ref, e_ref, out_ref):
    # scalars_ref : SMEM (2,) f32       -> [effective_margin, 1/num_pairs]
    # idx_i_ref   : VMEM (1, P) int32   -> first node of each sampled pair
    # idx_j_ref   : VMEM (1, P) int32   -> second node of each sampled pair
    # emb_ref     : VMEM (N, D)         -> raw node embeddings (any float dtype)
    # e_ref       : VMEM (N, 2)         -> per-node posteriors
    # out_ref     : VMEM (1, 1) f32     -> mean pair loss
    n = emb_ref.shape[0]
    p = idx_i_ref.shape[1]

    # ---- F.normalize(dim=1, eps=1e-12) on the (small) node table, once ----
    x = emb_ref[...].astype(jnp.float32)                     # (N, D)
    ns = jnp.sum(x * x, axis=1, keepdims=True)                # (N, 1)
    inv_norm = jnp.minimum(lax.rsqrt(ns), 1e12)               # clamp == eps=1e-12
    x_hat = x * inv_norm                                      # (N, D)

    e = e_ref[...].astype(jnp.float32)                        # (N, 2)

    # ---- fused gather: one-hot selection matrices, contracted on the MXU ----
    node_iota = lax.broadcasted_iota(jnp.int32, (n, p), 0)    # (N, P)
    onehot_i = (node_iota == idx_i_ref[...]).astype(jnp.float32)   # (N, P)
    onehot_j = (node_iota == idx_j_ref[...]).astype(jnp.float32)   # (N, P)

    dn = (((0,), (0,)), ((), ()))   # contract the node axis of both operands
    kw = dict(precision=lax.Precision.HIGHEST,
              preferred_element_type=jnp.float32)
    # Gathered pair embeddings, pair axis lane-dense: (D, P)
    xi_t = lax.dot_general(x_hat, onehot_i, dn, **kw)
    xj_t = lax.dot_general(x_hat, onehot_j, dn, **kw)
    # Gathered posteriors: (2, P)
    ei_t = lax.dot_general(e, onehot_i, dn, **kw)
    ej_t = lax.dot_general(e, onehot_j, dn, **kw)

    # Sublane reductions -> lane-dense (1, P) per-pair quantities.
    cos = jnp.sum(xi_t * xj_t, axis=0, keepdims=True)          # cosine similarity
    post = jnp.sum(ei_t * ej_t, axis=0, keepdims=True)         # posterior similarity

    eff_margin = scalars_ref[0]
    inv_denom = scalars_ref[1]

    positive_loss = (cos - 1.0) ** 2
    negative_loss = jnp.maximum(cos - eff_margin, 0.0) ** 2
    pair_loss = positive_loss * post + negative_loss * (1.0 - post)

    # One cross-lane reduce at the very end.
    out_ref[...] = jnp.sum(pair_loss, keepdims=True) * inv_denom


def _sample_pairs(E, key, num_pairs):
    """Posterior-based pair sampling (plain JAX; matches PyTorch semantics)."""
    k_cls, k0, k1 = jax.random.split(key, 3)
    eps = 1e-6
    global_class_probs = E.mean(axis=0)                               # (2,)
    sampled_classes = jax.random.categorical(
        k_cls, jnp.log(global_class_probs), shape=(num_pairs,))       # (P,)

    # torch.multinomial(1/(E[:,c]+eps), replacement=True)
    #   == categorical(logits = -log(E[:,c]+eps))
    logits0 = -jnp.log(E[:, 0] + eps)
    logits1 = -jnp.log(E[:, 1] + eps)
    pairs0 = jax.random.categorical(k0, logits0, shape=(num_pairs, 2))
    pairs1 = jax.random.categorical(k1, logits1, shape=(num_pairs, 2))
    sampled_pairs = jnp.where((sampled_classes == 0)[:, None], pairs0, pairs1)
    return (sampled_pairs[:, 0].astype(jnp.int32),
            sampled_pairs[:, 1].astype(jnp.int32))


@functools.partial(jax.jit, static_argnames=("num_pairs",))
def contrastive_loss(embeddings, E, raw_margin, key, *, num_pairs=512):
    """JAX/Pallas implementation of ContrastiveLoss.forward."""
    idx_i, idx_j = _sample_pairs(E, key, num_pairs)
    idx_i = idx_i.reshape(1, num_pairs)
    idx_j = idx_j.reshape(1, num_pairs)

    # softplus(raw_margin) and 1/num_pairs hoisted into two SMEM scalars.
    eff_margin = jax.nn.softplus(raw_margin.astype(jnp.float32))
    scalars = jnp.stack(
        [eff_margin, jnp.float32(1.0 / num_pairs)]).astype(jnp.float32)

    out = pl.pallas_call(
        _loss_kernel,
        out_shape=jax.ShapeDtypeStruct((1, 1), jnp.float32),
        in_specs=[
            pl.BlockSpec(memory_space=pltpu.MemorySpace.SMEM),   # scalars (2,)
            pl.BlockSpec(memory_space=pltpu.MemorySpace.VMEM),   # idx_i (1,P)
            pl.BlockSpec(memory_space=pltpu.MemorySpace.VMEM),   # idx_j (1,P)
            pl.BlockSpec(memory_space=pltpu.MemorySpace.VMEM),   # embeddings (N,D)
            pl.BlockSpec(memory_space=pltpu.MemorySpace.VMEM),   # E (N,2)
        ],
        out_specs=pl.BlockSpec(memory_space=pltpu.MemorySpace.VMEM),
    )(scalars, idx_i, idx_j, embeddings, E)
    return out[0, 0]


def _reference_loss(embeddings, E, raw_margin, key, num_pairs):
    """Pure-JAX reference (same sampling keys -> identical pair indices)."""
    idx_i, idx_j = _sample_pairs(E, key, num_pairs)
    x = embeddings.astype(jnp.float32)
    inv = jnp.minimum(lax.rsqrt(jnp.sum(x * x, axis=1, keepdims=True)), 1e12)
    x_hat = x * inv
    cos = jnp.sum(x_hat[idx_i] * x_hat[idx_j], axis=1)
    ef = E.astype(jnp.float32)
    post = jnp.sum(ef[idx_i] * ef[idx_j], axis=1)
    m = jax.nn.softplus(raw_margin.astype(jnp.float32))
    pos = (cos - 1.0) ** 2
    neg = jnp.maximum(cos - m, 0.0) ** 2
    return jnp.mean(pos * post + neg * (1.0 - post))


if __name__ == "__main__":
    key = jax.random.PRNGKey(0)
    k_emb, k_e, k_sample = jax.random.split(key, 3)

    # Small, module-consistent shapes: N nodes, hidden dim D, 2 classes.
    N, D = 64, 32
    num_pairs = 512

    embeddings = jax.random.normal(k_emb, (N, D), dtype=jnp.float32)
    logits = jax.random.normal(k_e, (N, 2), dtype=jnp.float32)
    E = jax.nn.softmax(logits, axis=1)          # per-node posterior over 2 classes

    # nn.Parameter(torch.tensor(margin)) — deterministic init, margin = 0.5
    raw_margin = jnp.asarray(0.5, dtype=jnp.float32)

    loss = contrastive_loss(embeddings, E, raw_margin, k_sample,
                            num_pairs=num_pairs)
    loss = jax.block_until_ready(loss)

    # Sanity: finite scalar, matches pure-JAX reference with identical sampling.
    ref = _reference_loss(embeddings, E, raw_margin, k_sample, num_pairs)
    assert loss.shape == () and bool(jnp.isfinite(loss))
    assert bool(jnp.allclose(loss, ref, rtol=5e-4, atol=1e-5)), (loss, ref)
    print("KERNEL_OK")
</pallas_src>

<mosaic_0001>
module attributes {stable_mosaic.version = 11 : i64} {
  func.func @_loss_kernel(%arg0: memref<2xf32, #tpu.memory_space<smem>>, %arg1: memref<1x512xi32, #tpu.memory_space<vmem>>, %arg2: memref<1x512xi32, #tpu.memory_space<vmem>>, %arg3: memref<64x32xf32, #tpu.memory_space<vmem>>, %arg4: memref<64x2xf32, #tpu.memory_space<vmem>>, %arg5: memref<1x1xf32, #tpu.memory_space<vmem>>) attributes {dimension_semantics = [], scalar_prefetch = 0 : i64, scratch_operands = 0 : i64, tpu.core_type = #tpu.core_type<tc>} {
    %c0 = arith.constant 0 : index
    %c0_0 = arith.constant 0 : index
    %0 = vector.load %arg3[%c0, %c0_0] : memref<64x32xf32, #tpu.memory_space<vmem>>, vector<64x32xf32>
    %1 = arith.mulf %0, %0 : vector<64x32xf32>
    %cst = arith.constant dense<0.000000e+00> : vector<64xf32>
    %2 = vector.multi_reduction <add>, %1, %cst [1] : vector<64x32xf32> to vector<64xf32>
    %3 = vector.shape_cast %2 : vector<64xf32> to vector<64x1xf32>
    %4 = math.rsqrt %3 : vector<64x1xf32>
    %cst_1 = arith.constant 9.99999995E+11 : f32
    %5 = vector.broadcast %cst_1 : f32 to vector<64x1xf32>
    %6 = arith.minimumf %4, %5 : vector<64x1xf32>
    %7 = vector.broadcast %6 : vector<64x1xf32> to vector<64x32xf32>
    %8 = arith.mulf %0, %7 : vector<64x32xf32>
    %c0_2 = arith.constant 0 : index
    %c0_3 = arith.constant 0 : index
    %9 = vector.load %arg4[%c0_2, %c0_3] : memref<64x2xf32, #tpu.memory_space<vmem>>, vector<64x2xf32>
    %10 = tpu.iota {dimensions = array<i32: 0>} : vector<64x512xi32>
    %c0_4 = arith.constant 0 : index
    %c0_5 = arith.constant 0 : index
    %11 = vector.load %arg1[%c0_4, %c0_5] : memref<1x512xi32, #tpu.memory_space<vmem>>, vector<1x512xi32>
    %12 = vector.broadcast %11 : vector<1x512xi32> to vector<64x512xi32>
    %13 = arith.cmpi eq, %10, %12 : vector<64x512xi32>
    %14 = arith.extui %13 : vector<64x512xi1> to vector<64x512xi32>
    %15 = arith.sitofp %14 : vector<64x512xi32> to vector<64x512xf32>
    %c0_6 = arith.constant 0 : index
    %c0_7 = arith.constant 0 : index
    %16 = vector.load %arg2[%c0_6, %c0_7] : memref<1x512xi32, #tpu.memory_space<vmem>>, vector<1x512xi32>
    %17 = vector.broadcast %16 : vector<1x512xi32> to vector<64x512xi32>
    %18 = arith.cmpi eq, %10, %17 : vector<64x512xi32>
    %19 = arith.extui %18 : vector<64x512xi1> to vector<64x512xi32>
    %20 = arith.sitofp %19 : vector<64x512xi32> to vector<64x512xf32>
    %cst_8 = arith.constant dense<0.000000e+00> : vector<32x512xf32>
    %21 = tpu.matmul %8, %15, %cst_8 {dimension_numbers = #tpu.dot_dimension_numbers<[0], [0], [1], [1], [0, 1, 1, 1], [], []>, precision = #tpu.contract_precision<fp32>} : vector<64x32xf32>, vector<64x512xf32>, vector<32x512xf32> -> vector<32x512xf32>
    %cst_9 = arith.constant dense<0.000000e+00> : vector<32x512xf32>
    %22 = tpu.matmul %8, %20, %cst_9 {dimension_numbers = #tpu.dot_dimension_numbers<[0], [0], [1], [1], [0, 1, 1, 1], [], []>, precision = #tpu.contract_precision<fp32>} : vector<64x32xf32>, vector<64x512xf32>, vector<32x512xf32> -> vector<32x512xf32>
    %cst_10 = arith.constant dense<0.000000e+00> : vector<2x512xf32>
    %23 = tpu.matmul %9, %15, %cst_10 {dimension_numbers = #tpu.dot_dimension_numbers<[0], [0], [1], [1], [0, 1, 1, 1], [], []>, precision = #tpu.contract_precision<fp32>} : vector<64x2xf32>, vector<64x512xf32>, vector<2x512xf32> -> vector<2x512xf32>
    %cst_11 = arith.constant dense<0.000000e+00> : vector<2x512xf32>
    %24 = tpu.matmul %9, %20, %cst_11 {dimension_numbers = #tpu.dot_dimension_numbers<[0], [0], [1], [1], [0, 1, 1, 1], [], []>, precision = #tpu.contract_precision<fp32>} : vector<64x2xf32>, vector<64x512xf32>, vector<2x512xf32> -> vector<2x512xf32>
    %25 = arith.mulf %21, %22 : vector<32x512xf32>
    %cst_12 = arith.constant dense<0.000000e+00> : vector<512xf32>
    %26 = vector.multi_reduction <add>, %25, %cst_12 [0] : vector<32x512xf32> to vector<512xf32>
    %27 = vector.shape_cast %26 : vector<512xf32> to vector<1x512xf32>
    %28 = arith.mulf %23, %24 : vector<2x512xf32>
    %cst_13 = arith.constant dense<0.000000e+00> : vector<512xf32>
    %29 = vector.multi_reduction <add>, %28, %cst_13 [0] : vector<2x512xf32> to vector<512xf32>
    %30 = vector.shape_cast %29 : vector<512xf32> to vector<1x512xf32>
    %c0_14 = arith.constant 0 : index
    %31 = memref.load %arg0[%c0_14] : memref<2xf32, #tpu.memory_space<smem>>
    %c1 = arith.constant 1 : index
    %32 = memref.load %arg0[%c1] : memref<2xf32, #tpu.memory_space<smem>>
    %cst_15 = arith.constant 1.000000e+00 : f32
    %33 = vector.broadcast %cst_15 : f32 to vector<1x512xf32>
    %34 = arith.subf %27, %33 : vector<1x512xf32>
    %35 = arith.mulf %34, %34 : vector<1x512xf32>
    %36 = vector.broadcast %31 : f32 to vector<1x512xf32>
    %37 = arith.subf %27, %36 : vector<1x512xf32>
    %cst_16 = arith.constant 0.000000e+00 : f32
    %38 = vector.broadcast %cst_16 : f32 to vector<1x512xf32>
    %39 = arith.maximumf %37, %38 : vector<1x512xf32>
    %40 = arith.mulf %39, %39 : vector<1x512xf32>
    %41 = arith.mulf %35, %30 : vector<1x512xf32>
    %cst_17 = arith.constant 1.000000e+00 : f32
    %42 = vector.broadcast %cst_17 : f32 to vector<1x512xf32>
    %43 = arith.subf %42, %30 : vector<1x512xf32>
    %44 = arith.mulf %40, %43 : vector<1x512xf32>
    %45 = arith.addf %41, %44 : vector<1x512xf32>
    %46 = vector.shape_cast %45 : vector<1x512xf32> to vector<1x1x512xf32>
    %cst_18 = arith.constant dense<0.000000e+00> : vector<1xf32>
    %47 = vector.multi_reduction <add>, %46, %cst_18 [1, 2] : vector<1x1x512xf32> to vector<1xf32>
    %48 = vector.shape_cast %47 : vector<1xf32> to vector<1x1x1xf32>
    %49 = vector.extract %48[0, 0, 0] : f32 from vector<1x1x1xf32>
    %50 = vector.broadcast %49 : f32 to vector<1x1xf32>
    %51 = vector.broadcast %32 : f32 to vector<1x1xf32>
    %52 = arith.mulf %50, %51 : vector<1x1xf32>
    %c0_19 = arith.constant 0 : index
    %c0_20 = arith.constant 0 : index
    %53 = vector.load %arg5[%c0_19, %c0_20] : memref<1x1xf32, #tpu.memory_space<vmem>>, vector<1x1xf32>
    tpu.vector_store %arg5[%c0_19, %c0_20], %52 {strides = array<i32>} : memref<1x1xf32, #tpu.memory_space<vmem>>, vector<1x1xf32>,
    return
  }
}

</mosaic_0001>

<llo_original>
// kernel: contrastive_loss.1
$region0: #{contrastive_loss.1}
  #allocation0 [shape = 'u32[]', space=smem, size = 0x4, offset = 0x4, fixed_abs, tag = 'smem constant byte address 0x4 - core index']
  #allocation1 [shape = 'u32[144,128]{1,0:T(1,128)}', space=vmem, size = 0x12000, scoped, tag = 'internal scratch']
  %s0 = inlined_call_operand.vmem [shape: f32[2], index: 0, kind: input, shape index: {}]
  %s1 = inlined_call_operand.vmem [shape: s32[1,512], index: 1, kind: input, shape index: {}]
  %s2 = inlined_call_operand.vmem [shape: s32[1,512], index: 2, kind: input, shape index: {}]
  %s3 = inlined_call_operand.vmem [shape: f32[64,32], index: 3, kind: input, shape index: {}]
  %s4 = inlined_call_operand.vmem [shape: f32[64,2], index: 4, kind: input, shape index: {}]
  %s5 = inlined_call_operand.hbm [shape: f32[1,1], index: 5, kind: output, shape index: {}]
  %s6 = sld [smem:[#allocation0]]
  $region34: #{contrastive_loss.1} parent=0
    _
  %s8 = ssub.s32 1, %s6
  %s9 = scalar_select 0, %s8, %s6
  $region1: #{contrastive_loss.1} parent=0
    #allocation2 [shape = 'u8[512]{0}', space=smem, size = 0x200, scoped, tag = 'input window, operand 0, single buffered']
    #allocation3 [shape = 's32[1]{0}', space=sflag, size = 0x4, scoped, tag = 'scoped memory for contrastive_loss.1']
    #allocation4 [shape = 's32[1]{0}', space=sflag, size = 0x4, scoped, tag = 'scoped memory for contrastive_loss.1']
    #allocation5 [shape = 'u8[512]{0}', space=vmem, size = 0x400, scoped, tag = 'output window, operand 0, single buffered']
    %10 = vsyncpa [#allocation4], 0
    %11 = vsyncpa [#allocation3], 0
    // Predicated region
    $region2: #{contrastive_loss.1} parent=1 // pred_check
      _
    $region3: #{contrastive_loss.1} parent=1 // pred_check_branch
      %13 = sbr.rel (0) target = $region5
    $region4: #{contrastive_loss.1} parent=1 // pred_region
      %s15 = ssub.s32 16, 16
      %16 = vsyncadd [#allocation4], %s15
      %s18 = sshll.u32 %s0, 4
      %s19 = int_to_ptr.vmem [resolvable:$true] %s18
      %21 = dma.vmem_to_smem %s19, 16, [#allocation2], [#allocation4]
    $region5: #{contrastive_loss.1} parent=1 // pred_fallthru
      _
    // Predicated region
    $region6: #{contrastive_loss.1} parent=1 // pred_check
      _
    $region7: #{contrastive_loss.1} parent=1 // pred_check_branch
      %23 = sbr.rel (0) target = $region9
    $region8: #{contrastive_loss.1} parent=1 // pred_region
      _
    $region9: #{contrastive_loss.1} parent=1 // pred_fallthru
      _
    // Predicated region
    $region10: #{contrastive_loss.1} parent=1 // pred_check
      _
    $region11: #{contrastive_loss.1} parent=1 // pred_check_branch
      %25 = sbr.rel (0) target = $region13
    $region12: #{contrastive_loss.1} parent=1 // pred_region
      _
    $region13: #{contrastive_loss.1} parent=1 // pred_fallthru
      _
    // Predicated region
    $region14: #{contrastive_loss.1} parent=1 // pred_check
      _
    $region15: #{contrastive_loss.1} parent=1 // pred_check_branch
      %27 = sbr.rel (0) target = $region17
    $region16: #{contrastive_loss.1} parent=1 // pred_region
      _
    $region17: #{contrastive_loss.1} parent=1 // pred_fallthru
      _
    // Predicated region
    $region18: #{contrastive_loss.1} parent=1 // pred_check
      _
    $region19: #{contrastive_loss.1} parent=1 // pred_check_branch
      %29 = sbr.rel (0) target = $region21
    $region20: #{contrastive_loss.1} parent=1 // pred_region
      _
    $region21: #{contrastive_loss.1} parent=1 // pred_fallthru
      _
    // Predicated region
    $region22: #{contrastive_loss.1} parent=1 // pred_check
      _
    $region23: #{contrastive_loss.1} parent=1 // pred_check_branch
      %31 = sbr.rel (0) target = $region25
    $region24: #{contrastive_loss.1} parent=1 // pred_region
      %32 = dma.done [#allocation4], 16
    $region25: #{contrastive_loss.1} parent=1 // pred_fallthru
      _
    %33 = sfence
    %v34 = vld [vmem:[%s3] sm:$0xff]
    %v35 = vld [vmem:[%s3 + $0x8] sm:$0xff]
    %v36 = vld [vmem:[%s3 + $0x10] sm:$0xff]
    %v37 = vld [vmem:[%s3 + $0x18] sm:$0xff]
    %v38 = vld [vmem:[%s3 + $0x20] sm:$0xff]
    %v39 = vld [vmem:[%s3 + $0x28] sm:$0xff]
    %v40 = vld [vmem:[%s3 + $0x30] sm:$0xff]
    %v41 = vld [vmem:[%s3 + $0x38] sm:$0xff]
    %v42 = vmul.f32 %v34, %v34
    %v43 = vmul.f32 %v35, %v35
    %v44 = vmul.f32 %v36, %v36
    %v45 = vmul.f32 %v37, %v37
    %v46 = vmul.f32 %v38, %v38
    %v47 = vmul.f32 %v39, %v39
    %v48 = vmul.f32 %v40, %v40
    %v49 = vmul.f32 %v41, %v41
    %vm50 = vcmask 261120
    %v51 = vsel %vm50, %v42, 0.0
    %52 = vadd.xlane.f32.xlu0 %v51
    %v53 = vpop.xlane.xlu0 %52
    %v54 = vsel %vm50, %v43, 0.0
    %55 = vadd.xlane.f32.xlu0 %v54
    %v56 = vpop.xlane.xlu0 %55
    %v57 = vsel %vm50, %v44, 0.0
    %58 = vadd.xlane.f32.xlu0 %v57
    %v59 = vpop.xlane.xlu0 %58
    %v60 = vsel %vm50, %v45, 0.0
    %61 = vadd.xlane.f32.xlu0 %v60
    %v62 = vpop.xlane.xlu0 %61
    %v63 = vsel %vm50, %v46, 0.0
    %64 = vadd.xlane.f32.xlu0 %v63
    %v65 = vpop.xlane.xlu0 %64
    %v66 = vsel %vm50, %v47, 0.0
    %67 = vadd.xlane.f32.xlu0 %v66
    %v68 = vpop.xlane.xlu0 %67
    %v69 = vsel %vm50, %v48, 0.0
    %70 = vadd.xlane.f32.xlu0 %v69
    %v71 = vpop.xlane.xlu0 %70
    %v72 = vsel %vm50, %v49, 0.0
    %73 = vadd.xlane.f32.xlu0 %v72
    %v74 = vpop.xlane.xlu0 %73
    %v75 = vrsqrt.pop %v53
    %v76 = vrsqrt.pop %v56
    %v77 = vrsqrt.pop %v59
    %v78 = vrsqrt.pop %v62
    %v79 = vrsqrt.pop %v65
    %v80 = vrsqrt.pop %v68
    %v81 = vrsqrt.pop %v71
    %v82 = vrsqrt.pop %v74
    %v83 = vmin.f32 %v75, 1e+12
    %v84 = vmin.f32 %v76, 1e+12
    %v85 = vmin.f32 %v77, 1e+12
    %v86 = vmin.f32 %v78, 1e+12
    %v87 = vmin.f32 %v79, 1e+12
    %v88 = vmin.f32 %v80, 1e+12
    %v89 = vmin.f32 %v81, 1e+12
    %v90 = vmin.f32 %v82, 1e+12
    %v91 = vmul.f32 %v34, %v83
    %v92 = vmul.f32 %v35, %v84
    %v93 = vmul.f32 %v36, %v85
    %v94 = vmul.f32 %v37, %v86
    %v95 = vmul.f32 %v38, %v87
    %v96 = vmul.f32 %v39, %v88
    %v97 = vmul.f32 %v40, %v89
    %v98 = vmul.f32 %v41, %v90
    %v99 = vld [vmem:[%s4] sm:$0xff]
    %v100 = vld [vmem:[%s4 + $0x8] sm:$0xff]
    %v101 = vld [vmem:[%s4 + $0x10] sm:$0xff]
    %v102 = vld [vmem:[%s4 + $0x18] sm:$0xff]
    %v103 = vld [vmem:[%s4 + $0x20] sm:$0xff]
    %v104 = vld [vmem:[%s4 + $0x28] sm:$0xff]
    %v105 = vld [vmem:[%s4 + $0x30] sm:$0xff]
    %v106 = vld [vmem:[%s4 + $0x38] sm:$0xff]
    %v107 = vlaneseq
    %v108 = vshrl.u32 %v107, 7
    %v109 = vadd.s32 %v108, 8
    %v110 = vadd.s32 %v108, 16
    %v111 = vadd.s32 %v108, 24
    %v112 = vadd.s32 %v108, 32
    %v113 = vadd.s32 %v108, 40
    %v114 = vadd.s32 %v108, 48
    %v115 = vadd.s32 %v108, 56
    %v116 = vld [vmem:[%s1] sm:$0xf]
    %v117 = vlaneseq
    %v118 = vshrl.u32 %v117, 7
    %v119 = vsub.s32 0, %v118
    %v120 = vrot.slane %v116, %v119
    %v121 = vlaneseq
    %v122 = vshrl.u32 %v121, 7
    %v123 = vsub.s32 1, %v122
    %v124 = vrot.slane %v116, %v123
    %v125 = vlaneseq
    %v126 = vshrl.u32 %v125, 7
    %v127 = vsub.s32 2, %v126
    %v128 = vrot.slane %v116, %v127
    %v129 = vlaneseq
    %v130 = vshrl.u32 %v129, 7
    %v131 = vsub.s32 3, %v130
    %v132 = vrot.slane %v116, %v131
    %vm133 = vcmp.eq.s32.totalorder %v108, %v120
    %vm134 = vcmp.eq.s32.totalorder %v108, %v124
    %vm135 = vcmp.eq.s32.totalorder %v108, %v128
    %vm136 = vcmp.eq.s32.totalorder %v108, %v132
    %vm137 = vcmp.eq.s32.totalorder %v109, %v120
    %vm138 = vcmp.eq.s32.totalorder %v109, %v124
    %vm139 = vcmp.eq.s32.totalorder %v109, %v128
    %vm140 = vcmp.eq.s32.totalorder %v109, %v132
    %vm141 = vcmp.eq.s32.totalorder %v110, %v120
    %vm142 = vcmp.eq.s32.totalorder %v110, %v124
    %vm143 = vcmp.eq.s32.totalorder %v110, %v128
    %vm144 = vcmp.eq.s32.totalorder %v110, %v132
    %vm145 = vcmp.eq.s32.totalorder %v111, %v120
    %vm146 = vcmp.eq.s32.totalorder %v111, %v124
    %vm147 = vcmp.eq.s32.totalorder %v111, %v128
    %vm148 = vcmp.eq.s32.totalorder %v111, %v132
    %vm149 = vcmp.eq.s32.totalorder %v112, %v120
    %vm150 = vcmp.eq.s32.totalorder %v112, %v124
    %vm151 = vcmp.eq.s32.totalorder %v112, %v128
    %vm152 = vcmp.eq.s32.totalorder %v112, %v132
    %vm153 = vcmp.eq.s32.totalorder %v113, %v120
    %vm154 = vcmp.eq.s32.totalorder %v113, %v124
    %vm155 = vcmp.eq.s32.totalorder %v113, %v128
    %vm156 = vcmp.eq.s32.totalorder %v113, %v132
    %vm157 = vcmp.eq.s32.totalorder %v114, %v120
    %vm158 = vcmp.eq.s32.totalorder %v114, %v124
    %vm159 = vcmp.eq.s32.totalorder %v114, %v128
    %vm160 = vcmp.eq.s32.totalorder %v114, %v132
    %vm161 = vcmp.eq.s32.totalorder %v115, %v120
    %vm162 = vcmp.eq.s32.totalorder %v115, %v124
    %vm163 = vcmp.eq.s32.totalorder %v115, %v128
    %vm164 = vcmp.eq.s32.totalorder %v115, %v132
    %v165 = vsel %vm133, 1, 0
    %v166 = vsel %vm134, 1, 0
    %v167 = vsel %vm135, 1, 0
    %v168 = vsel %vm136, 1, 0
    %v169 = vsel %vm137, 1, 0
    %v170 = vsel %vm138, 1, 0
    %v171 = vsel %vm139, 1, 0
    %v172 = vsel %vm140, 1, 0
    %v173 = vsel %vm141, 1, 0
    %v174 = vsel %vm142, 1, 0
    %v175 = vsel %vm143, 1, 0
    %v176 = vsel %vm144, 1, 0
    %v177 = vsel %vm145, 1, 0
    %v178 = vsel %vm146, 1, 0
    %v179 = vsel %vm147, 1, 0
    %v180 = vsel %vm148, 1, 0
    %v181 = vsel %vm149, 1, 0
    %v182 = vsel %vm150, 1, 0
    %v183 = vsel %vm151, 1, 0
    %v184 = vsel %vm152, 1, 0
    %v185 = vsel %vm153, 1, 0
    %v186 = vsel %vm154, 1, 0
    %v187 = vsel %vm155, 1, 0
    %v188 = vsel %vm156, 1, 0
    %v189 = vsel %vm157, 1, 0
    %v190 = vsel %vm158, 1, 0
    %v191 = vsel %vm159, 1, 0
    %v192 = vsel %vm160, 1, 0
    %v193 = vsel %vm161, 1, 0
    %v194 = vsel %vm162, 1, 0
    %v195 = vsel %vm163, 1, 0
    %v196 = vsel %vm164, 1, 0
    %v197 = vcvt.s32.f32 %v165
    %v198 = vcvt.s32.f32 %v166
    %v199 = vcvt.s32.f32 %v167
    %v200 = vcvt.s32.f32 %v168
    %v201 = vcvt.s32.f32 %v169
    %v202 = vcvt.s32.f32 %v170
    %v203 = vcvt.s32.f32 %v171
    %v204 = vcvt.s32.f32 %v172
    %v205 = vcvt.s32.f32 %v173
    %v206 = vcvt.s32.f32 %v174
    %v207 = vcvt.s32.f32 %v175
    %v208 = vcvt.s32.f32 %v176
    %v209 = vcvt.s32.f32 %v177
    %v210 = vcvt.s32.f32 %v178
    %v211 = vcvt.s32.f32 %v179
    %v212 = vcvt.s32.f32 %v180
    %v213 = vcvt.s32.f32 %v181
    %v214 = vcvt.s32.f32 %v182
    %v215 = vcvt.s32.f32 %v183
    %v216 = vcvt.s32.f32 %v184
    %v217 = vcvt.s32.f32 %v185
    %v218 = vcvt.s32.f32 %v186
    %v219 = vcvt.s32.f32 %v187
    %v220 = vcvt.s32.f32 %v188
    %v221 = vcvt.s32.f32 %v189
    %v222 = vcvt.s32.f32 %v190
    %v223 = vcvt.s32.f32 %v191
    %v224 = vcvt.s32.f32 %v192
    %v225 = vcvt.s32.f32 %v193
    %v226 = vcvt.s32.f32 %v194
    %v227 = vcvt.s32.f32 %v195
    %v228 = vcvt.s32.f32 %v196
    %v229 = vld [vmem:[%s2] sm:$0xf]
    %v230 = vlaneseq
    %v231 = vshrl.u32 %v230, 7
    %v232 = vsub.s32 0, %v231
    %v233 = vrot.slane %v229, %v232
    %v234 = vlaneseq
    %v235 = vshrl.u32 %v234, 7
    %v236 = vsub.s32 1, %v235
    %v237 = vrot.slane %v229, %v236
    %v238 = vlaneseq
    %v239 = vshrl.u32 %v238, 7
    %v240 = vsub.s32 2, %v239
    %v241 = vrot.slane %v229, %v240
    %v242 = vlaneseq
    %v243 = vshrl.u32 %v242, 7
    %v244 = vsub.s32 3, %v243
    %v245 = vrot.slane %v229, %v244
    %vm246 = vcmp.eq.s32.totalorder %v108, %v233
    %vm247 = vcmp.eq.s32.totalorder %v108, %v237
    %vm248 = vcmp.eq.s32.totalorder %v108, %v241
    %vm249 = vcmp.eq.s32.totalorder %v108, %v245
    %vm250 = vcmp.eq.s32.totalorder %v109, %v233
    %vm251 = vcmp.eq.s32.totalorder %v109, %v237
    %vm252 = vcmp.eq.s32.totalorder %v109, %v241
    %vm253 = vcmp.eq.s32.totalorder %v109, %v245
    %vm254 = vcmp.eq.s32.totalorder %v110, %v233
    %vm255 = vcmp.eq.s32.totalorder %v110, %v237
    %vm256 = vcmp.eq.s32.totalorder %v110, %v241
    %vm257 = vcmp.eq.s32.totalorder %v110, %v245
    %vm258 = vcmp.eq.s32.totalorder %v111, %v233
    %vm259 = vcmp.eq.s32.totalorder %v111, %v237
    %vm260 = vcmp.eq.s32.totalorder %v111, %v241
    %vm261 = vcmp.eq.s32.totalorder %v111, %v245
    %vm262 = vcmp.eq.s32.totalorder %v112, %v233
    %vm263 = vcmp.eq.s32.totalorder %v112, %v237
    %vm264 = vcmp.eq.s32.totalorder %v112, %v241
    %vm265 = vcmp.eq.s32.totalorder %v112, %v245
    %vm266 = vcmp.eq.s32.totalorder %v113, %v233
    %vm267 = vcmp.eq.s32.totalorder %v113, %v237
    %vm268 = vcmp.eq.s32.totalorder %v113, %v241
    %vm269 = vcmp.eq.s32.totalorder %v113, %v245
    %vm270 = vcmp.eq.s32.totalorder %v114, %v233
    %vm271 = vcmp.eq.s32.totalorder %v114, %v237
    %vm272 = vcmp.eq.s32.totalorder %v114, %v241
    %vm273 = vcmp.eq.s32.totalorder %v114, %v245
    %vm274 = vcmp.eq.s32.totalorder %v115, %v233
    %vm275 = vcmp.eq.s32.totalorder %v115, %v237
    %vm276 = vcmp.eq.s32.totalorder %v115, %v241
    %vm277 = vcmp.eq.s32.totalorder %v115, %v245
    %v278 = vsel %vm246, 1, 0
    %v279 = vsel %vm247, 1, 0
    %v280 = vsel %vm248, 1, 0
    %v281 = vsel %vm249, 1, 0
    %v282 = vsel %vm250, 1, 0
    %v283 = vsel %vm251, 1, 0
    %v284 = vsel %vm252, 1, 0
    %v285 = vsel %vm253, 1, 0
    %v286 = vsel %vm254, 1, 0
    %v287 = vsel %vm255, 1, 0
    %v288 = vsel %vm256, 1, 0
    %v289 = vsel %vm257, 1, 0
    %v290 = vsel %vm258, 1, 0
    %v291 = vsel %vm259, 1, 0
    %v292 = vsel %vm260, 1, 0
    %v293 = vsel %vm261, 1, 0
    %v294 = vsel %vm262, 1, 0
    %v295 = vsel %vm263, 1, 0
    %v296 = vsel %vm264, 1, 0
    %v297 = vsel %vm265, 1, 0
    %v298 = vsel %vm266, 1, 0
    %v299 = vsel %vm267, 1, 0
    %v300 = vsel %vm268, 1, 0
    %v301 = vsel %vm269, 1, 0
    %v302 = vsel %vm270, 1, 0
    %v303 = vsel %vm271, 1, 0
    %v304 = vsel %vm272, 1, 0
    %v305 = vsel %vm273, 1, 0
    %v306 = vsel %vm274, 1, 0
    %v307 = vsel %vm275, 1, 0
    %v308 = vsel %vm276, 1, 0
    %v309 = vsel %vm277, 1, 0
    %v310 = vcvt.s32.f32 %v278
    %v311 = vcvt.s32.f32 %v279
    %v312 = vcvt.s32.f32 %v280
    %v313 = vcvt.s32.f32 %v281
    %v314 = vcvt.s32.f32 %v282
    %v315 = vcvt.s32.f32 %v283
    %v316 = vcvt.s32.f32 %v284
    %v317 = vcvt.s32.f32 %v285
    %v318 = vcvt.s32.f32 %v286
    %v319 = vcvt.s32.f32 %v287
    %v320 = vcvt.s32.f32 %v288
    %v321 = vcvt.s32.f32 %v289
    %v322 = vcvt.s32.f32 %v290
    %v323 = vcvt.s32.f32 %v291
    %v324 = vcvt.s32.f32 %v292
    %v325 = vcvt.s32.f32 %v293
    %v326 = vcvt.s32.f32 %v294
    %v327 = vcvt.s32.f32 %v295
    %v328 = vcvt.s32.f32 %v296
    %v329 = vcvt.s32.f32 %v297
    %v330 = vcvt.s32.f32 %v298
    %v331 = vcvt.s32.f32 %v299
    %v332 = vcvt.s32.f32 %v300
    %v333 = vcvt.s32.f32 %v301
    %v334 = vcvt.s32.f32 %v302
    %v335 = vcvt.s32.f32 %v303
    %v336 = vcvt.s32.f32 %v304
    %v337 = vcvt.s32.f32 %v305
    %v338 = vcvt.s32.f32 %v306
    %v339 = vcvt.s32.f32 %v307
    %v340 = vcvt.s32.f32 %v308
    %v341 = vcvt.s32.f32 %v309
    %342 = vxpose.xlu0.b32.start [1/16] %v91, 128
    %343 = vxpose.xlu0.b32.cont [2/16] %v92, 128
    %344 = vxpose.xlu0.b32.cont [3/16] %v93, 128
    %345 = vxpose.xlu0.b32.cont [4/16] %v94, 128
    %346 = vxpose.xlu0.b32.cont [5/16] %v95, 128
    %347 = vxpose.xlu0.b32.cont [6/16] %v96, 128
    %348 = vxpose.xlu0.b32.cont [7/16] %v97, 128
    %349 = vxpose.xlu0.b32.cont [8/16] %v98, 128
    %350 = vxpose.xlu0.b32.cont [9/16] 0.0, 128
    %351 = vxpose.xlu0.b32.cont [10/16] 0.0, 128
    %352 = vxpose.xlu0.b32.cont [11/16] 0.0, 128
    %353 = vxpose.xlu0.b32.cont [12/16] 0.0, 128
    %354 = vxpose.xlu0.b32.cont [13/16] 0.0, 128
    %355 = vxpose.xlu0.b32.cont [14/16] 0.0, 128
    %356 = vxpose.xlu0.b32.cont [15/16] 0.0, 128
    %357 = vxpose.xlu0.b32.end [16/16] 0.0, 128
    %v358 = vpop.trf.xlu0
    %v359 = vpop.trf.xlu0
    %v360 = vpop.trf.xlu0
    %v361 = vpop.trf.xlu0
    %v362 = vpop.trf.xlu0
    %v363 = vpop.trf.xlu0
    %v364 = vpop.trf.xlu0
    %v365 = vpop.trf.xlu0
    %v366 = vpop.trf.xlu0
    %v367 = vpop.trf.xlu0
    %v368 = vpop.trf.xlu0
    %v369 = vpop.trf.xlu0
    %v370 = vpop.trf.xlu0
    %v371 = vpop.trf.xlu0
    %v372 = vpop.trf.xlu0
    %v373 = vpop.trf.xlu0
    %vm374 = vcmask 523264
    %v376 = vsel %vm374, %v358, 0
    %v379 = vsel %vm374, %v359, 0
    %v382 = vsel %vm374, %v360, 0
    %v385 = vsel %vm374, %v361, 0
    %v387 = vand.u32 %v198, 4294901760
    %388 = vmatprep.subr.mxu0 %v387
    %v389 = vand.u32 %v197, 4294901760
    %390 = vmatpush1.msra.mxu0 %v389
    %v391 = vand.u32 %v202, 4294901760
    %392 = vmatprep.subr.mxu0 %v391
    %v393 = vand.u32 %v201, 4294901760
    %394 = vmatpush1.msra.mxu0 %v393
    %v395 = vand.u32 %v206, 4294901760
    %396 = vmatprep.subr.mxu0 %v395
    %v397 = vand.u32 %v205, 4294901760
    %398 = vmatpush1.msra.mxu0 %v397
    %v399 = vand.u32 %v210, 4294901760
    %400 = vmatprep.subr.mxu0 %v399
    %v401 = vand.u32 %v209, 4294901760
    %402 = vmatpush1.msra.mxu0 %v401
    %v403 = vand.u32 %v214, 4294901760
    %404 = vmatprep.subr.mxu0 %v403
    %v405 = vand.u32 %v213, 4294901760
    %406 = vmatpush1.msra.mxu0 %v405
    %v407 = vand.u32 %v218, 4294901760
    %408 = vmatprep.subr.mxu0 %v407
    %v409 = vand.u32 %v217, 4294901760
    %410 = vmatpush1.msra.mxu0 %v409
    %v411 = vand.u32 %v222, 4294901760
    %412 = vmatprep.subr.mxu0 %v411
    %v413 = vand.u32 %v221, 4294901760
    %414 = vmatpush1.msra.mxu0 %v413
    %v415 = vand.u32 %v226, 4294901760
    %416 = vmatprep.subr.mxu0 %v415
    %v417 = vand.u32 %v225, 4294901760
    %418 = vmatpush1.msra.mxu0 %v417
    %419 = vmatprep.subr.mxu0 0.0
    %420 = vmatpush1.msra.mxu0 0.0
    %421 = vmatprep.subr.mxu0 0.0
    %422 = vmatpush1.msra.mxu0 0.0
    %423 = vmatprep.subr.mxu0 0.0
    %424 = vmatpush1.msra.mxu0 0.0
    %425 = vmatprep.subr.mxu0 0.0
    %426 = vmatpush1.msra.mxu0 0.0
    %427 = vmatprep.subr.mxu0 0.0
    %428 = vmatpush1.msra.mxu0 0.0
    %429 = vmatprep.subr.mxu0 0.0
    %430 = vmatpush1.msra.mxu0 0.0
    %431 = vmatprep.subr.mxu0 0.0
    %432 = vmatpush1.msra.mxu0 0.0
    %433 = vmatprep.subr.mxu0 0.0
    %434 = vmatpush1.msra.mxu0 0.0
    %435 = vmatprep.subr.mxu0 0.0
    %436 = vmatpush1.msra.mxu0 0.0
    %437 = vmatprep.subr.mxu0 0.0
    %438 = vmatpush1.msra.mxu0 0.0
    %439 = vmatprep.subr.mxu0 0.0
    %440 = vmatpush1.msra.mxu0 0.0
    %441 = vmatprep.subr.mxu0 0.0
    %442 = vmatpush1.msra.mxu0 0.0
    %443 = vmatprep.subr.mxu0 0.0
    %444 = vmatpush1.msra.mxu0 0.0
    %445 = vmatprep.subr.mxu0 0.0
    %446 = vmatpush1.msra.mxu0 0.0
    %447 = vmatprep.subr.mxu0 0.0
    %448 = vmatpush1.msra.mxu0 0.0
    %449 = vmatprep.subr.mxu0 0.0
    %450 = vmatpush1.msra.mxu0 0.0
    %451 = vmatprep.subr.mxu0 0.0
    %452 = vmatpush1.msra.mxu0 0.0
    %453 = vmatprep.subr.mxu0 0.0
    %454 = vmatpush1.msra.mxu0 0.0
    %455 = vmatprep.subr.mxu0 0.0
    %456 = vmatpush1.msra.mxu0 0.0
    %457 = vmatprep.subr.mxu0 0.0
    %458 = vmatpush1.msra.mxu0 0.0
    %459 = vmatprep.subr.mxu0 0.0
    %460 = vmatpush1.msra.mxu0 0.0
    %461 = vmatprep.subr.mxu0 0.0
    %462 = vmatpush1.msra.mxu0 0.0
    %463 = vmatprep.subr.mxu0 0.0
    %464 = vmatpush1.msra.mxu0 0.0
    %465 = vmatprep.subr.mxu0 0.0
    %466 = vmatpush1.msra.mxu0 0.0
    %467 = vmatprep.mubr.f32.mxu0 0.0
    %v468 = vand.u32 %v376, 4294901760
    %v469 = vsub.f32 %v376, %v468
    %v470 = vand.u32 %v469, 4294901760
    %v471 = vsub.f32 %v469, %v470
    %v472 = vand.u32 %v471, 4294901760
    %473 = vmatmul.mubr.f32.gmra.mrb[0].mxu0 %v472
    %v474 = vpop.f32.mrb[0].mxu0
    %v475 = vadd.f32 0.0, %v474
    %v476 = vpop.f32.mrb[0].mxu0
    %v477 = vadd.f32 0.0, %v476
    %478 = vmatprep.mubr.f32.mxu0 0.0
    %v479 = vand.u32 %v379, 4294901760
    %v480 = vsub.f32 %v379, %v479
    %v481 = vand.u32 %v480, 4294901760
    %v482 = vsub.f32 %v480, %v481
    %v483 = vand.u32 %v482, 4294901760
    %484 = vmatmul.mubr.f32.gmra.mrb[0].mxu0 %v483
    %v485 = vpop.f32.mrb[0].mxu0
    %v486 = vadd.f32 0.0, %v485
    %v487 = vpop.f32.mrb[0].mxu0
    %v488 = vadd.f32 0.0, %v487
    %489 = vmatprep.mubr.f32.mxu0 0.0
    %v490 = vand.u32 %v382, 4294901760
    %v491 = vsub.f32 %v382, %v490
    %v492 = vand.u32 %v491, 4294901760
    %v493 = vsub.f32 %v491, %v492
    %v494 = vand.u32 %v493, 4294901760
    %495 = vmatmul.mubr.f32.gmra.mrb[0].mxu0 %v494
    %v496 = vpop.f32.mrb[0].mxu0
    %v497 = vadd.f32 0.0, %v496
    %v498 = vpop.f32.mrb[0].mxu0
    %v499 = vadd.f32 0.0, %v498
    %500 = vmatprep.mubr.f32.mxu0 0.0
    %v501 = vand.u32 %v385, 4294901760
    %v502 = vsub.f32 %v385, %v501
    %v503 = vand.u32 %v502, 4294901760
    %v504 = vsub.f32 %v502, %v503
    %v505 = vand.u32 %v504, 4294901760
    %506 = vmatmul.mubr.f32.gmra.mrb[0].mxu0 %v505
    %v507 = vpop.f32.mrb[0].mxu0
    %v508 = vadd.f32 0.0, %v507
    %v509 = vpop.f32.mrb[0].mxu0
    %v510 = vadd.f32 0.0, %v509
    %511 = vdwg.mxu0
    %v512 = vand.u32 %v198, 4294901760
    %v513 = vsub.f32 %v198, %v512
    %v514 = vand.u32 %v513, 4294901760
    %v515 = vsub.f32 %v513, %v514
    %v516 = vand.u32 %v515, 4294901760
    %517 = vmatprep.subr.mxu0 %v516
    %v518 = vand.u32 %v197, 4294901760
    %v519 = vsub.f32 %v197, %v518
    %v520 = vand.u32 %v519, 4294901760
    %v521 = vsub.f32 %v519, %v520
    %v522 = vand.u32 %v521, 4294901760
    %523 = vmatpush1.msra.mxu0 %v522
    %v524 = vand.u32 %v202, 4294901760
    %v525 = vsub.f32 %v202, %v524
    %v526 = vand.u32 %v525, 4294901760
    %v527 = vsub.f32 %v525, %v526
    %v528 = vand.u32 %v527, 4294901760
    %529 = vmatprep.subr.mxu0 %v528
    %v530 = vand.u32 %v201, 4294901760
    %v531 = vsub.f32 %v201, %v530
    %v532 = vand.u32 %v531, 4294901760
    %v533 = vsub.f32 %v531, %v532
    %v534 = vand.u32 %v533, 4294901760
    %535 = vmatpush1.msra.mxu0 %v534
    %v536 = vand.u32 %v206, 4294901760
    %v537 = vsub.f32 %v206, %v536
    %v538 = vand.u32 %v537, 4294901760
    %v539 = vsub.f32 %v537, %v538
    %v540 = vand.u32 %v539, 4294901760
    %541 = vmatprep.subr.mxu0 %v540
    %v542 = vand.u32 %v205, 4294901760
    %v543 = vsub.f32 %v205, %v542
    %v544 = vand.u32 %v543, 4294901760
    %v545 = vsub.f32 %v543, %v544
    %v546 = vand.u32 %v545, 4294901760
    %547 = vmatpush1.msra.mxu0 %v546
    %v548 = vand.u32 %v210, 4294901760
    %v549 = vsub.f32 %v210, %v548
    %v550 = vand.u32 %v549, 4294901760
    %v551 = vsub.f32 %v549, %v550
    %v552 = vand.u32 %v551, 4294901760
    %553 = vmatprep.subr.mxu0 %v552
    %v554 = vand.u32 %v209, 4294901760
    %v555 = vsub.f32 %v209, %v554
    %v556 = vand.u32 %v555, 4294901760
    %v557 = vsub.f32 %v555, %v556
    %v558 = vand.u32 %v557, 4294901760
    %559 = vmatpush1.msra.mxu0 %v558
    %v560 = vand.u32 %v214, 4294901760
    %v561 = vsub.f32 %v214, %v560
    %v562 = vand.u32 %v561, 4294901760
    %v563 = vsub.f32 %v561, %v562
    %v564 = vand.u32 %v563, 4294901760
    %565 = vmatprep.subr.mxu0 %v564
    %v566 = vand.u32 %v213, 4294901760
    %v567 = vsub.f32 %v213, %v566
    %v568 = vand.u32 %v567, 4294901760
    %v569 = vsub.f32 %v567, %v568
    %v570 = vand.u32 %v569, 4294901760
    %571 = vmatpush1.msra.mxu0 %v570
    %v572 = vand.u32 %v218, 4294901760
    %v573 = vsub.f32 %v218, %v572
    %v574 = vand.u32 %v573, 4294901760
    %v575 = vsub.f32 %v573, %v574
    %v576 = vand.u32 %v575, 4294901760
    %577 = vmatprep.subr.mxu0 %v576
    %v578 = vand.u32 %v217, 4294901760
    %v579 = vsub.f32 %v217, %v578
    %v580 = vand.u32 %v579, 4294901760
    %v581 = vsub.f32 %v579, %v580
    %v582 = vand.u32 %v581, 4294901760
    %583 = vmatpush1.msra.mxu0 %v582
    %v584 = vand.u32 %v222, 4294901760
    %v585 = vsub.f32 %v222, %v584
    %v586 = vand.u32 %v585, 4294901760
    %v587 = vsub.f32 %v585, %v586
    %v588 = vand.u32 %v587, 4294901760
    %589 = vmatprep.subr.mxu0 %v588
    %v590 = vand.u32 %v221, 4294901760
    %v591 = vsub.f32 %v221, %v590
    %v592 = vand.u32 %v591, 4294901760
    %v593 = vsub.f32 %v591, %v592
    %v594 = vand.u32 %v593, 4294901760
    %595 = vmatpush1.msra.mxu0 %v594
    %v596 = vand.u32 %v226, 4294901760
    %v597 = vsub.f32 %v226, %v596
    %v598 = vand.u32 %v597, 4294901760
    %v599 = vsub.f32 %v597, %v598
    %v600 = vand.u32 %v599, 4294901760
    %601 = vmatprep.subr.mxu0 %v600
    %v602 = vand.u32 %v225, 4294901760
    %v603 = vsub.f32 %v225, %v602
    %v604 = vand.u32 %v603, 4294901760
    %v605 = vsub.f32 %v603, %v604
    %v606 = vand.u32 %v605, 4294901760
    %607 = vmatpush1.msra.mxu0 %v606
    %608 = vmatprep.subr.mxu0 0.0
    %609 = vmatpush1.msra.mxu0 0.0
    %610 = vmatprep.subr.mxu0 0.0
    %611 = vmatpush1.msra.mxu0 0.0
    %612 = vmatprep.subr.mxu0 0.0
    %613 = vmatpush1.msra.mxu0 0.0
    %614 = vmatprep.subr.mxu0 0.0
    %615 = vmatpush1.msra.mxu0 0.0
    %616 = vmatprep.subr.mxu0 0.0
    %617 = vmatpush1.msra.mxu0 0.0
    %618 = vmatprep.subr.mxu0 0.0
    %619 = vmatpush1.msra.mxu0 0.0
    %620 = vmatprep.subr.mxu0 0.0
    %621 = vmatpush1.msra.mxu0 0.0
    %622 = vmatprep.subr.mxu0 0.0
    %623 = vmatpush1.msra.mxu0 0.0
    %624 = vmatprep.subr.mxu0 0.0
    %625 = vmatpush1.msra.mxu0 0.0
    %626 = vmatprep.subr.mxu0 0.0
    %627 = vmatpush1.msra.mxu0 0.0
    %628 = vmatprep.subr.mxu0 0.0
    %629 = vmatpush1.msra.mxu0 0.0
    %630 = vmatprep.subr.mxu0 0.0
    %631 = vmatpush1.msra.mxu0 0.0
    %632 = vmatprep.subr.mxu0 0.0
    %633 = vmatpush1.msra.mxu0 0.0
    %634 = vmatprep.subr.mxu0 0.0
    %635 = vmatpush1.msra.mxu0 0.0
    %636 = vmatprep.subr.mxu0 0.0
    %637 = vmatpush1.msra.mxu0 0.0
    %638 = vmatprep.subr.mxu0 0.0
    %639 = vmatpush1.msra.mxu0 0.0
    %640 = vmatprep.subr.mxu0 0.0
    %641 = vmatpush1.msra.mxu0 0.0
    %642 = vmatprep.subr.mxu0 0.0
    %643 = vmatpush1.msra.mxu0 0.0
    %644 = vmatprep.subr.mxu0 0.0
    %645 = vmatpush1.msra.mxu0 0.0
    %646 = vmatprep.subr.mxu0 0.0
    %647 = vmatpush1.msra.mxu0 0.0
    %648 = vmatprep.subr.mxu0 0.0
    %649 = vmatpush1.msra.mxu0 0.0
    %650 = vmatprep.subr.mxu0 0.0
    %651 = vmatpush1.msra.mxu0 0.0
    %652 = vmatprep.subr.mxu0 0.0
    %653 = vmatpush1.msra.mxu0 0.0
    %654 = vmatprep.subr.mxu0 0.0
    %655 = vmatpush1.msra.mxu0 0.0
    %656 = vmatprep.mubr.f32.mxu0 0.0
    %v657 = vand.u32 %v376, 4294901760
    %658 = vmatmul.mubr.f32.gmra.mrb[0].mxu0 %v657
    %v659 = vpop.f32.mrb[0].mxu0
    %v660 = vadd.f32 %v475, %v659
    %v661 = vpop.f32.mrb[0].mxu0
    %v662 = vadd.f32 %v477, %v661
    %663 = vmatprep.mubr.f32.mxu0 0.0
    %v664 = vand.u32 %v379, 4294901760
    %665 = vmatmul.mubr.f32.gmra.mrb[0].mxu0 %v664
    %v666 = vpop.f32.mrb[0].mxu0
    %v667 = vadd.f32 %v486, %v666
    %v668 = vpop.f32.mrb[0].mxu0
    %v669 = vadd.f32 %v488, %v668
    %670 = vmatprep.mubr.f32.mxu0 0.0
    %v671 = vand.u32 %v382, 4294901760
    %672 = vmatmul.mubr.f32.gmra.mrb[0].mxu0 %v671
    %v673 = vpop.f32.mrb[0].mxu0
    %v674 = vadd.f32 %v497, %v673
    %v675 = vpop.f32.mrb[0].mxu0
    %v676 = vadd.f32 %v499, %v675
    %677 = vmatprep.mubr.f32.mxu0 0.0
    %v678 = vand.u32 %v385, 4294901760
    %679 = vmatmul.mubr.f32.gmra.mrb[0].mxu0 %v678
    %v680 = vpop.f32.mrb[0].mxu0
    %v681 = vadd.f32 %v508, %v680
    %v682 = vpop.f32.mrb[0].mxu0
    %v683 = vadd.f32 %v510, %v682
    %684 = vdwg.mxu0
    %v685 = vand.u32 %v198, 4294901760
    %v686 = vsub.f32 %v198, %v685
    %687 = vmatprep.subr.mxu0 %v686
    %v688 = vand.u32 %v197, 4294901760
    %v689 = vsub.f32 %v197, %v688
    %690 = vmatpush1.msra.mxu0 %v689
    %v691 = vand.u32 %v202, 4294901760
    %v692 = vsub.f32 %v202, %v691
    %693 = vmatprep.subr.mxu0 %v692
    %v694 = vand.u32 %v201, 4294901760
    %v695 = vsub.f32 %v201, %v694
    %696 = vmatpush1.msra.mxu0 %v695
    %v697 = vand.u32 %v206, 4294901760
    %v698 = vsub.f32 %v206, %v697
    %699 = vmatprep.subr.mxu0 %v698
    %v700 = vand.u32 %v205, 4294901760
    %v701 = vsub.f32 %v205, %v700
    %702 = vmatpush1.msra.mxu0 %v701
    %v703 = vand.u32 %v210, 4294901760
    %v704 = vsub.f32 %v210, %v703
    %705 = vmatprep.subr.mxu0 %v704
    %v706 = vand.u32 %v209, 4294901760
    %v707 = vsub.f32 %v209, %v706
    %708 = vmatpush1.msra.mxu0 %v707
    %v709 = vand.u32 %v214, 4294901760
    %v710 = vsub.f32 %v214, %v709
    %711 = vmatprep.subr.mxu0 %v710
    %v712 = vand.u32 %v213, 4294901760
    %v713 = vsub.f32 %v213, %v712
    %714 = vmatpush1.msra.mxu0 %v713
    %v715 = vand.u32 %v218, 4294901760
    %v716 = vsub.f32 %v218, %v715
    %717 = vmatprep.subr.mxu0 %v716
    %v718 = vand.u32 %v217, 4294901760
    %v719 = vsub.f32 %v217, %v718
    %720 = vmatpush1.msra.mxu0 %v719
    %v721 = vand.u32 %v222, 4294901760
    %v722 = vsub.f32 %v222, %v721
    %723 = vmatprep.subr.mxu0 %v722
    %v724 = vand.u32 %v221, 4294901760
    %v725 = vsub.f32 %v221, %v724
    %726 = vmatpush1.msra.mxu0 %v725
    %v727 = vand.u32 %v226, 4294901760
    %v728 = vsub.f32 %v226, %v727
    %729 = vmatprep.subr.mxu0 %v728
    %v730 = vand.u32 %v225, 4294901760
    %v731 = vsub.f32 %v225, %v730
    %732 = vmatpush1.msra.mxu0 %v731
    %733 = vmatprep.subr.mxu0 0.0
    %734 = vmatpush1.msra.mxu0 0.0
    %735 = vmatprep.subr.mxu0 0.0
    %736 = vmatpush1.msra.mxu0 0.0
    %737 = vmatprep.subr.mxu0 0.0
    %738 = vmatpush1.msra.mxu0 0.0
    %739 = vmatprep.subr.mxu0 0.0
    %740 = vmatpush1.msra.mxu0 0.0
    %741 = vmatprep.subr.mxu0 0.0
    %742 = vmatpush1.msra.mxu0 0.0
    %743 = vmatprep.subr.mxu0 0.0
    %744 = vmatpush1.msra.mxu0 0.0
    %745 = vmatprep.subr.mxu0 0.0
    %746 = vmatpush1.msra.mxu0 0.0
    %747 = vmatprep.subr.mxu0 0.0
    %748 = vmatpush1.msra.mxu0 0.0
    %749 = vmatprep.subr.mxu0 0.0
    %750 = vmatpush1.msra.mxu0 0.0
    %751 = vmatprep.subr.mxu0 0.0
    %752 = vmatpush1.msra.mxu0 0.0
    %753 = vmatprep.subr.mxu0 0.0
    %754 = vmatpush1.msra.mxu0 0.0
    %755 = vmatprep.subr.mxu0 0.0
    %756 = vmatpush1.msra.mxu0 0.0
    %757 = vmatprep.subr.mxu0 0.0
    %758 = vmatpush1.msra.mxu0 0.0
    %759 = vmatprep.subr.mxu0 0.0
    %760 = vmatpush1.msra.mxu0 0.0
    %761 = vmatprep.subr.mxu0 0.0
    %762 = vmatpush1.msra.mxu0 0.0
    %763 = vmatprep.subr.mxu0 0.0
    %764 = vmatpush1.msra.mxu0 0.0
    %765 = vmatprep.subr.mxu0 0.0
    %766 = vmatpush1.msra.mxu0 0.0
    %767 = vmatprep.subr.mxu0 0.0
    %768 = vmatpush1.msra.mxu0 0.0
    %769 = vmatprep.subr.mxu0 0.0
    %770 = vmatpush1.msra.mxu0 0.0
    %771 = vmatprep.subr.mxu0 0.0
    %772 = vmatpush1.msra.mxu0 0.0
    %773 = vmatprep.subr.mxu0 0.0
    %774 = vmatpush1.msra.mxu0 0.0
    %775 = vmatprep.subr.mxu0 0.0
    %776 = vmatpush1.msra.mxu0 0.0
    %777 = vmatprep.subr.mxu0 0.0
    %778 = vmatpush1.msra.mxu0 0.0
    %779 = vmatprep.subr.mxu0 0.0
    %780 = vmatpush1.msra.mxu0 0.0
    %781 = vmatprep.mubr.f32.mxu0 0.0
    %v782 = vand.u32 %v376, 4294901760
    %v783 = vsub.f32 %v376, %v782
    %784 = vmatmul.mubr.f32.gmra.mrb[0].mxu0 %v783
    %v785 = vpop.f32.mrb[0].mxu0
    %v786 = vadd.f32 %v660, %v785
    %v787 = vpop.f32.mrb[0].mxu0
    %v788 = vadd.f32 %v662, %v787
    %789 = vmatprep.mubr.f32.mxu0 0.0
    %v790 = vand.u32 %v379, 4294901760
    %v791 = vsub.f32 %v379, %v790
    %792 = vmatmul.mubr.f32.gmra.mrb[0].mxu0 %v791
    %v793 = vpop.f32.mrb[0].mxu0
    %v794 = vadd.f32 %v667, %v793
    %v795 = vpop.f32.mrb[0].mxu0
    %v796 = vadd.f32 %v669, %v795
    %797 = vmatprep.mubr.f32.mxu0 0.0
    %v798 = vand.u32 %v382, 4294901760
    %v799 = vsub.f32 %v382, %v798
    %800 = vmatmul.mubr.f32.gmra.mrb[0].mxu0 %v799
    %v801 = vpop.f32.mrb[0].mxu0
    %v802 = vadd.f32 %v674, %v801
    %v803 = vpop.f32.mrb[0].mxu0
    %v804 = vadd.f32 %v676, %v803
    %805 = vmatprep.mubr.f32.mxu0 0.0
    %v806 = vand.u32 %v385, 4294901760
    %v807 = vsub.f32 %v385, %v806
    %808 = vmatmul.mubr.f32.gmra.mrb[0].mxu0 %v807
    %v809 = vpop.f32.mrb[0].mxu0
    %v810 = vadd.f32 %v681, %v809
    %v811 = vpop.f32.mrb[0].mxu0
    %v812 = vadd.f32 %v683, %v811
    %813 = vdwg.mxu0
    %v814 = vand.u32 %v198, 4294901760
    %815 = vmatprep.subr.mxu0 %v814
    %v816 = vand.u32 %v197, 4294901760
    %817 = vmatpush1.msra.mxu0 %v816
    %v818 = vand.u32 %v202, 4294901760
    %819 = vmatprep.subr.mxu0 %v818
    %v820 = vand.u32 %v201, 4294901760
    %821 = vmatpush1.msra.mxu0 %v820
    %v822 = vand.u32 %v206, 4294901760
    %823 = vmatprep.subr.mxu0 %v822
    %v824 = vand.u32 %v205, 4294901760
    %825 = vmatpush1.msra.mxu0 %v824
    %v826 = vand.u32 %v210, 4294901760
    %827 = vmatprep.subr.mxu0 %v826
    %v828 = vand.u32 %v209, 4294901760
    %829 = vmatpush1.msra.mxu0 %v828
    %v830 = vand.u32 %v214, 4294901760
    %831 = vmatprep.subr.mxu0 %v830
    %v832 = vand.u32 %v213, 4294901760
    %833 = vmatpush1.msra.mxu0 %v832
    %v834 = vand.u32 %v218, 4294901760
    %835 = vmatprep.subr.mxu0 %v834
    %v836 = vand.u32 %v217, 4294901760
    %837 = vmatpush1.msra.mxu0 %v836
    %v838 = vand.u32 %v222, 4294901760
    %839 = vmatprep.subr.mxu0 %v838
    %v840 = vand.u32 %v221, 4294901760
    %841 = vmatpush1.msra.mxu0 %v840
    %v842 = vand.u32 %v226, 4294901760
    %843 = vmatprep.subr.mxu0 %v842
    %v844 = vand.u32 %v225, 4294901760
    %845 = vmatpush1.msra.mxu0 %v844
    %846 = vmatprep.subr.mxu0 0.0
    %847 = vmatpush1.msra.mxu0 0.0
    %848 = vmatprep.subr.mxu0 0.0
    %849 = vmatpush1.msra.mxu0 0.0
    %850 = vmatprep.subr.mxu0 0.0
    %851 = vmatpush1.msra.mxu0 0.0
    %852 = vmatprep.subr.mxu0 0.0
    %853 = vmatpush1.msra.mxu0 0.0
    %854 = vmatprep.subr.mxu0 0.0
    %855 = vmatpush1.msra.mxu0 0.0
    %856 = vmatprep.subr.mxu0 0.0
    %857 = vmatpush1.msra.mxu0 0.0
    %858 = vmatprep.subr.mxu0 0.0
    %859 = vmatpush1.msra.mxu0 0.0
    %860 = vmatprep.subr.mxu0 0.0
    %861 = vmatpush1.msra.mxu0 0.0
    %862 = vmatprep.subr.mxu0 0.0
    %863 = vmatpush1.msra.mxu0 0.0
    %864 = vmatprep.subr.mxu0 0.0
    %865 = vmatpush1.msra.mxu0 0.0
    %866 = vmatprep.subr.mxu0 0.0
    %867 = vmatpush1.msra.mxu0 0.0
    %868 = vmatprep.subr.mxu0 0.0
    %869 = vmatpush1.msra.mxu0 0.0
    %870 = vmatprep.subr.mxu0 0.0
    %871 = vmatpush1.msra.mxu0 0.0
    %872 = vmatprep.subr.mxu0 0.0
    %873 = vmatpush1.msra.mxu0 0.0
    %874 = vmatprep.subr.mxu0 0.0
    %875 = vmatpush1.msra.mxu0 0.0
    %876 = vmatprep.subr.mxu0 0.0
    %877 = vmatpush1.msra.mxu0 0.0
    %878 = vmatprep.subr.mxu0 0.0
    %879 = vmatpush1.msra.mxu0 0.0
    %880 = vmatprep.subr.mxu0 0.0
    %881 = vmatpush1.msra.mxu0 0.0
    %882 = vmatprep.subr.mxu0 0.0
    %883 = vmatpush1.msra.mxu0 0.0
    %884 = vmatprep.subr.mxu0 0.0
    %885 = vmatpush1.msra.mxu0 0.0
    %886 = vmatprep.subr.mxu0 0.0
    %887 = vmatpush1.msra.mxu0 0.0
    %888 = vmatprep.subr.mxu0 0.0
    %889 = vmatpush1.msra.mxu0 0.0
    %890 = vmatprep.subr.mxu0 0.0
    %891 = vmatpush1.msra.mxu0 0.0
    %892 = vmatprep.subr.mxu0 0.0
    %893 = vmatpush1.msra.mxu0 0.0
    %894 = vmatprep.mubr.f32.mxu0 0.0
    %v895 = vand.u32 %v376, 4294901760
    %v896 = vsub.f32 %v376, %v895
    %v897 = vand.u32 %v896, 4294901760
    %898 = vmatmul.mubr.f32.gmra.mrb[0].mxu0 %v897
    %v899 = vpop.f32.mrb[0].mxu0
    %v900 = vadd.f32 %v786, %v899
    %v901 = vpop.f32.mrb[0].mxu0
    %v902 = vadd.f32 %v788, %v901
    %903 = vmatprep.mubr.f32.mxu0 0.0
    %v904 = vand.u32 %v379, 4294901760
    %v905 = vsub.f32 %v379, %v904
    %v906 = vand.u32 %v905, 4294901760
    %907 = vmatmul.mubr.f32.gmra.mrb[0].mxu0 %v906
    %v908 = vpop.f32.mrb[0].mxu0
    %v909 = vadd.f32 %v794, %v908
    %v910 = vpop.f32.mrb[0].mxu0
    %v911 = vadd.f32 %v796, %v910
    %912 = vmatprep.mubr.f32.mxu0 0.0
    %v913 = vand.u32 %v382, 4294901760
    %v914 = vsub.f32 %v382, %v913
    %v915 = vand.u32 %v914, 4294901760
    %916 = vmatmul.mubr.f32.gmra.mrb[0].mxu0 %v915
    %v917 = vpop.f32.mrb[0].mxu0
    %v918 = vadd.f32 %v802, %v917
    %v919 = vpop.f32.mrb[0].mxu0
    %v920 = vadd.f32 %v804, %v919
    %921 = vmatprep.mubr.f32.mxu0 0.0
    %v922 = vand.u32 %v385, 4294901760
    %v923 = vsub.f32 %v385, %v922
    %v924 = vand.u32 %v923, 4294901760
    %925 = vmatmul.mubr.f32.gmra.mrb[0].mxu0 %v924
    %v926 = vpop.f32.mrb[0].mxu0
    %v927 = vadd.f32 %v810, %v926
    %v928 = vpop.f32.mrb[0].mxu0
    %v929 = vadd.f32 %v812, %v928
    %930 = vdwg.mxu0
    %v931 = vand.u32 %v198, 4294901760
    %v932 = vsub.f32 %v198, %v931
    %v933 = vand.u32 %v932, 4294901760
    %934 = vmatprep.subr.mxu0 %v933
    %v935 = vand.u32 %v197, 4294901760
    %v936 = vsub.f32 %v197, %v935
    %v937 = vand.u32 %v936, 4294901760
    %938 = vmatpush1.msra.mxu0 %v937
    %v939 = vand.u32 %v202, 4294901760
    %v940 = vsub.f32 %v202, %v939
    %v941 = vand.u32 %v940, 4294901760
    %942 = vmatprep.subr.mxu0 %v941
    %v943 = vand.u32 %v201, 4294901760
    %v944 = vsub.f32 %v201, %v943
    %v945 = vand.u32 %v944, 4294901760
    %946 = vmatpush1.msra.mxu0 %v945
    %v947 = vand.u32 %v206, 4294901760
    %v948 = vsub.f32 %v206, %v947
    %v949 = vand.u32 %v948, 4294901760
    %950 = vmatprep.subr.mxu0 %v949
    %v951 = vand.u32 %v205, 4294901760
    %v952 = vsub.f32 %v205, %v951
    %v953 = vand.u32 %v952, 4294901760
    %954 = vmatpush1.msra.mxu0 %v953
    %v955 = vand.u32 %v210, 4294901760
    %v956 = vsub.f32 %v210, %v955
    %v957 = vand.u32 %v956, 4294901760
    %958 = vmatprep.subr.mxu0 %v957
    %v959 = vand.u32 %v209, 4294901760
    %v960 = vsub.f32 %v209, %v959
    %v961 = vand.u32 %v960, 4294901760
    %962 = vmatpush1.msra.mxu0 %v961
    %v963 = vand.u32 %v214, 4294901760
    %v964 = vsub.f32 %v214, %v963
    %v965 = vand.u32 %v964, 4294901760
    %966 = vmatprep.subr.mxu0 %v965
    %v967 = vand.u32 %v213, 4294901760
    %v968 = vsub.f32 %v213, %v967
    %v969 = vand.u32 %v968, 4294901760
    %970 = vmatpush1.msra.mxu0 %v969
    %v971 = vand.u32 %v218, 4294901760
    %v972 = vsub.f32 %v218, %v971
    %v973 = vand.u32 %v972, 4294901760
    %974 = vmatprep.subr.mxu0 %v973
    %v975 = vand.u32 %v217, 4294901760
    %v976 = vsub.f32 %v217, %v975
    %v977 = vand.u32 %v976, 4294901760
    %978 = vmatpush1.msra.mxu0 %v977
    %v979 = vand.u32 %v222, 4294901760
    %v980 = vsub.f32 %v222, %v979
    %v981 = vand.u32 %v980, 4294901760
    %982 = vmatprep.subr.mxu0 %v981
    %v983 = vand.u32 %v221, 4294901760
    %v984 = vsub.f32 %v221, %v983
    %v985 = vand.u32 %v984, 4294901760
    %986 = vmatpush1.msra.mxu0 %v985
    %v987 = vand.u32 %v226, 4294901760
    %v988 = vsub.f32 %v226, %v987
    %v989 = vand.u32 %v988, 4294901760
    %990 = vmatprep.subr.mxu0 %v989
    %v991 = vand.u32 %v225, 4294901760
    %v992 = vsub.f32 %v225, %v991
    %v993 = vand.u32 %v992, 4294901760
    %994 = vmatpush1.msra.mxu0 %v993
    %995 = vmatprep.subr.mxu0 0.0
    %996 = vmatpush1.msra.mxu0 0.0
    %997 = vmatprep.subr.mxu0 0.0
    %998 = vmatpush1.msra.mxu0 0.0
    %999 = vmatprep.subr.mxu0 0.0
    %1000 = vmatpush1.msra.mxu0 0.0
    %1001 = vmatprep.subr.mxu0 0.0
    %1002 = vmatpush1.msra.mxu0 0.0
    %1003 = vmatprep.subr.mxu0 0.0
    %1004 = vmatpush1.msra.mxu0 0.0
    %1005 = vmatprep.subr.mxu0 0.0
    %1006 = vmatpush1.msra.mxu0 0.0
    %1007 = vmatprep.subr.mxu0 0.0
    %1008 = vmatpush1.msra.mxu0 0.0
    %1009 = vmatprep.subr.mxu0 0.0
    %1010 = vmatpush1.msra.mxu0 0.0
    %1011 = vmatprep.subr.mxu0 0.0
    %1012 = vmatpush1.msra.mxu0 0.0
    %1013 = vmatprep.subr.mxu0 0.0
    %1014 = vmatpush1.msra.mxu0 0.0
    %1015 = vmatprep.subr.mxu0 0.0
    %1016 = vmatpush1.msra.mxu0 0.0
    %1017 = vmatprep.subr.mxu0 0.0
    %1018 = vmatpush1.msra.mxu0 0.0
    %1019 = vmatprep.subr.mxu0 0.0
    %1020 = vmatpush1.msra.mxu0 0.0
    %1021 = vmatprep.subr.mxu0 0.0
    %1022 = vmatpush1.msra.mxu0 0.0
    %1023 = vmatprep.subr.mxu0 0.0
    %1024 = vmatpush1.msra.mxu0 0.0
    %1025 = vmatprep.subr.mxu0 0.0
    %1026 = vmatpush1.msra.mxu0 0.0
    %1027 = vmatprep.subr.mxu0 0.0
    %1028 = vmatpush1.msra.mxu0 0.0
    %1029 = vmatprep.subr.mxu0 0.0
    %1030 = vmatpush1.msra.mxu0 0.0
    %1031 = vmatprep.subr.mxu0 0.0
    %1032 = vmatpush1.msra.mxu0 0.0
    %1033 = vmatprep.subr.mxu0 0.0
    %1034 = vmatpush1.msra.mxu0 0.0
    %1035 = vmatprep.subr.mxu0 0.0
    %1036 = vmatpush1.msra.mxu0 0.0
    %1037 = vmatprep.subr.mxu0 0.0
    %1038 = vmatpush1.msra.mxu0 0.0
    %1039 = vmatprep.subr.mxu0 0.0
    %1040 = vmatpush1.msra.mxu0 0.0
    %1041 = vmatprep.subr.mxu0 0.0
    %1042 = vmatpush1.msra.mxu0 0.0
    %1043 = vmatprep.mubr.f32.mxu0 0.0
    %v1044 = vand.u32 %v376, 4294901760
    %1045 = vmatmul.mubr.f32.gmra.mrb[0].mxu0 %v1044
    %v1046 = vpop.f32.mrb[0].mxu0
    %v1047 = vadd.f32 %v900, %v1046
    %v1048 = vpop.f32.mrb[0].mxu0
    %v1049 = vadd.f32 %v902, %v1048
    %1050 = vmatprep.mubr.f32.mxu0 0.0
    %v1051 = vand.u32 %v379, 4294901760
    %1052 = vmatmul.mubr.f32.gmra.mrb[0].mxu0 %v1051
    %v1053 = vpop.f32.mrb[0].mxu0
    %v1054 = vadd.f32 %v909, %v1053
    %v1055 = vpop.f32.mrb[0].mxu0
    %v1056 = vadd.f32 %v911, %v1055
    %1057 = vmatprep.mubr.f32.mxu0 0.0
    %v1058 = vand.u32 %v382, 4294901760
    %1059 = vmatmul.mubr.f32.gmra.mrb[0].mxu0 %v1058
    %v1060 = vpop.f32.mrb[0].mxu0
    %v1061 = vadd.f32 %v918, %v1060
    %v1062 = vpop.f32.mrb[0].mxu0
    %v1063 = vadd.f32 %v920, %v1062
    %1064 = vmatprep.mubr.f32.mxu0 0.0
    %v1065 = vand.u32 %v385, 4294901760
    %1066 = vmatmul.mubr.f32.gmra.mrb[0].mxu0 %v1065
    %v1067 = vpop.f32.mrb[0].mxu0
    %v1068 = vadd.f32 %v927, %v1067
    %v1069 = vpop.f32.mrb[0].mxu0
    %v1070 = vadd.f32 %v929, %v1069
    %1071 = vdwg.mxu0
    %v1072 = vand.u32 %v198, 4294901760
    %1073 = vmatprep.subr.mxu0 %v1072
    %v1074 = vand.u32 %v197, 4294901760
    %1075 = vmatpush1.msra.mxu0 %v1074
    %v1076 = vand.u32 %v202, 4294901760
    %1077 = vmatprep.subr.mxu0 %v1076
    %v1078 = vand.u32 %v201, 4294901760
    %1079 = vmatpush1.msra.mxu0 %v1078
    %v1080 = vand.u32 %v206, 4294901760
    %1081 = vmatprep.subr.mxu0 %v1080
    %v1082 = vand.u32 %v205, 4294901760
    %1083 = vmatpush1.msra.mxu0 %v1082
    %v1084 = vand.u32 %v210, 4294901760
    %1085 = vmatprep.subr.mxu0 %v1084
    %v1086 = vand.u32 %v209, 4294901760
    %1087 = vmatpush1.msra.mxu0 %v1086
    %v1088 = vand.u32 %v214, 4294901760
    %1089 = vmatprep.subr.mxu0 %v1088
    %v1090 = vand.u32 %v213, 4294901760
    %1091 = vmatpush1.msra.mxu0 %v1090
    %v1092 = vand.u32 %v218, 4294901760
    %1093 = vmatprep.subr.mxu0 %v1092
    %v1094 = vand.u32 %v217, 4294901760
    %1095 = vmatpush1.msra.mxu0 %v1094
    %v1096 = vand.u32 %v222, 4294901760
    %1097 = vmatprep.subr.mxu0 %v1096
    %v1098 = vand.u32 %v221, 4294901760
    %1099 = vmatpush1.msra.mxu0 %v1098
    %v1100 = vand.u32 %v226, 4294901760
    %1101 = vmatprep.subr.mxu0 %v1100
    %v1102 = vand.u32 %v225, 4294901760
    %1103 = vmatpush1.msra.mxu0 %v1102
    %1104 = vmatprep.subr.mxu0 0.0
    %1105 = vmatpush1.msra.mxu0 0.0
    %1106 = vmatprep.subr.mxu0 0.0
    %1107 = vmatpush1.msra.mxu0 0.0
    %1108 = vmatprep.subr.mxu0 0.0
    %1109 = vmatpush1.msra.mxu0 0.0
    %1110 = vmatprep.subr.mxu0 0.0
    %1111 = vmatpush1.msra.mxu0 0.0
    %1112 = vmatprep.subr.mxu0 0.0
    %1113 = vmatpush1.msra.mxu0 0.0
    %1114 = vmatprep.subr.mxu0 0.0
    %1115 = vmatpush1.msra.mxu0 0.0
    %1116 = vmatprep.subr.mxu0 0.0
    %1117 = vmatpush1.msra.mxu0 0.0
    %1118 = vmatprep.subr.mxu0 0.0
    %1119 = vmatpush1.msra.mxu0 0.0
    %1120 = vmatprep.subr.mxu0 0.0
    %1121 = vmatpush1.msra.mxu0 0.0
    %1122 = vmatprep.subr.mxu0 0.0
    %1123 = vmatpush1.msra.mxu0 0.0
    %1124 = vmatprep.subr.mxu0 0.0
    %1125 = vmatpush1.msra.mxu0 0.0
    %1126 = vmatprep.subr.mxu0 0.0
    %1127 = vmatpush1.msra.mxu0 0.0
    %1128 = vmatprep.subr.mxu0 0.0
    %1129 = vmatpush1.msra.mxu0 0.0
    %1130 = vmatprep.subr.mxu0 0.0
    %1131 = vmatpush1.msra.mxu0 0.0
    %1132 = vmatprep.subr.mxu0 0.0
    %1133 = vmatpush1.msra.mxu0 0.0
    %1134 = vmatprep.subr.mxu0 0.0
    %1135 = vmatpush1.msra.mxu0 0.0
    %1136 = vmatprep.subr.mxu0 0.0
    %1137 = vmatpush1.msra.mxu0 0.0
    %1138 = vmatprep.subr.mxu0 0.0
    %1139 = vmatpush1.msra.mxu0 0.0
    %1140 = vmatprep.subr.mxu0 0.0
    %1141 = vmatpush1.msra.mxu0 0.0
    %1142 = vmatprep.subr.mxu0 0.0
    %1143 = vmatpush1.msra.mxu0 0.0
    %1144 = vmatprep.subr.mxu0 0.0
    %1145 = vmatpush1.msra.mxu0 0.0
    %1146 = vmatprep.subr.mxu0 0.0
    %1147 = vmatpush1.msra.mxu0 0.0
    %1148 = vmatprep.subr.mxu0 0.0
    %1149 = vmatpush1.msra.mxu0 0.0
    %1150 = vmatprep.subr.mxu0 0.0
    %1151 = vmatpush1.msra.mxu0 0.0
    %1152 = vmatprep.mubr.f32.mxu0 0.0
    %v1153 = vand.u32 %v376, 4294901760
    %1154 = vmatmul.mubr.f32.gmra.mrb[0].mxu0 %v1153
    %v1155 = vpop.f32.mrb[0].mxu0
    %v1156 = vadd.f32 %v1047, %v1155
    %v1157 = vpop.f32.mrb[0].mxu0
    %v1158 = vadd.f32 %v1049, %v1157
    %1159 = vmatprep.mubr.f32.mxu0 0.0
    %v1160 = vand.u32 %v379, 4294901760
    %1161 = vmatmul.mubr.f32.gmra.mrb[0].mxu0 %v1160
    %v1162 = vpop.f32.mrb[0].mxu0
    %v1163 = vadd.f32 %v1054, %v1162
    %v1164 = vpop.f32.mrb[0].mxu0
    %v1165 = vadd.f32 %v1056, %v1164
    %1166 = vmatprep.mubr.f32.mxu0 0.0
    %v1167 = vand.u32 %v382, 4294901760
    %1168 = vmatmul.mubr.f32.gmra.mrb[0].mxu0 %v1167
    %v1169 = vpop.f32.mrb[0].mxu0
    %v1170 = vadd.f32 %v1061, %v1169
    %v1171 = vpop.f32.mrb[0].mxu0
    %v1172 = vadd.f32 %v1063, %v1171
    %1173 = vmatprep.mubr.f32.mxu0 0.0
    %v1174 = vand.u32 %v385, 4294901760
    %1175 = vmatmul.mubr.f32.gmra.mrb[0].mxu0 %v1174
    %v1176 = vpop.f32.mrb[0].mxu0
    %v1177 = vadd.f32 %v1068, %v1176
    %v1178 = vpop.f32.mrb[0].mxu0
    %v1179 = vadd.f32 %v1070, %v1178
    %1180 = vdwg.mxu0
    %v1181 = vand.u32 %v200, 4294901760
    %1182 = vmatprep.subr.mxu0 %v1181
    %v1183 = vand.u32 %v199, 4294901760
    %1184 = vmatpush1.msra.mxu0 %v1183
    %v1185 = vand.u32 %v204, 4294901760
    %1186 = vmatprep.subr.mxu0 %v1185
    %v1187 = vand.u32 %v203, 4294901760
    %1188 = vmatpush1.msra.mxu0 %v1187
    %v1189 = vand.u32 %v208, 4294901760
    %1190 = vmatprep.subr.mxu0 %v1189
    %v1191 = vand.u32 %v207, 4294901760
    %1192 = vmatpush1.msra.mxu0 %v1191
    %v1193 = vand.u32 %v212, 4294901760
    %1194 = vmatprep.subr.mxu0 %v1193
    %v1195 = vand.u32 %v211, 4294901760
    %1196 = vmatpush1.msra.mxu0 %v1195
    %v1197 = vand.u32 %v216, 4294901760
    %1198 = vmatprep.subr.mxu0 %v1197
    %v1199 = vand.u32 %v215, 4294901760
    %1200 = vmatpush1.msra.mxu0 %v1199
    %v1201 = vand.u32 %v220, 4294901760
    %1202 = vmatprep.subr.mxu0 %v1201
    %v1203 = vand.u32 %v219, 4294901760
    %1204 = vmatpush1.msra.mxu0 %v1203
    %v1205 = vand.u32 %v224, 4294901760
    %1206 = vmatprep.subr.mxu0 %v1205
    %v1207 = vand.u32 %v223, 4294901760
    %1208 = vmatpush1.msra.mxu0 %v1207
    %v1209 = vand.u32 %v228, 4294901760
    %1210 = vmatprep.subr.mxu0 %v1209
    %v1211 = vand.u32 %v227, 4294901760
    %1212 = vmatpush1.msra.mxu0 %v1211
    %1213 = vmatprep.subr.mxu0 0.0
    %1214 = vmatpush1.msra.mxu0 0.0
    %1215 = vmatprep.subr.mxu0 0.0
    %1216 = vmatpush1.msra.mxu0 0.0
    %1217 = vmatprep.subr.mxu0 0.0
    %1218 = vmatpush1.msra.mxu0 0.0
    %1219 = vmatprep.subr.mxu0 0.0
    %1220 = vmatpush1.msra.mxu0 0.0
    %1221 = vmatprep.subr.mxu0 0.0
    %1222 = vmatpush1.msra.mxu0 0.0
    %1223 = vmatprep.subr.mxu0 0.0
    %1224 = vmatpush1.msra.mxu0 0.0
    %1225 = vmatprep.subr.mxu0 0.0
    %1226 = vmatpush1.msra.mxu0 0.0
    %1227 = vmatprep.subr.mxu0 0.0
    %1228 = vmatpush1.msra.mxu0 0.0
    %1229 = vmatprep.subr.mxu0 0.0
    %1230 = vmatpush1.msra.mxu0 0.0
    %1231 = vmatprep.subr.mxu0 0.0
    %1232 = vmatpush1.msra.mxu0 0.0
    %1233 = vmatprep.subr.mxu0 0.0
    %1234 = vmatpush1.msra.mxu0 0.0
    %1235 = vmatprep.subr.mxu0 0.0
    %1236 = vmatpush1.msra.mxu0 0.0
    %1237 = vmatprep.subr.mxu0 0.0
    %1238 = vmatpush1.msra.mxu0 0.0
    %1239 = vmatprep.subr.mxu0 0.0
    %1240 = vmatpush1.msra.mxu0 0.0
    %1241 = vmatprep.subr.mxu0 0.0
    %1242 = vmatpush1.msra.mxu0 0.0
    %1243 = vmatprep.subr.mxu0 0.0
    %1244 = vmatpush1.msra.mxu0 0.0
    %1245 = vmatprep.subr.mxu0 0.0
    %1246 = vmatpush1.msra.mxu0 0.0
    %1247 = vmatprep.subr.mxu0 0.0
    %1248 = vmatpush1.msra.mxu0 0.0
    %1249 = vmatprep.subr.mxu0 0.0
    %1250 = vmatpush1.msra.mxu0 0.0
    %1251 = vmatprep.subr.mxu0 0.0
    %1252 = vmatpush1.msra.mxu0 0.0
    %1253 = vmatprep.subr.mxu0 0.0
    %1254 = vmatpush1.msra.mxu0 0.0
    %1255 = vmatprep.subr.mxu0 0.0
    %1256 = vmatpush1.msra.mxu0 0.0
    %1257 = vmatprep.subr.mxu0 0.0
    %1258 = vmatpush1.msra.mxu0 0.0
    %1259 = vmatprep.subr.mxu0 0.0
    %1260 = vmatpush1.msra.mxu0 0.0
    %1261 = vmatprep.mubr.f32.mxu0 0.0
    %v1262 = vand.u32 %v376, 4294901760
    %v1263 = vsub.f32 %v376, %v1262
    %v1264 = vand.u32 %v1263, 4294901760
    %v1265 = vsub.f32 %v1263, %v1264
    %v1266 = vand.u32 %v1265, 4294901760
    %1267 = vmatmul.mubr.f32.gmra.mrb[0].mxu0 %v1266
    %v1268 = vpop.f32.mrb[0].mxu0
    %v1269 = vadd.f32 0.0, %v1268
    %v1270 = vpop.f32.mrb[0].mxu0
    %v1271 = vadd.f32 0.0, %v1270
    %1272 = vmatprep.mubr.f32.mxu0 0.0
    %v1273 = vand.u32 %v379, 4294901760
    %v1274 = vsub.f32 %v379, %v1273
    %v1275 = vand.u32 %v1274, 4294901760
    %v1276 = vsub.f32 %v1274, %v1275
    %v1277 = vand.u32 %v1276, 4294901760
    %1278 = vmatmul.mubr.f32.gmra.mrb[0].mxu0 %v1277
    %v1279 = vpop.f32.mrb[0].mxu0
    %v1280 = vadd.f32 0.0, %v1279
    %v1281 = vpop.f32.mrb[0].mxu0
    %v1282 = vadd.f32 0.0, %v1281
    %1283 = vmatprep.mubr.f32.mxu0 0.0
    %v1284 = vand.u32 %v382, 4294901760
    %v1285 = vsub.f32 %v382, %v1284
    %v1286 = vand.u32 %v1285, 4294901760
    %v1287 = vsub.f32 %v1285, %v1286
    %v1288 = vand.u32 %v1287, 4294901760
    %1289 = vmatmul.mubr.f32.gmra.mrb[0].mxu0 %v1288
    %v1290 = vpop.f32.mrb[0].mxu0
    %v1291 = vadd.f32 0.0, %v1290
    %v1292 = vpop.f32.mrb[0].mxu0
    %v1293 = vadd.f32 0.0, %v1292
    %1294 = vmatprep.mubr.f32.mxu0 0.0
    %v1295 = vand.u32 %v385, 4294901760
    %v1296 = vsub.f32 %v385, %v1295
    %v1297 = vand.u32 %v1296, 4294901760
    %v1298 = vsub.f32 %v1296, %v1297
    %v1299 = vand.u32 %v1298, 4294901760
    %1300 = vmatmul.mubr.f32.gmra.mrb[0].mxu0 %v1299
    %v1301 = vpop.f32.mrb[0].mxu0
    %v1302 = vadd.f32 0.0, %v1301
    %v1303 = vpop.f32.mrb[0].mxu0
    %v1304 = vadd.f32 0.0, %v1303
    %1305 = vdwg.mxu0
    %v1306 = vand.u32 %v200, 4294901760
    %v1307 = vsub.f32 %v200, %v1306
    %v1308 = vand.u32 %v1307, 4294901760
    %v1309 = vsub.f32 %v1307, %v1308
    %v1310 = vand.u32 %v1309, 4294901760
    %1311 = vmatprep.subr.mxu0 %v1310
    %v1312 = vand.u32 %v199, 4294901760
    %v1313 = vsub.f32 %v199, %v1312
    %v1314 = vand.u32 %v1313, 4294901760
    %v1315 = vsub.f32 %v1313, %v1314
    %v1316 = vand.u32 %v1315, 4294901760
    %1317 = vmatpush1.msra.mxu0 %v1316
    %v1318 = vand.u32 %v204, 4294901760
    %v1319 = vsub.f32 %v204, %v1318
    %v1320 = vand.u32 %v1319, 4294901760
    %v1321 = vsub.f32 %v1319, %v1320
    %v1322 = vand.u32 %v1321, 4294901760
    %1323 = vmatprep.subr.mxu0 %v1322
    %v1324 = vand.u32 %v203, 4294901760
    %v1325 = vsub.f32 %v203, %v1324
    %v1326 = vand.u32 %v1325, 4294901760
    %v1327 = vsub.f32 %v1325, %v1326
    %v1328 = vand.u32 %v1327, 4294901760
    %1329 = vmatpush1.msra.mxu0 %v1328
    %v1330 = vand.u32 %v208, 4294901760
    %v1331 = vsub.f32 %v208, %v1330
    %v1332 = vand.u32 %v1331, 4294901760
    %v1333 = vsub.f32 %v1331, %v1332
    %v1334 = vand.u32 %v1333, 4294901760
    %1335 = vmatprep.subr.mxu0 %v1334
    %v1336 = vand.u32 %v207, 4294901760
    %v1337 = vsub.f32 %v207, %v1336
    %v1338 = vand.u32 %v1337, 4294901760
    %v1339 = vsub.f32 %v1337, %v1338
    %v1340 = vand.u32 %v1339, 4294901760
    %1341 = vmatpush1.msra.mxu0 %v1340
    %v1342 = vand.u32 %v212, 4294901760
    %v1343 = vsub.f32 %v212, %v1342
    %v1344 = vand.u32 %v1343, 4294901760
    %v1345 = vsub.f32 %v1343, %v1344
    %v1346 = vand.u32 %v1345, 4294901760
    %1347 = vmatprep.subr.mxu0 %v1346
    %v1348 = vand.u32 %v211, 4294901760
    %v1349 = vsub.f32 %v211, %v1348
    %v1350 = vand.u32 %v1349, 4294901760
    %v1351 = vsub.f32 %v1349, %v1350
    %v1352 = vand.u32 %v1351, 4294901760
    %1353 = vmatpush1.msra.mxu0 %v1352
    %v1354 = vand.u32 %v216, 4294901760
    %v1355 = vsub.f32 %v216, %v1354
    %v1356 = vand.u32 %v1355, 4294901760
    %v1357 = vsub.f32 %v1355, %v1356
    %v1358 = vand.u32 %v1357, 4294901760
    %1359 = vmatprep.subr.mxu0 %v1358
    %v1360 = vand.u32 %v215, 4294901760
    %v1361 = vsub.f32 %v215, %v1360
    %v1362 = vand.u32 %v1361, 4294901760
    %v1363 = vsub.f32 %v1361, %v1362
    %v1364 = vand.u32 %v1363, 4294901760
    %1365 = vmatpush1.msra.mxu0 %v1364
    %v1366 = vand.u32 %v220, 4294901760
    %v1367 = vsub.f32 %v220, %v1366
    %v1368 = vand.u32 %v1367, 4294901760
    %v1369 = vsub.f32 %v1367, %v1368
    %v1370 = vand.u32 %v1369, 4294901760
    %1371 = vmatprep.subr.mxu0 %v1370
    %v1372 = vand.u32 %v219, 4294901760
    %v1373 = vsub.f32 %v219, %v1372
    %v1374 = vand.u32 %v1373, 4294901760
    %v1375 = vsub.f32 %v1373, %v1374
    %v1376 = vand.u32 %v1375, 4294901760
    %1377 = vmatpush1.msra.mxu0 %v1376
    %v1378 = vand.u32 %v224, 4294901760
    %v1379 = vsub.f32 %v224, %v1378
    %v1380 = vand.u32 %v1379, 4294901760
    %v1381 = vsub.f32 %v1379, %v1380
    %v1382 = vand.u32 %v1381, 4294901760
    %1383 = vmatprep.subr.mxu0 %v1382
    %v1384 = vand.u32 %v223, 4294901760
    %v1385 = vsub.f32 %v223, %v1384
    %v1386 = vand.u32 %v1385, 4294901760
    %v1387 = vsub.f32 %v1385, %v1386
    %v1388 = vand.u32 %v1387, 4294901760
    %1389 = vmatpush1.msra.mxu0 %v1388
    %v1390 = vand.u32 %v228, 4294901760
    %v1391 = vsub.f32 %v228, %v1390
    %v1392 = vand.u32 %v1391, 4294901760
    %v1393 = vsub.f32 %v1391, %v1392
    %v1394 = vand.u32 %v1393, 4294901760
    %1395 = vmatprep.subr.mxu0 %v1394
    %v1396 = vand.u32 %v227, 4294901760
    %v1397 = vsub.f32 %v227, %v1396
    %v1398 = vand.u32 %v1397, 4294901760
    %v1399 = vsub.f32 %v1397, %v1398
    %v1400 = vand.u32 %v1399, 4294901760
    %1401 = vmatpush1.msra.mxu0 %v1400
    %1402 = vmatprep.subr.mxu0 0.0
    %1403 = vmatpush1.msra.mxu0 0.0
    %1404 = vmatprep.subr.mxu0 0.0
    %1405 = vmatpush1.msra.mxu0 0.0
    %1406 = vmatprep.subr.mxu0 0.0
    %1407 = vmatpush1.msra.mxu0 0.0
    %1408 = vmatprep.subr.mxu0 0.0
    %1409 = vmatpush1.msra.mxu0 0.0
    %1410 = vmatprep.subr.mxu0 0.0
    %1411 = vmatpush1.msra.mxu0 0.0
    %1412 = vmatprep.subr.mxu0 0.0
    %1413 = vmatpush1.msra.mxu0 0.0
    %1414 = vmatprep.subr.mxu0 0.0
    %1415 = vmatpush1.msra.mxu0 0.0
    %1416 = vmatprep.subr.mxu0 0.0
    %1417 = vmatpush1.msra.mxu0 0.0
    %1418 = vmatprep.subr.mxu0 0.0
    %1419 = vmatpush1.msra.mxu0 0.0
    %1420 = vmatprep.subr.mxu0 0.0
    %1421 = vmatpush1.msra.mxu0 0.0
    %1422 = vmatprep.subr.mxu0 0.0
    %1423 = vmatpush1.msra.mxu0 0.0
    %1424 = vmatprep.subr.mxu0 0.0
    %1425 = vmatpush1.msra.mxu0 0.0
    %1426 = vmatprep.subr.mxu0 0.0
    %1427 = vmatpush1.msra.mxu0 0.0
    %1428 = vmatprep.subr.mxu0 0.0
    %1429 = vmatpush1.msra.mxu0 0.0
    %1430 = vmatprep.subr.mxu0 0.0
    %1431 = vmatpush1.msra.mxu0 0.0
    %1432 = vmatprep.subr.mxu0 0.0
    %1433 = vmatpush1.msra.mxu0 0.0
    %1434 = vmatprep.subr.mxu0 0.0
    %1435 = vmatpush1.msra.mxu0 0.0
    %1436 = vmatprep.subr.mxu0 0.0
    %1437 = vmatpush1.msra.mxu0 0.0
    %1438 = vmatprep.subr.mxu0 0.0
    %1439 = vmatpush1.msra.mxu0 0.0
    %1440 = vmatprep.subr.mxu0 0.0
    %1441 = vmatpush1.msra.mxu0 0.0
    %1442 = vmatprep.subr.mxu0 0.0
    %1443 = vmatpush1.msra.mxu0 0.0
    %1444 = vmatprep.subr.mxu0 0.0
    %1445 = vmatpush1.msra.mxu0 0.0
    %1446 = vmatprep.subr.mxu0 0.0
    %1447 = vmatpush1.msra.mxu0 0.0
    %1448 = vmatprep.subr.mxu0 0.0
    %1449 = vmatpush1.msra.mxu0 0.0
    %1450 = vmatprep.mubr.f32.mxu0 0.0
    %v1451 = vand.u32 %v376, 4294901760
    %1452 = vmatmul.mubr.f32.gmra.mrb[0].mxu0 %v1451
    %v1453 = vpop.f32.mrb[0].mxu0
    %v1454 = vadd.f32 %v1269, %v1453
    %v1455 = vpop.f32.mrb[0].mxu0
    %v1456 = vadd.f32 %v1271, %v1455
    %1457 = vmatprep.mubr.f32.mxu0 0.0
    %v1458 = vand.u32 %v379, 4294901760
    %1459 = vmatmul.mubr.f32.gmra.mrb[0].mxu0 %v1458
    %v1460 = vpop.f32.mrb[0].mxu0
    %v1461 = vadd.f32 %v1280, %v1460
    %v1462 = vpop.f32.mrb[0].mxu0
    %v1463 = vadd.f32 %v1282, %v1462
    %1464 = vmatprep.mubr.f32.mxu0 0.0
    %v1465 = vand.u32 %v382, 4294901760
    %1466 = vmatmul.mubr.f32.gmra.mrb[0].mxu0 %v1465
    %v1467 = vpop.f32.mrb[0].mxu0
    %v1468 = vadd.f32 %v1291, %v1467
    %v1469 = vpop.f32.mrb[0].mxu0
    %v1470 = vadd.f32 %v1293, %v1469
    %1471 = vmatprep.mubr.f32.mxu0 0.0
    %v1472 = vand.u32 %v385, 4294901760
    %1473 = vmatmul.mubr.f32.gmra.mrb[0].mxu0 %v1472
    %v1474 = vpop.f32.mrb[0].mxu0
    %v1475 = vadd.f32 %v1302, %v1474
    %v1476 = vpop.f32.mrb[0].mxu0
    %v1477 = vadd.f32 %v1304, %v1476
    %1478 = vdwg.mxu0
    %v1479 = vand.u32 %v200, 4294901760
    %v1480 = vsub.f32 %v200, %v1479
    %1481 = vmatprep.subr.mxu0 %v1480
    %v1482 = vand.u32 %v199, 4294901760
    %v1483 = vsub.f32 %v199, %v1482
    %1484 = vmatpush1.msra.mxu0 %v1483
    %v1485 = vand.u32 %v204, 4294901760
    %v1486 = vsub.f32 %v204, %v1485
    %1487 = vmatprep.subr.mxu0 %v1486
    %v1488 = vand.u32 %v203, 4294901760
    %v1489 = vsub.f32 %v203, %v1488
    %1490 = vmatpush1.msra.mxu0 %v1489
    %v1491 = vand.u32 %v208, 4294901760
    %v1492 = vsub.f32 %v208, %v1491
    %1493 = vmatprep.subr.mxu0 %v1492
    %v1494 = vand.u32 %v207, 4294901760
    %v1495 = vsub.f32 %v207, %v1494
    %1496 = vmatpush1.msra.mxu0 %v1495
    %v1497 = vand.u32 %v212, 4294901760
    %v1498 = vsub.f32 %v212, %v1497
    %1499 = vmatprep.subr.mxu0 %v1498
    %v1500 = vand.u32 %v211, 4294901760
    %v1501 = vsub.f32 %v211, %v1500
    %1502 = vmatpush1.msra.mxu0 %v1501
    %v1503 = vand.u32 %v216, 4294901760
    %v1504 = vsub.f32 %v216, %v1503
    %1505 = vmatprep.subr.mxu0 %v1504
    %v1506 = vand.u32 %v215, 4294901760
    %v1507 = vsub.f32 %v215, %v1506
    %1508 = vmatpush1.msra.mxu0 %v1507
    %v1509 = vand.u32 %v220, 4294901760
    %v1510 = vsub.f32 %v220, %v1509
    %1511 = vmatprep.subr.mxu0 %v1510
    %v1512 = vand.u32 %v219, 4294901760
    %v1513 = vsub.f32 %v219, %v1512
    %1514 = vmatpush1.msra.mxu0 %v1513
    %v1515 = vand.u32 %v224, 4294901760
    %v1516 = vsub.f32 %v224, %v1515
    %1517 = vmatprep.subr.mxu0 %v1516
    %v1518 = vand.u32 %v223, 4294901760
    %v1519 = vsub.f32 %v223, %v1518
    %1520 = vmatpush1.msra.mxu0 %v1519
    %v1521 = vand.u32 %v228, 4294901760
    %v1522 = vsub.f32 %v228, %v1521
    %1523 = vmatprep.subr.mxu0 %v1522
    %v1524 = vand.u32 %v227, 4294901760
    %v1525 = vsub.f32 %v227, %v1524
    %1526 = vmatpush1.msra.mxu0 %v1525
    %1527 = vmatprep.subr.mxu0 0.0
    %1528 = vmatpush1.msra.mxu0 0.0
    %1529 = vmatprep.subr.mxu0 0.0
    %1530 = vmatpush1.msra.mxu0 0.0
    %1531 = vmatprep.subr.mxu0 0.0
    %1532 = vmatpush1.msra.mxu0 0.0
    %1533 = vmatprep.subr.mxu0 0.0
    %1534 = vmatpush1.msra.mxu0 0.0
    %1535 = vmatprep.subr.mxu0 0.0
    %1536 = vmatpush1.msra.mxu0 0.0
    %1537 = vmatprep.subr.mxu0 0.0
    %1538 = vmatpush1.msra.mxu0 0.0
    %1539 = vmatprep.subr.mxu0 0.0
    %1540 = vmatpush1.msra.mxu0 0.0
    %1541 = vmatprep.subr.mxu0 0.0
    %1542 = vmatpush1.msra.mxu0 0.0
    %1543 = vmatprep.subr.mxu0 0.0
    %1544 = vmatpush1.msra.mxu0 0.0
    %1545 = vmatprep.subr.mxu0 0.0
    %1546 = vmatpush1.msra.mxu0 0.0
    %1547 = vmatprep.subr.mxu0 0.0
    %1548 = vmatpush1.msra.mxu0 0.0
    %1549 = vmatprep.subr.mxu0 0.0
    %1550 = vmatpush1.msra.mxu0 0.0
    %1551 = vmatprep.subr.mxu0 0.0
    %1552 = vmatpush1.msra.mxu0 0.0
    %1553 = vmatprep.subr.mxu0 0.0
    %1554 = vmatpush1.msra.mxu0 0.0
    %1555 = vmatprep.subr.mxu0 0.0
    %1556 = vmatpush1.msra.mxu0 0.0
    %1557 = vmatprep.subr.mxu0 0.0
    %1558 = vmatpush1.msra.mxu0 0.0
    %1559 = vmatprep.subr.mxu0 0.0
    %1560 = vmatpush1.msra.mxu0 0.0
    %1561 = vmatprep.subr.mxu0 0.0
    %1562 = vmatpush1.msra.mxu0 0.0
    %1563 = vmatprep.subr.mxu0 0.0
    %1564 = vmatpush1.msra.mxu0 0.0
    %1565 = vmatprep.subr.mxu0 0.0
    %1566 = vmatpush1.msra.mxu0 0.0
    %1567 = vmatprep.subr.mxu0 0.0
    %1568 = vmatpush1.msra.mxu0 0.0
    %1569 = vmatprep.subr.mxu0 0.0
    %1570 = vmatpush1.msra.mxu0 0.0
    %1571 = vmatprep.subr.mxu0 0.0
    %1572 = vmatpush1.msra.mxu0 0.0
    %1573 = vmatprep.subr.mxu0 0.0
    %1574 = vmatpush1.msra.mxu0 0.0
    %1575 = vmatprep.mubr.f32.mxu0 0.0
    %v1576 = vand.u32 %v376, 4294901760
    %v1577 = vsub.f32 %v376, %v1576
    %1578 = vmatmul.mubr.f32.gmra.mrb[0].mxu0 %v1577
    %v1579 = vpop.f32.mrb[0].mxu0
    %v1580 = vadd.f32 %v1454, %v1579
    %v1581 = vpop.f32.mrb[0].mxu0
    %v1582 = vadd.f32 %v1456, %v1581
    %1583 = vmatprep.mubr.f32.mxu0 0.0
    %v1584 = vand.u32 %v379, 4294901760
    %v1585 = vsub.f32 %v379, %v1584
    %1586 = vmatmul.mubr.f32.gmra.mrb[0].mxu0 %v1585
    %v1587 = vpop.f32.mrb[0].mxu0
    %v1588 = vadd.f32 %v1461, %v1587
    %v1589 = vpop.f32.mrb[0].mxu0
    %v1590 = vadd.f32 %v1463, %v1589
    %1591 = vmatprep.mubr.f32.mxu0 0.0
    %v1592 = vand.u32 %v382, 4294901760
    %v1593 = vsub.f32 %v382, %v1592
    %1594 = vmatmul.mubr.f32.gmra.mrb[0].mxu0 %v1593
    %v1595 = vpop.f32.mrb[0].mxu0
    %v1596 = vadd.f32 %v1468, %v1595
    %v1597 = vpop.f32.mrb[0].mxu0
    %v1598 = vadd.f32 %v1470, %v1597
    %1599 = vmatprep.mubr.f32.mxu0 0.0
    %v1600 = vand.u32 %v385, 4294901760
    %v1601 = vsub.f32 %v385, %v1600
    %1602 = vmatmul.mubr.f32.gmra.mrb[0].mxu0 %v1601
    %v1603 = vpop.f32.mrb[0].mxu0
    %v1604 = vadd.f32 %v1475, %v1603
    %v1605 = vpop.f32.mrb[0].mxu0
    %v1606 = vadd.f32 %v1477, %v1605
    %1607 = vdwg.mxu0
    %v1608 = vand.u32 %v200, 4294901760
    %1609 = vmatprep.subr.mxu0 %v1608
    %v1610 = vand.u32 %v199, 4294901760
    %1611 = vmatpush1.msra.mxu0 %v1610
    %v1612 = vand.u32 %v204, 4294901760
    %1613 = vmatprep.subr.mxu0 %v1612
    %v1614 = vand.u32 %v203, 4294901760
    %1615 = vmatpush1.msra.mxu0 %v1614
    %v1616 = vand.u32 %v208, 4294901760
    %1617 = vmatprep.subr.mxu0 %v1616
    %v1618 = vand.u32 %v207, 4294901760
    %1619 = vmatpush1.msra.mxu0 %v1618
    %v1620 = vand.u32 %v212, 4294901760
    %1621 = vmatprep.subr.mxu0 %v1620
    %v1622 = vand.u32 %v211, 4294901760
    %1623 = vmatpush1.msra.mxu0 %v1622
    %v1624 = vand.u32 %v216, 4294901760
    %1625 = vmatprep.subr.mxu0 %v1624
    %v1626 = vand.u32 %v215, 4294901760
    %1627 = vmatpush1.msra.mxu0 %v1626
    %v1628 = vand.u32 %v220, 4294901760
    %1629 = vmatprep.subr.mxu0 %v1628
    %v1630 = vand.u32 %v219, 4294901760
    %1631 = vmatpush1.msra.mxu0 %v1630
    %v1632 = vand.u32 %v224, 4294901760
    %1633 = vmatprep.subr.mxu0 %v1632
    %v1634 = vand.u32 %v223, 4294901760
    %1635 = vmatpush1.msra.mxu0 %v1634
    %v1636 = vand.u32 %v228, 4294901760
    %1637 = vmatprep.subr.mxu0 %v1636
    %v1638 = vand.u32 %v227, 4294901760
    %1639 = vmatpush1.msra.mxu0 %v1638
    %1640 = vmatprep.subr.mxu0 0.0
    %1641 = vmatpush1.msra.mxu0 0.0
    %1642 = vmatprep.subr.mxu0 0.0
    %1643 = vmatpush1.msra.mxu0 0.0
    %1644 = vmatprep.subr.mxu0 0.0
    %1645 = vmatpush1.msra.mxu0 0.0
    %1646 = vmatprep.subr.mxu0 0.0
    %1647 = vmatpush1.msra.mxu0 0.0
    %1648 = vmatprep.subr.mxu0 0.0
    %1649 = vmatpush1.msra.mxu0 0.0
    %1650 = vmatprep.subr.mxu0 0.0
    %1651 = vmatpush1.msra.mxu0 0.0
    %1652 = vmatprep.subr.mxu0 0.0
    %1653 = vmatpush1.msra.mxu0 0.0
    %1654 = vmatprep.subr.mxu0 0.0
    %1655 = vmatpush1.msra.mxu0 0.0
    %1656 = vmatprep.subr.mxu0 0.0
    %1657 = vmatpush1.msra.mxu0 0.0
    %1658 = vmatprep.subr.mxu0 0.0
    %1659 = vmatpush1.msra.mxu0 0.0
    %1660 = vmatprep.subr.mxu0 0.0
    %1661 = vmatpush1.msra.mxu0 0.0
    %1662 = vmatprep.subr.mxu0 0.0
    %1663 = vmatpush1.msra.mxu0 0.0
    %1664 = vmatprep.subr.mxu0 0.0
    %1665 = vmatpush1.msra.mxu0 0.0
    %1666 = vmatprep.subr.mxu0 0.0
    %1667 = vmatpush1.msra.mxu0 0.0
    %1668 = vmatprep.subr.mxu0 0.0
    %1669 = vmatpush1.msra.mxu0 0.0
    %1670 = vmatprep.subr.mxu0 0.0
    %1671 = vmatpush1.msra.mxu0 0.0
    %1672 = vmatprep.subr.mxu0 0.0
    %1673 = vmatpush1.msra.mxu0 0.0
    %1674 = vmatprep.subr.mxu0 0.0
    %1675 = vmatpush1.msra.mxu0 0.0
    %1676 = vmatprep.subr.mxu0 0.0
    %1677 = vmatpush1.msra.mxu0 0.0
    %1678 = vmatprep.subr.mxu0 0.0
    %1679 = vmatpush1.msra.mxu0 0.0
    %1680 = vmatprep.subr.mxu0 0.0
    %1681 = vmatpush1.msra.mxu0 0.0
    %1682 = vmatprep.subr.mxu0 0.0
    %1683 = vmatpush1.msra.mxu0 0.0
    %1684 = vmatprep.subr.mxu0 0.0
    %1685 = vmatpush1.msra.mxu0 0.0
    %1686 = vmatprep.subr.mxu0 0.0
    %1687 = vmatpush1.msra.mxu0 0.0
    %1688 = vmatprep.mubr.f32.mxu0 0.0
    %v1689 = vand.u32 %v376, 4294901760
    %v1690 = vsub.f32 %v376, %v1689
    %v1691 = vand.u32 %v1690, 4294901760
    %1692 = vmatmul.mubr.f32.gmra.mrb[0].mxu0 %v1691
    %v1693 = vpop.f32.mrb[0].mxu0
    %v1694 = vadd.f32 %v1580, %v1693
    %v1695 = vpop.f32.mrb[0].mxu0
    %v1696 = vadd.f32 %v1582, %v1695
    %1697 = vmatprep.mubr.f32.mxu0 0.0
    %v1698 = vand.u32 %v379, 4294901760
    %v1699 = vsub.f32 %v379, %v1698
    %v1700 = vand.u32 %v1699, 4294901760
    %1701 = vmatmul.mubr.f32.gmra.mrb[0].mxu0 %v1700
    %v1702 = vpop.f32.mrb[0].mxu0
    %v1703 = vadd.f32 %v1588, %v1702
    %v1704 = vpop.f32.mrb[0].mxu0
    %v1705 = vadd.f32 %v1590, %v1704
    %1706 = vmatprep.mubr.f32.mxu0 0.0
    %v1707 = vand.u32 %v382, 4294901760
    %v1708 = vsub.f32 %v382, %v1707
    %v1709 = vand.u32 %v1708, 4294901760
    %1710 = vmatmul.mubr.f32.gmra.mrb[0].mxu0 %v1709
    %v1711 = vpop.f32.mrb[0].mxu0
    %v1712 = vadd.f32 %v1596, %v1711
    %v1713 = vpop.f32.mrb[0].mxu0
    %v1714 = vadd.f32 %v1598, %v1713
    %1715 = vmatprep.mubr.f32.mxu0 0.0
    %v1716 = vand.u32 %v385, 4294901760
    %v1717 = vsub.f32 %v385, %v1716
    %v1718 = vand.u32 %v1717, 4294901760
    %1719 = vmatmul.mubr.f32.gmra.mrb[0].mxu0 %v1718
    %v1720 = vpop.f32.mrb[0].mxu0
    %v1721 = vadd.f32 %v1604, %v1720
    %v1722 = vpop.f32.mrb[0].mxu0
    %v1723 = vadd.f32 %v1606, %v1722
    %1724 = vdwg.mxu0
    %v1725 = vand.u32 %v200, 4294901760
    %v1726 = vsub.f32 %v200, %v1725
    %v1727 = vand.u32 %v1726, 4294901760
    %1728 = vmatprep.subr.mxu0 %v1727
    %v1729 = vand.u32 %v199, 4294901760
    %v1730 = vsub.f32 %v199, %v1729
    %v1731 = vand.u32 %v1730, 4294901760
    %1732 = vmatpush1.msra.mxu0 %v1731
    %v1733 = vand.u32 %v204, 4294901760
    %v1734 = vsub.f32 %v204, %v1733
    %v1735 = vand.u32 %v1734, 4294901760
    %1736 = vmatprep.subr.mxu0 %v1735
    %v1737 = vand.u32 %v203, 4294901760
    %v1738 = vsub.f32 %v203, %v1737
    %v1739 = vand.u32 %v1738, 4294901760
    %1740 = vmatpush1.msra.mxu0 %v1739
    %v1741 = vand.u32 %v208, 4294901760
    %v1742 = vsub.f32 %v208, %v1741
    %v1743 = vand.u32 %v1742, 4294901760
    %1744 = vmatprep.subr.mxu0 %v1743
    %v1745 = vand.u32 %v207, 4294901760
    %v1746 = vsub.f32 %v207, %v1745
    %v1747 = vand.u32 %v1746, 4294901760
    %1748 = vmatpush1.msra.mxu0 %v1747
    %v1749 = vand.u32 %v212, 4294901760
    %v1750 = vsub.f32 %v212, %v1749
    %v1751 = vand.u32 %v1750, 4294901760
    %1752 = vmatprep.subr.mxu0 %v1751
    %v1753 = vand.u32 %v211, 4294901760
    %v1754 = vsub.f32 %v211, %v1753
    %v1755 = vand.u32 %v1754, 4294901760
    %1756 = vmatpush1.msra.mxu0 %v1755
    %v1757 = vand.u32 %v216, 4294901760
    %v1758 = vsub.f32 %v216, %v1757
    %v1759 = vand.u32 %v1758, 4294901760
    %1760 = vmatprep.subr.mxu0 %v1759
    %v1761 = vand.u32 %v215, 4294901760
    %v1762 = vsub.f32 %v215, %v1761
    %v1763 = vand.u32 %v1762, 4294901760
    %1764 = vmatpush1.msra.mxu0 %v1763
    %v1765 = vand.u32 %v220, 4294901760
    %v1766 = vsub.f32 %v220, %v1765
    %v1767 = vand.u32 %v1766, 4294901760
    %1768 = vmatprep.subr.mxu0 %v1767
    %v1769 = vand.u32 %v219, 4294901760
    %v1770 = vsub.f32 %v219, %v1769
    %v1771 = vand.u32 %v1770, 4294901760
    %1772 = vmatpush1.msra.mxu0 %v1771
    %v1773 = vand.u32 %v224, 4294901760
    %v1774 = vsub.f32 %v224, %v1773
    %v1775 = vand.u32 %v1774, 4294901760
    %1776 = vmatprep.subr.mxu0 %v1775
    %v1777 = vand.u32 %v223, 4294901760
    %v1778 = vsub.f32 %v223, %v1777
    %v1779 = vand.u32 %v1778, 4294901760
    %1780 = vmatpush1.msra.mxu0 %v1779
    %v1781 = vand.u32 %v228, 4294901760
    %v1782 = vsub.f32 %v228, %v1781
    %v1783 = vand.u32 %v1782, 4294901760
    %1784 = vmatprep.subr.mxu0 %v1783
    %v1785 = vand.u32 %v227, 4294901760
    %v1786 = vsub.f32 %v227, %v1785
    %v1787 = vand.u32 %v1786, 4294901760
    %1788 = vmatpush1.msra.mxu0 %v1787
    %1789 = vmatprep.subr.mxu0 0.0
    %1790 = vmatpush1.msra.mxu0 0.0
    %1791 = vmatprep.subr.mxu0 0.0
    %1792 = vmatpush1.msra.mxu0 0.0
    %1793 = vmatprep.subr.mxu0 0.0
    %1794 = vmatpush1.msra.mxu0 0.0
    %1795 = vmatprep.subr.mxu0 0.0
    %1796 = vmatpush1.msra.mxu0 0.0
    %1797 = vmatprep.subr.mxu0 0.0
    %1798 = vmatpush1.msra.mxu0 0.0
    %1799 = vmatprep.subr.mxu0 0.0
    %1800 = vmatpush1.msra.mxu0 0.0
    %1801 = vmatprep.subr.mxu0 0.0
    %1802 = vmatpush1.msra.mxu0 0.0
    %1803 = vmatprep.subr.mxu0 0.0
    %1804 = vmatpush1.msra.mxu0 0.0
    %1805 = vmatprep.subr.mxu0 0.0
    %1806 = vmatpush1.msra.mxu0 0.0
    %1807 = vmatprep.subr.mxu0 0.0
    %1808 = vmatpush1.msra.mxu0 0.0
    %1809 = vmatprep.subr.mxu0 0.0
    %1810 = vmatpush1.msra.mxu0 0.0
    %1811 = vmatprep.subr.mxu0 0.0
    %1812 = vmatpush1.msra.mxu0 0.0
    %1813 = vmatprep.subr.mxu0 0.0
    %1814 = vmatpush1.msra.mxu0 0.0
    %1815 = vmatprep.subr.mxu0 0.0
    %1816 = vmatpush1.msra.mxu0 0.0
    %1817 = vmatprep.subr.mxu0 0.0
    %1818 = vmatpush1.msra.mxu0 0.0
    %1819 = vmatprep.subr.mxu0 0.0
    %1820 = vmatpush1.msra.mxu0 0.0
    %1821 = vmatprep.subr.mxu0 0.0
    %1822 = vmatpush1.msra.mxu0 0.0
    %1823 = vmatprep.subr.mxu0 0.0
    %1824 = vmatpush1.msra.mxu0 0.0
    %1825 = vmatprep.subr.mxu0 0.0
    %1826 = vmatpush1.msra.mxu0 0.0
    %1827 = vmatprep.subr.mxu0 0.0
    %1828 = vmatpush1.msra.mxu0 0.0
    %1829 = vmatprep.subr.mxu0 0.0
    %1830 = vmatpush1.msra.mxu0 0.0
    %1831 = vmatprep.subr.mxu0 0.0
    %1832 = vmatpush1.msra.mxu0 0.0
    %1833 = vmatprep.subr.mxu0 0.0
    %1834 = vmatpush1.msra.mxu0 0.0
    %1835 = vmatprep.subr.mxu0 0.0
    %1836 = vmatpush1.msra.mxu0 0.0
    %1837 = vmatprep.mubr.f32.mxu0 0.0
    %v1838 = vand.u32 %v376, 4294901760
    %1839 = vmatmul.mubr.f32.gmra.mrb[0].mxu0 %v1838
    %v1840 = vpop.f32.mrb[0].mxu0
    %v1841 = vadd.f32 %v1694, %v1840
    %v1842 = vpop.f32.mrb[0].mxu0
    %v1843 = vadd.f32 %v1696, %v1842
    %1844 = vmatprep.mubr.f32.mxu0 0.0
    %v1845 = vand.u32 %v379, 4294901760
    %1846 = vmatmul.mubr.f32.gmra.mrb[0].mxu0 %v1845
    %v1847 = vpop.f32.mrb[0].mxu0
    %v1848 = vadd.f32 %v1703, %v1847
    %v1849 = vpop.f32.mrb[0].mxu0
    %v1850 = vadd.f32 %v1705, %v1849
    %1851 = vmatprep.mubr.f32.mxu0 0.0
    %v1852 = vand.u32 %v382, 4294901760
    %1853 = vmatmul.mubr.f32.gmra.mrb[0].mxu0 %v1852
    %v1854 = vpop.f32.mrb[0].mxu0
    %v1855 = vadd.f32 %v1712, %v1854
    %v1856 = vpop.f32.mrb[0].mxu0
    %v1857 = vadd.f32 %v1714, %v1856
    %1858 = vmatprep.mubr.f32.mxu0 0.0
    %v1859 = vand.u32 %v385, 4294901760
    %1860 = vmatmul.mubr.f32.gmra.mrb[0].mxu0 %v1859
    %v1861 = vpop.f32.mrb[0].mxu0
    %v1862 = vadd.f32 %v1721, %v1861
    %v1863 = vpop.f32.mrb[0].mxu0
    %v1864 = vadd.f32 %v1723, %v1863
    %1865 = vdwg.mxu0
    %v1866 = vand.u32 %v200, 4294901760
    %1867 = vmatprep.subr.mxu0 %v1866
    %v1868 = vand.u32 %v199, 4294901760
    %1869 = vmatpush1.msra.mxu0 %v1868
    %v1870 = vand.u32 %v204, 4294901760
    %1871 = vmatprep.subr.mxu0 %v1870
    %v1872 = vand.u32 %v203, 4294901760
    %1873 = vmatpush1.msra.mxu0 %v1872
    %v1874 = vand.u32 %v208, 4294901760
    %1875 = vmatprep.subr.mxu0 %v1874
    %v1876 = vand.u32 %v207, 4294901760
    %1877 = vmatpush1.msra.mxu0 %v1876
    %v1878 = vand.u32 %v212, 4294901760
    %1879 = vmatprep.subr.mxu0 %v1878
    %v1880 = vand.u32 %v211, 4294901760
    %1881 = vmatpush1.msra.mxu0 %v1880
    %v1882 = vand.u32 %v216, 4294901760
    %1883 = vmatprep.subr.mxu0 %v1882
    %v1884 = vand.u32 %v215, 4294901760
    %1885 = vmatpush1.msra.mxu0 %v1884
    %v1886 = vand.u32 %v220, 4294901760
    %1887 = vmatprep.subr.mxu0 %v1886
    %v1888 = vand.u32 %v219, 4294901760
    %1889 = vmatpush1.msra.mxu0 %v1888
    %v1890 = vand.u32 %v224, 4294901760
    %1891 = vmatprep.subr.mxu0 %v1890
    %v1892 = vand.u32 %v223, 4294901760
    %1893 = vmatpush1.msra.mxu0 %v1892
    %v1894 = vand.u32 %v228, 4294901760
    %1895 = vmatprep.subr.mxu0 %v1894
    %v1896 = vand.u32 %v227, 4294901760
    %1897 = vmatpush1.msra.mxu0 %v1896
    %1898 = vmatprep.subr.mxu0 0.0
    %1899 = vmatpush1.msra.mxu0 0.0
    %1900 = vmatprep.subr.mxu0 0.0
    %1901 = vmatpush1.msra.mxu0 0.0
    %1902 = vmatprep.subr.mxu0 0.0
    %1903 = vmatpush1.msra.mxu0 0.0
    %1904 = vmatprep.subr.mxu0 0.0
    %1905 = vmatpush1.msra.mxu0 0.0
    %1906 = vmatprep.subr.mxu0 0.0
    %1907 = vmatpush1.msra.mxu0 0.0
    %1908 = vmatprep.subr.mxu0 0.0
    %1909 = vmatpush1.msra.mxu0 0.0
    %1910 = vmatprep.subr.mxu0 0.0
    %1911 = vmatpush1.msra.mxu0 0.0
    %1912 = vmatprep.subr.mxu0 0.0
    %1913 = vmatpush1.msra.mxu0 0.0
    %1914 = vmatprep.subr.mxu0 0.0
    %1915 = vmatpush1.msra.mxu0 0.0
    %1916 = vmatprep.subr.mxu0 0.0
    %1917 = vmatpush1.msra.mxu0 0.0
    %1918 = vmatprep.subr.mxu0 0.0
    %1919 = vmatpush1.msra.mxu0 0.0
    %1920 = vmatprep.subr.mxu0 0.0
    %1921 = vmatpush1.msra.mxu0 0.0
    %1922 = vmatprep.subr.mxu0 0.0
    %1923 = vmatpush1.msra.mxu0 0.0
    %1924 = vmatprep.subr.mxu0 0.0
    %1925 = vmatpush1.msra.mxu0 0.0
    %1926 = vmatprep.subr.mxu0 0.0
    %1927 = vmatpush1.msra.mxu0 0.0
    %1928 = vmatprep.subr.mxu0 0.0
    %1929 = vmatpush1.msra.mxu0 0.0
    %1930 = vmatprep.subr.mxu0 0.0
    %1931 = vmatpush1.msra.mxu0 0.0
    %1932 = vmatprep.subr.mxu0 0.0
    %1933 = vmatpush1.msra.mxu0 0.0
    %1934 = vmatprep.subr.mxu0 0.0
    %1935 = vmatpush1.msra.mxu0 0.0
    %1936 = vmatprep.subr.mxu0 0.0
    %1937 = vmatpush1.msra.mxu0 0.0
    %1938 = vmatprep.subr.mxu0 0.0
    %1939 = vmatpush1.msra.mxu0 0.0
    %1940 = vmatprep.subr.mxu0 0.0
    %1941 = vmatpush1.msra.mxu0 0.0
    %1942 = vmatprep.subr.mxu0 0.0
    %1943 = vmatpush1.msra.mxu0 0.0
    %1944 = vmatprep.subr.mxu0 0.0
    %1945 = vmatpush1.msra.mxu0 0.0
    %1946 = vmatprep.mubr.f32.mxu0 0.0
    %v1947 = vand.u32 %v376, 4294901760
    %1948 = vmatmul.mubr.f32.gmra.mrb[0].mxu0 %v1947
    %v1949 = vpop.f32.mrb[0].mxu0
    %v1950 = vadd.f32 %v1841, %v1949
    %v1951 = vpop.f32.mrb[0].mxu0
    %v1952 = vadd.f32 %v1843, %v1951
    %1953 = vmatprep.mubr.f32.mxu0 0.0
    %v1954 = vand.u32 %v379, 4294901760
    %1955 = vmatmul.mubr.f32.gmra.mrb[0].mxu0 %v1954
    %v1956 = vpop.f32.mrb[0].mxu0
    %v1957 = vadd.f32 %v1848, %v1956
    %v1958 = vpop.f32.mrb[0].mxu0
    %v1959 = vadd.f32 %v1850, %v1958
    %1960 = vmatprep.mubr.f32.mxu0 0.0
    %v1961 = vand.u32 %v382, 4294901760
    %1962 = vmatmul.mubr.f32.gmra.mrb[0].mxu0 %v1961
    %v1963 = vpop.f32.mrb[0].mxu0
    %v1964 = vadd.f32 %v1855, %v1963
    %v1965 = vpop.f32.mrb[0].mxu0
    %v1966 = vadd.f32 %v1857, %v1965
    %1967 = vmatprep.mubr.f32.mxu0 0.0
    %v1968 = vand.u32 %v385, 4294901760
    %1969 = vmatmul.mubr.f32.gmra.mrb[0].mxu0 %v1968
    %v1970 = vpop.f32.mrb[0].mxu0
    %v1971 = vadd.f32 %v1862, %v1970
    %v1972 = vpop.f32.mrb[0].mxu0
    %v1973 = vadd.f32 %v1864, %v1972
    %1974 = vdwg.mxu0
    %v1975 = vand.u32 %v311, 4294901760
    %1976 = vmatprep.subr.mxu0 %v1975
    %v1977 = vand.u32 %v310, 4294901760
    %1978 = vmatpush1.msra.mxu0 %v1977
    %v1979 = vand.u32 %v315, 4294901760
    %1980 = vmatprep.subr.mxu0 %v1979
    %v1981 = vand.u32 %v314, 4294901760
    %1982 = vmatpush1.msra.mxu0 %v1981
    %v1983 = vand.u32 %v319, 4294901760
    %1984 = vmatprep.subr.mxu0 %v1983
    %v1985 = vand.u32 %v318, 4294901760
    %1986 = vmatpush1.msra.mxu0 %v1985
    %v1987 = vand.u32 %v323, 4294901760
    %1988 = vmatprep.subr.mxu0 %v1987
    %v1989 = vand.u32 %v322, 4294901760
    %1990 = vmatpush1.msra.mxu0 %v1989
    %v1991 = vand.u32 %v327, 4294901760
    %1992 = vmatprep.subr.mxu0 %v1991
    %v1993 = vand.u32 %v326, 4294901760
    %1994 = vmatpush1.msra.mxu0 %v1993
    %v1995 = vand.u32 %v331, 4294901760
    %1996 = vmatprep.subr.mxu0 %v1995
    %v1997 = vand.u32 %v330, 4294901760
    %1998 = vmatpush1.msra.mxu0 %v1997
    %v1999 = vand.u32 %v335, 4294901760
    %2000 = vmatprep.subr.mxu0 %v1999
    %v2001 = vand.u32 %v334, 4294901760
    %2002 = vmatpush1.msra.mxu0 %v2001
    %v2003 = vand.u32 %v339, 4294901760
    %2004 = vmatprep.subr.mxu0 %v2003
    %v2005 = vand.u32 %v338, 4294901760
    %2006 = vmatpush1.msra.mxu0 %v2005
    %2007 = vmatprep.subr.mxu0 0.0
    %2008 = vmatpush1.msra.mxu0 0.0
    %2009 = vmatprep.subr.mxu0 0.0
    %2010 = vmatpush1.msra.mxu0 0.0
    %2011 = vmatprep.subr.mxu0 0.0
    %2012 = vmatpush1.msra.mxu0 0.0
    %2013 = vmatprep.subr.mxu0 0.0
    %2014 = vmatpush1.msra.mxu0 0.0
    %2015 = vmatprep.subr.mxu0 0.0
    %2016 = vmatpush1.msra.mxu0 0.0
    %2017 = vmatprep.subr.mxu0 0.0
    %2018 = vmatpush1.msra.mxu0 0.0
    %2019 = vmatprep.subr.mxu0 0.0
    %2020 = vmatpush1.msra.mxu0 0.0
    %2021 = vmatprep.subr.mxu0 0.0
    %2022 = vmatpush1.msra.mxu0 0.0
    %2023 = vmatprep.subr.mxu0 0.0
    %2024 = vmatpush1.msra.mxu0 0.0
    %2025 = vmatprep.subr.mxu0 0.0
    %2026 = vmatpush1.msra.mxu0 0.0
    %2027 = vmatprep.subr.mxu0 0.0
    %2028 = vmatpush1.msra.mxu0 0.0
    %2029 = vmatprep.subr.mxu0 0.0
    %2030 = vmatpush1.msra.mxu0 0.0
    %2031 = vmatprep.subr.mxu0 0.0
    %2032 = vmatpush1.msra.mxu0 0.0
    %2033 = vmatprep.subr.mxu0 0.0
    %2034 = vmatpush1.msra.mxu0 0.0
    %2035 = vmatprep.subr.mxu0 0.0
    %2036 = vmatpush1.msra.mxu0 0.0
    %2037 = vmatprep.subr.mxu0 0.0
    %2038 = vmatpush1.msra.mxu0 0.0
    %2039 = vmatprep.subr.mxu0 0.0
    %2040 = vmatpush1.msra.mxu0 0.0
    %2041 = vmatprep.subr.mxu0 0.0
    %2042 = vmatpush1.msra.mxu0 0.0
    %2043 = vmatprep.subr.mxu0 0.0
    %2044 = vmatpush1.msra.mxu0 0.0
    %2045 = vmatprep.subr.mxu0 0.0
    %2046 = vmatpush1.msra.mxu0 0.0
    %2047 = vmatprep.subr.mxu0 0.0
    %2048 = vmatpush1.msra.mxu0 0.0
    %2049 = vmatprep.subr.mxu0 0.0
    %2050 = vmatpush1.msra.mxu0 0.0
    %2051 = vmatprep.subr.mxu0 0.0
    %2052 = vmatpush1.msra.mxu0 0.0
    %2053 = vmatprep.subr.mxu0 0.0
    %2054 = vmatpush1.msra.mxu0 0.0
    %2055 = vmatprep.mubr.f32.mxu0 0.0
    %v2056 = vand.u32 %v376, 4294901760
    %v2057 = vsub.f32 %v376, %v2056
    %v2058 = vand.u32 %v2057, 4294901760
    %v2059 = vsub.f32 %v2057, %v2058
    %v2060 = vand.u32 %v2059, 4294901760
    %2061 = vmatmul.mubr.f32.gmra.mrb[0].mxu0 %v2060
    %v2062 = vpop.f32.mrb[0].mxu0
    %v2063 = vadd.f32 0.0, %v2062
    %v2064 = vpop.f32.mrb[0].mxu0
    %v2065 = vadd.f32 0.0, %v2064
    %2066 = vmatprep.mubr.f32.mxu0 0.0
    %v2067 = vand.u32 %v379, 4294901760
    %v2068 = vsub.f32 %v379, %v2067
    %v2069 = vand.u32 %v2068, 4294901760
    %v2070 = vsub.f32 %v2068, %v2069
    %v2071 = vand.u32 %v2070, 4294901760
    %2072 = vmatmul.mubr.f32.gmra.mrb[0].mxu0 %v2071
    %v2073 = vpop.f32.mrb[0].mxu0
    %v2074 = vadd.f32 0.0, %v2073
    %v2075 = vpop.f32.mrb[0].mxu0
    %v2076 = vadd.f32 0.0, %v2075
    %2077 = vmatprep.mubr.f32.mxu0 0.0
    %v2078 = vand.u32 %v382, 4294901760
    %v2079 = vsub.f32 %v382, %v2078
    %v2080 = vand.u32 %v2079, 4294901760
    %v2081 = vsub.f32 %v2079, %v2080
    %v2082 = vand.u32 %v2081, 4294901760
    %2083 = vmatmul.mubr.f32.gmra.mrb[0].mxu0 %v2082
    %v2084 = vpop.f32.mrb[0].mxu0
    %v2085 = vadd.f32 0.0, %v2084
    %v2086 = vpop.f32.mrb[0].mxu0
    %v2087 = vadd.f32 0.0, %v2086
    %2088 = vmatprep.mubr.f32.mxu0 0.0
    %v2089 = vand.u32 %v385, 4294901760
    %v2090 = vsub.f32 %v385, %v2089
    %v2091 = vand.u32 %v2090, 4294901760
    %v2092 = vsub.f32 %v2090, %v2091
    %v2093 = vand.u32 %v2092, 4294901760
    %2094 = vmatmul.mubr.f32.gmra.mrb[0].mxu0 %v2093
    %v2095 = vpop.f32.mrb[0].mxu0
    %v2096 = vadd.f32 0.0, %v2095
    %v2097 = vpop.f32.mrb[0].mxu0
    %v2098 = vadd.f32 0.0, %v2097
    %2099 = vdwg.mxu0
    %v2100 = vand.u32 %v311, 4294901760
    %v2101 = vsub.f32 %v311, %v2100
    %v2102 = vand.u32 %v2101, 4294901760
    %v2103 = vsub.f32 %v2101, %v2102
    %v2104 = vand.u32 %v2103, 4294901760
    %2105 = vmatprep.subr.mxu0 %v2104
    %v2106 = vand.u32 %v310, 4294901760
    %v2107 = vsub.f32 %v310, %v2106
    %v2108 = vand.u32 %v2107, 4294901760
    %v2109 = vsub.f32 %v2107, %v2108
    %v2110 = vand.u32 %v2109, 4294901760
    %2111 = vmatpush1.msra.mxu0 %v2110
    %v2112 = vand.u32 %v315, 4294901760
    %v2113 = vsub.f32 %v315, %v2112
    %v2114 = vand.u32 %v2113, 4294901760
    %v2115 = vsub.f32 %v2113, %v2114
    %v2116 = vand.u32 %v2115, 4294901760
    %2117 = vmatprep.subr.mxu0 %v2116
    %v2118 = vand.u32 %v314, 4294901760
    %v2119 = vsub.f32 %v314, %v2118
    %v2120 = vand.u32 %v2119, 4294901760
    %v2121 = vsub.f32 %v2119, %v2120
    %v2122 = vand.u32 %v2121, 4294901760
    %2123 = vmatpush1.msra.mxu0 %v2122
    %v2124 = vand.u32 %v319, 4294901760
    %v2125 = vsub.f32 %v319, %v2124
    %v2126 = vand.u32 %v2125, 4294901760
    %v2127 = vsub.f32 %v2125, %v2126
    %v2128 = vand.u32 %v2127, 4294901760
    %2129 = vmatprep.subr.mxu0 %v2128
    %v2130 = vand.u32 %v318, 4294901760
    %v2131 = vsub.f32 %v318, %v2130
    %v2132 = vand.u32 %v2131, 4294901760
    %v2133 = vsub.f32 %v2131, %v2132
    %v2134 = vand.u32 %v2133, 4294901760
    %2135 = vmatpush1.msra.mxu0 %v2134
    %v2136 = vand.u32 %v323, 4294901760
    %v2137 = vsub.f32 %v323, %v2136
    %v2138 = vand.u32 %v2137, 4294901760
    %v2139 = vsub.f32 %v2137, %v2138
    %v2140 = vand.u32 %v2139, 4294901760
    %2141 = vmatprep.subr.mxu0 %v2140
    %v2142 = vand.u32 %v322, 4294901760
    %v2143 = vsub.f32 %v322, %v2142
    %v2144 = vand.u32 %v2143, 4294901760
    %v2145 = vsub.f32 %v2143, %v2144
    %v2146 = vand.u32 %v2145, 4294901760
    %2147 = vmatpush1.msra.mxu0 %v2146
    %v2148 = vand.u32 %v327, 4294901760
    %v2149 = vsub.f32 %v327, %v2148
    %v2150 = vand.u32 %v2149, 4294901760
    %v2151 = vsub.f32 %v2149, %v2150
    %v2152 = vand.u32 %v2151, 4294901760
    %2153 = vmatprep.subr.mxu0 %v2152
    %v2154 = vand.u32 %v326, 4294901760
    %v2155 = vsub.f32 %v326, %v2154
    %v2156 = vand.u32 %v2155, 4294901760
    %v2157 = vsub.f32 %v2155, %v2156
    %v2158 = vand.u32 %v2157, 4294901760
    %2159 = vmatpush1.msra.mxu0 %v2158
    %v2160 = vand.u32 %v331, 4294901760
    %v2161 = vsub.f32 %v331, %v2160
    %v2162 = vand.u32 %v2161, 4294901760
    %v2163 = vsub.f32 %v2161, %v2162
    %v2164 = vand.u32 %v2163, 4294901760
    %2165 = vmatprep.subr.mxu0 %v2164
    %v2166 = vand.u32 %v330, 4294901760
    %v2167 = vsub.f32 %v330, %v2166
    %v2168 = vand.u32 %v2167, 4294901760
    %v2169 = vsub.f32 %v2167, %v2168
    %v2170 = vand.u32 %v2169, 4294901760
    %2171 = vmatpush1.msra.mxu0 %v2170
    %v2172 = vand.u32 %v335, 4294901760
    %v2173 = vsub.f32 %v335, %v2172
    %v2174 = vand.u32 %v2173, 4294901760
    %v2175 = vsub.f32 %v2173, %v2174
    %v2176 = vand.u32 %v2175, 4294901760
    %2177 = vmatprep.subr.mxu0 %v2176
    %v2178 = vand.u32 %v334, 4294901760
    %v2179 = vsub.f32 %v334, %v2178
    %v2180 = vand.u32 %v2179, 4294901760
    %v2181 = vsub.f32 %v2179, %v2180
    %v2182 = vand.u32 %v2181, 4294901760
    %2183 = vmatpush1.msra.mxu0 %v2182
    %v2184 = vand.u32 %v339, 4294901760
    %v2185 = vsub.f32 %v339, %v2184
    %v2186 = vand.u32 %v2185, 4294901760
    %v2187 = vsub.f32 %v2185, %v2186
    %v2188 = vand.u32 %v2187, 4294901760
    %2189 = vmatprep.subr.mxu0 %v2188
    %v2190 = vand.u32 %v338, 4294901760
    %v2191 = vsub.f32 %v338, %v2190
    %v2192 = vand.u32 %v2191, 4294901760
    %v2193 = vsub.f32 %v2191, %v2192
    %v2194 = vand.u32 %v2193, 4294901760
    %2195 = vmatpush1.msra.mxu0 %v2194
    %2196 = vmatprep.subr.mxu0 0.0
    %2197 = vmatpush1.msra.mxu0 0.0
    %2198 = vmatprep.subr.mxu0 0.0
    %2199 = vmatpush1.msra.mxu0 0.0
    %2200 = vmatprep.subr.mxu0 0.0
    %2201 = vmatpush1.msra.mxu0 0.0
    %2202 = vmatprep.subr.mxu0 0.0
    %2203 = vmatpush1.msra.mxu0 0.0
    %2204 = vmatprep.subr.mxu0 0.0
    %2205 = vmatpush1.msra.mxu0 0.0
    %2206 = vmatprep.subr.mxu0 0.0
    %2207 = vmatpush1.msra.mxu0 0.0
    %2208 = vmatprep.subr.mxu0 0.0
    %2209 = vmatpush1.msra.mxu0 0.0
    %2210 = vmatprep.subr.mxu0 0.0
    %2211 = vmatpush1.msra.mxu0 0.0
    %2212 = vmatprep.subr.mxu0 0.0
    %2213 = vmatpush1.msra.mxu0 0.0
    %2214 = vmatprep.subr.mxu0 0.0
    %2215 = vmatpush1.msra.mxu0 0.0
    %2216 = vmatprep.subr.mxu0 0.0
    %2217 = vmatpush1.msra.mxu0 0.0
    %2218 = vmatprep.subr.mxu0 0.0
    %2219 = vmatpush1.msra.mxu0 0.0
    %2220 = vmatprep.subr.mxu0 0.0
    %2221 = vmatpush1.msra.mxu0 0.0
    %2222 = vmatprep.subr.mxu0 0.0
    %2223 = vmatpush1.msra.mxu0 0.0
    %2224 = vmatprep.subr.mxu0 0.0
    %2225 = vmatpush1.msra.mxu0 0.0
    %2226 = vmatprep.subr.mxu0 0.0
    %2227 = vmatpush1.msra.mxu0 0.0
    %2228 = vmatprep.subr.mxu0 0.0
    %2229 = vmatpush1.msra.mxu0 0.0
    %2230 = vmatprep.subr.mxu0 0.0
    %2231 = vmatpush1.msra.mxu0 0.0
    %2232 = vmatprep.subr.mxu0 0.0
    %2233 = vmatpush1.msra.mxu0 0.0
    %2234 = vmatprep.subr.mxu0 0.0
    %2235 = vmatpush1.msra.mxu0 0.0
    %2236 = vmatprep.subr.mxu0 0.0
    %2237 = vmatpush1.msra.mxu0 0.0
    %2238 = vmatprep.subr.mxu0 0.0
    %2239 = vmatpush1.msra.mxu0 0.0
    %2240 = vmatprep.subr.mxu0 0.0
    %2241 = vmatpush1.msra.mxu0 0.0
    %2242 = vmatprep.subr.mxu0 0.0
    %2243 = vmatpush1.msra.mxu0 0.0
    %2244 = vmatprep.mubr.f32.mxu0 0.0
    %v2245 = vand.u32 %v376, 4294901760
    %2246 = vmatmul.mubr.f32.gmra.mrb[0].mxu0 %v2245
    %v2247 = vpop.f32.mrb[0].mxu0
    %v2248 = vadd.f32 %v2063, %v2247
    %v2249 = vpop.f32.mrb[0].mxu0
    %v2250 = vadd.f32 %v2065, %v2249
    %2251 = vmatprep.mubr.f32.mxu0 0.0
    %v2252 = vand.u32 %v379, 4294901760
    %2253 = vmatmul.mubr.f32.gmra.mrb[0].mxu0 %v2252
    %v2254 = vpop.f32.mrb[0].mxu0
    %v2255 = vadd.f32 %v2074, %v2254
    %v2256 = vpop.f32.mrb[0].mxu0
    %v2257 = vadd.f32 %v2076, %v2256
    %2258 = vmatprep.mubr.f32.mxu0 0.0
    %v2259 = vand.u32 %v382, 4294901760
    %2260 = vmatmul.mubr.f32.gmra.mrb[0].mxu0 %v2259
    %v2261 = vpop.f32.mrb[0].mxu0
    %v2262 = vadd.f32 %v2085, %v2261
    %v2263 = vpop.f32.mrb[0].mxu0
    %v2264 = vadd.f32 %v2087, %v2263
    %2265 = vmatprep.mubr.f32.mxu0 0.0
    %v2266 = vand.u32 %v385, 4294901760
    %2267 = vmatmul.mubr.f32.gmra.mrb[0].mxu0 %v2266
    %v2268 = vpop.f32.mrb[0].mxu0
    %v2269 = vadd.f32 %v2096, %v2268
    %v2270 = vpop.f32.mrb[0].mxu0
    %v2271 = vadd.f32 %v2098, %v2270
    %2272 = vdwg.mxu0
    %v2273 = vand.u32 %v311, 4294901760
    %v2274 = vsub.f32 %v311, %v2273
    %2275 = vmatprep.subr.mxu0 %v2274
    %v2276 = vand.u32 %v310, 4294901760
    %v2277 = vsub.f32 %v310, %v2276
    %2278 = vmatpush1.msra.mxu0 %v2277
    %v2279 = vand.u32 %v315, 4294901760
    %v2280 = vsub.f32 %v315, %v2279
    %2281 = vmatprep.subr.mxu0 %v2280
    %v2282 = vand.u32 %v314, 4294901760
    %v2283 = vsub.f32 %v314, %v2282
    %2284 = vmatpush1.msra.mxu0 %v2283
    %v2285 = vand.u32 %v319, 4294901760
    %v2286 = vsub.f32 %v319, %v2285
    %2287 = vmatprep.subr.mxu0 %v2286
    %v2288 = vand.u32 %v318, 4294901760
    %v2289 = vsub.f32 %v318, %v2288
    %2290 = vmatpush1.msra.mxu0 %v2289
    %v2291 = vand.u32 %v323, 4294901760
    %v2292 = vsub.f32 %v323, %v2291
    %2293 = vmatprep.subr.mxu0 %v2292
    %v2294 = vand.u32 %v322, 4294901760
    %v2295 = vsub.f32 %v322, %v2294
    %2296 = vmatpush1.msra.mxu0 %v2295
    %v2297 = vand.u32 %v327, 4294901760
    %v2298 = vsub.f32 %v327, %v2297
    %2299 = vmatprep.subr.mxu0 %v2298
    %v2300 = vand.u32 %v326, 4294901760
    %v2301 = vsub.f32 %v326, %v2300
    %2302 = vmatpush1.msra.mxu0 %v2301
    %v2303 = vand.u32 %v331, 4294901760
    %v2304 = vsub.f32 %v331, %v2303
    %2305 = vmatprep.subr.mxu0 %v2304
    %v2306 = vand.u32 %v330, 4294901760
    %v2307 = vsub.f32 %v330, %v2306
    %2308 = vmatpush1.msra.mxu0 %v2307
    %v2309 = vand.u32 %v335, 4294901760
    %v2310 = vsub.f32 %v335, %v2309
    %2311 = vmatprep.subr.mxu0 %v2310
    %v2312 = vand.u32 %v334, 4294901760
    %v2313 = vsub.f32 %v334, %v2312
    %2314 = vmatpush1.msra.mxu0 %v2313
    %v2315 = vand.u32 %v339, 4294901760
    %v2316 = vsub.f32 %v339, %v2315
    %2317 = vmatprep.subr.mxu0 %v2316
    %v2318 = vand.u32 %v338, 4294901760
    %v2319 = vsub.f32 %v338, %v2318
    %2320 = vmatpush1.msra.mxu0 %v2319
    %2321 = vmatprep.subr.mxu0 0.0
    %2322 = vmatpush1.msra.mxu0 0.0
    %2323 = vmatprep.subr.mxu0 0.0
    %2324 = vmatpush1.msra.mxu0 0.0
    %2325 = vmatprep.subr.mxu0 0.0
    %2326 = vmatpush1.msra.mxu0 0.0
    %2327 = vmatprep.subr.mxu0 0.0
    %2328 = vmatpush1.msra.mxu0 0.0
    %2329 = vmatprep.subr.mxu0 0.0
    %2330 = vmatpush1.msra.mxu0 0.0
    %2331 = vmatprep.subr.mxu0 0.0
    %2332 = vmatpush1.msra.mxu0 0.0
    %2333 = vmatprep.subr.mxu0 0.0
    %2334 = vmatpush1.msra.mxu0 0.0
    %2335 = vmatprep.subr.mxu0 0.0
    %2336 = vmatpush1.msra.mxu0 0.0
    %2337 = vmatprep.subr.mxu0 0.0
    %2338 = vmatpush1.msra.mxu0 0.0
    %2339 = vmatprep.subr.mxu0 0.0
    %2340 = vmatpush1.msra.mxu0 0.0
    %2341 = vmatprep.subr.mxu0 0.0
    %2342 = vmatpush1.msra.mxu0 0.0
    %2343 = vmatprep.subr.mxu0 0.0
    %2344 = vmatpush1.msra.mxu0 0.0
    %2345 = vmatprep.subr.mxu0 0.0
    %2346 = vmatpush1.msra.mxu0 0.0
    %2347 = vmatprep.subr.mxu0 0.0
    %2348 = vmatpush1.msra.mxu0 0.0
    %2349 = vmatprep.subr.mxu0 0.0
    %2350 = vmatpush1.msra.mxu0 0.0
    %2351 = vmatprep.subr.mxu0 0.0
    %2352 = vmatpush1.msra.mxu0 0.0
    %2353 = vmatprep.subr.mxu0 0.0
    %2354 = vmatpush1.msra.mxu0 0.0
    %2355 = vmatprep.subr.mxu0 0.0
    %2356 = vmatpush1.msra.mxu0 0.0
    %2357 = vmatprep.subr.mxu0 0.0
    %2358 = vmatpush1.msra.mxu0 0.0
    %2359 = vmatprep.subr.mxu0 0.0
    %2360 = vmatpush1.msra.mxu0 0.0
    %2361 = vmatprep.subr.mxu0 0.0
    %2362 = vmatpush1.msra.mxu0 0.0
    %2363 = vmatprep.subr.mxu0 0.0
    %2364 = vmatpush1.msra.mxu0 0.0
    %2365 = vmatprep.subr.mxu0 0.0
    %2366 = vmatpush1.msra.mxu0 0.0
    %2367 = vmatprep.subr.mxu0 0.0
    %2368 = vmatpush1.msra.mxu0 0.0
    %2369 = vmatprep.mubr.f32.mxu0 0.0
    %v2370 = vand.u32 %v376, 4294901760
    %v2371 = vsub.f32 %v376, %v2370
    %2372 = vmatmul.mubr.f32.gmra.mrb[0].mxu0 %v2371
    %v2373 = vpop.f32.mrb[0].mxu0
    %v2374 = vadd.f32 %v2248, %v2373
    %v2375 = vpop.f32.mrb[0].mxu0
    %v2376 = vadd.f32 %v2250, %v2375
    %2377 = vmatprep.mubr.f32.mxu0 0.0
    %v2378 = vand.u32 %v379, 4294901760
    %v2379 = vsub.f32 %v379, %v2378
    %2380 = vmatmul.mubr.f32.gmra.mrb[0].mxu0 %v2379
    %v2381 = vpop.f32.mrb[0].mxu0
    %v2382 = vadd.f32 %v2255, %v2381
    %v2383 = vpop.f32.mrb[0].mxu0
    %v2384 = vadd.f32 %v2257, %v2383
    %2385 = vmatprep.mubr.f32.mxu0 0.0
    %v2386 = vand.u32 %v382, 4294901760
    %v2387 = vsub.f32 %v382, %v2386
    %2388 = vmatmul.mubr.f32.gmra.mrb[0].mxu0 %v2387
    %v2389 = vpop.f32.mrb[0].mxu0
    %v2390 = vadd.f32 %v2262, %v2389
    %v2391 = vpop.f32.mrb[0].mxu0
    %v2392 = vadd.f32 %v2264, %v2391
    %2393 = vmatprep.mubr.f32.mxu0 0.0
    %v2394 = vand.u32 %v385, 4294901760
    %v2395 = vsub.f32 %v385, %v2394
    %2396 = vmatmul.mubr.f32.gmra.mrb[0].mxu0 %v2395
    %v2397 = vpop.f32.mrb[0].mxu0
    %v2398 = vadd.f32 %v2269, %v2397
    %v2399 = vpop.f32.mrb[0].mxu0
    %v2400 = vadd.f32 %v2271, %v2399
    %2401 = vdwg.mxu0
    %v2402 = vand.u32 %v311, 4294901760
    %2403 = vmatprep.subr.mxu0 %v2402
    %v2404 = vand.u32 %v310, 4294901760
    %2405 = vmatpush1.msra.mxu0 %v2404
    %v2406 = vand.u32 %v315, 4294901760
    %2407 = vmatprep.subr.mxu0 %v2406
    %v2408 = vand.u32 %v314, 4294901760
    %2409 = vmatpush1.msra.mxu0 %v2408
    %v2410 = vand.u32 %v319, 4294901760
    %2411 = vmatprep.subr.mxu0 %v2410
    %v2412 = vand.u32 %v318, 4294901760
    %2413 = vmatpush1.msra.mxu0 %v2412
    %v2414 = vand.u32 %v323, 4294901760
    %2415 = vmatprep.subr.mxu0 %v2414
    %v2416 = vand.u32 %v322, 4294901760
    %2417 = vmatpush1.msra.mxu0 %v2416
    %v2418 = vand.u32 %v327, 4294901760
    %2419 = vmatprep.subr.mxu0 %v2418
    %v2420 = vand.u32 %v326, 4294901760
    %2421 = vmatpush1.msra.mxu0 %v2420
    %v2422 = vand.u32 %v331, 4294901760
    %2423 = vmatprep.subr.mxu0 %v2422
    %v2424 = vand.u32 %v330, 4294901760
    %2425 = vmatpush1.msra.mxu0 %v2424
    %v2426 = vand.u32 %v335, 4294901760
    %2427 = vmatprep.subr.mxu0 %v2426
    %v2428 = vand.u32 %v334, 4294901760
    %2429 = vmatpush1.msra.mxu0 %v2428
    %v2430 = vand.u32 %v339, 4294901760
    %2431 = vmatprep.subr.mxu0 %v2430
    %v2432 = vand.u32 %v338, 4294901760
    %2433 = vmatpush1.msra.mxu0 %v2432
    %2434 = vmatprep.subr.mxu0 0.0
    %2435 = vmatpush1.msra.mxu0 0.0
    %2436 = vmatprep.subr.mxu0 0.0
    %2437 = vmatpush1.msra.mxu0 0.0
    %2438 = vmatprep.subr.mxu0 0.0
    %2439 = vmatpush1.msra.mxu0 0.0
    %2440 = vmatprep.subr.mxu0 0.0
    %2441 = vmatpush1.msra.mxu0 0.0
    %2442 = vmatprep.subr.mxu0 0.0
    %2443 = vmatpush1.msra.mxu0 0.0
    %2444 = vmatprep.subr.mxu0 0.0
    %2445 = vmatpush1.msra.mxu0 0.0
    %2446 = vmatprep.subr.mxu0 0.0
    %2447 = vmatpush1.msra.mxu0 0.0
    %2448 = vmatprep.subr.mxu0 0.0
    %2449 = vmatpush1.msra.mxu0 0.0
    %2450 = vmatprep.subr.mxu0 0.0
    %2451 = vmatpush1.msra.mxu0 0.0
    %2452 = vmatprep.subr.mxu0 0.0
    %2453 = vmatpush1.msra.mxu0 0.0
    %2454 = vmatprep.subr.mxu0 0.0
    %2455 = vmatpush1.msra.mxu0 0.0
    %2456 = vmatprep.subr.mxu0 0.0
    %2457 = vmatpush1.msra.mxu0 0.0
    %2458 = vmatprep.subr.mxu0 0.0
    %2459 = vmatpush1.msra.mxu0 0.0
    %2460 = vmatprep.subr.mxu0 0.0
    %2461 = vmatpush1.msra.mxu0 0.0
    %2462 = vmatprep.subr.mxu0 0.0
    %2463 = vmatpush1.msra.mxu0 0.0
    %2464 = vmatprep.subr.mxu0 0.0
    %2465 = vmatpush1.msra.mxu0 0.0
    %2466 = vmatprep.subr.mxu0 0.0
    %2467 = vmatpush1.msra.mxu0 0.0
    %2468 = vmatprep.subr.mxu0 0.0
    %2469 = vmatpush1.msra.mxu0 0.0
    %2470 = vmatprep.subr.mxu0 0.0
    %2471 = vmatpush1.msra.mxu0 0.0
    %2472 = vmatprep.subr.mxu0 0.0
    %2473 = vmatpush1.msra.mxu0 0.0
    %2474 = vmatprep.subr.mxu0 0.0
    %2475 = vmatpush1.msra.mxu0 0.0
    %2476 = vmatprep.subr.mxu0 0.0
    %2477 = vmatpush1.msra.mxu0 0.0
    %2478 = vmatprep.subr.mxu0 0.0
    %2479 = vmatpush1.msra.mxu0 0.0
    %2480 = vmatprep.subr.mxu0 0.0
    %2481 = vmatpush1.msra.mxu0 0.0
    %2482 = vmatprep.mubr.f32.mxu0 0.0
    %v2483 = vand.u32 %v376, 4294901760
    %v2484 = vsub.f32 %v376, %v2483
    %v2485 = vand.u32 %v2484, 4294901760
    %2486 = vmatmul.mubr.f32.gmra.mrb[0].mxu0 %v2485
    %v2487 = vpop.f32.mrb[0].mxu0
    %v2488 = vadd.f32 %v2374, %v2487
    %v2489 = vpop.f32.mrb[0].mxu0
    %v2490 = vadd.f32 %v2376, %v2489
    %2491 = vmatprep.mubr.f32.mxu0 0.0
    %v2492 = vand.u32 %v379, 4294901760
    %v2493 = vsub.f32 %v379, %v2492
    %v2494 = vand.u32 %v2493, 4294901760
    %2495 = vmatmul.mubr.f32.gmra.mrb[0].mxu0 %v2494
    %v2496 = vpop.f32.mrb[0].mxu0
    %v2497 = vadd.f32 %v2382, %v2496
    %v2498 = vpop.f32.mrb[0].mxu0
    %v2499 = vadd.f32 %v2384, %v2498
    %2500 = vmatprep.mubr.f32.mxu0 0.0
    %v2501 = vand.u32 %v382, 4294901760
    %v2502 = vsub.f32 %v382, %v2501
    %v2503 = vand.u32 %v2502, 4294901760
    %2504 = vmatmul.mubr.f32.gmra.mrb[0].mxu0 %v2503
    %v2505 = vpop.f32.mrb[0].mxu0
    %v2506 = vadd.f32 %v2390, %v2505
    %v2507 = vpop.f32.mrb[0].mxu0
    %v2508 = vadd.f32 %v2392, %v2507
    %2509 = vmatprep.mubr.f32.mxu0 0.0
    %v2510 = vand.u32 %v385, 4294901760
    %v2511 = vsub.f32 %v385, %v2510
    %v2512 = vand.u32 %v2511, 4294901760
    %2513 = vmatmul.mubr.f32.gmra.mrb[0].mxu0 %v2512
    %v2514 = vpop.f32.mrb[0].mxu0
    %v2515 = vadd.f32 %v2398, %v2514
    %v2516 = vpop.f32.mrb[0].mxu0
    %v2517 = vadd.f32 %v2400, %v2516
    %2518 = vdwg.mxu0
    %v2519 = vand.u32 %v311, 4294901760
    %v2520 = vsub.f32 %v311, %v2519
    %v2521 = vand.u32 %v2520, 4294901760
    %2522 = vmatprep.subr.mxu0 %v2521
    %v2523 = vand.u32 %v310, 4294901760
    %v2524 = vsub.f32 %v310, %v2523
    %v2525 = vand.u32 %v2524, 4294901760
    %2526 = vmatpush1.msra.mxu0 %v2525
    %v2527 = vand.u32 %v315, 4294901760
    %v2528 = vsub.f32 %v315, %v2527
    %v2529 = vand.u32 %v2528, 4294901760
    %2530 = vmatprep.subr.mxu0 %v2529
    %v2531 = vand.u32 %v314, 4294901760
    %v2532 = vsub.f32 %v314, %v2531
    %v2533 = vand.u32 %v2532, 4294901760
    %2534 = vmatpush1.msra.mxu0 %v2533
    %v2535 = vand.u32 %v319, 4294901760
    %v2536 = vsub.f32 %v319, %v2535
    %v2537 = vand.u32 %v2536, 4294901760
    %2538 = vmatprep.subr.mxu0 %v2537
    %v2539 = vand.u32 %v318, 4294901760
    %v2540 = vsub.f32 %v318, %v2539
    %v2541 = vand.u32 %v2540, 4294901760
    %2542 = vmatpush1.msra.mxu0 %v2541
    %v2543 = vand.u32 %v323, 4294901760
    %v2544 = vsub.f32 %v323, %v2543
    %v2545 = vand.u32 %v2544, 4294901760
    %2546 = vmatprep.subr.mxu0 %v2545
    %v2547 = vand.u32 %v322, 4294901760
    %v2548 = vsub.f32 %v322, %v2547
    %v2549 = vand.u32 %v2548, 4294901760
    %2550 = vmatpush1.msra.mxu0 %v2549
    %v2551 = vand.u32 %v327, 4294901760
    %v2552 = vsub.f32 %v327, %v2551
    %v2553 = vand.u32 %v2552, 4294901760
    %2554 = vmatprep.subr.mxu0 %v2553
    %v2555 = vand.u32 %v326, 4294901760
    %v2556 = vsub.f32 %v326, %v2555
    %v2557 = vand.u32 %v2556, 4294901760
    %2558 = vmatpush1.msra.mxu0 %v2557
    %v2559 = vand.u32 %v331, 4294901760
    %v2560 = vsub.f32 %v331, %v2559
    %v2561 = vand.u32 %v2560, 4294901760
    %2562 = vmatprep.subr.mxu0 %v2561
    %v2563 = vand.u32 %v330, 4294901760
    %v2564 = vsub.f32 %v330, %v2563
    %v2565 = vand.u32 %v2564, 4294901760
    %2566 = vmatpush1.msra.mxu0 %v2565
    %v2567 = vand.u32 %v335, 4294901760
    %v2568 = vsub.f32 %v335, %v2567
    %v2569 = vand.u32 %v2568, 4294901760
    %2570 = vmatprep.subr.mxu0 %v2569
    %v2571 = vand.u32 %v334, 4294901760
    %v2572 = vsub.f32 %v334, %v2571
    %v2573 = vand.u32 %v2572, 4294901760
    %2574 = vmatpush1.msra.mxu0 %v2573
    %v2575 = vand.u32 %v339, 4294901760
    %v2576 = vsub.f32 %v339, %v2575
    %v2577 = vand.u32 %v2576, 4294901760
    %2578 = vmatprep.subr.mxu0 %v2577
    %v2579 = vand.u32 %v338, 4294901760
    %v2580 = vsub.f32 %v338, %v2579
    %v2581 = vand.u32 %v2580, 4294901760
    %2582 = vmatpush1.msra.mxu0 %v2581
    %2583 = vmatprep.subr.mxu0 0.0
    %2584 = vmatpush1.msra.mxu0 0.0
    %2585 = vmatprep.subr.mxu0 0.0
    %2586 = vmatpush1.msra.mxu0 0.0
    %2587 = vmatprep.subr.mxu0 0.0
    %2588 = vmatpush1.msra.mxu0 0.0
    %2589 = vmatprep.subr.mxu0 0.0
    %2590 = vmatpush1.msra.mxu0 0.0
    %2591 = vmatprep.subr.mxu0 0.0
    %2592 = vmatpush1.msra.mxu0 0.0
    %2593 = vmatprep.subr.mxu0 0.0
    %2594 = vmatpush1.msra.mxu0 0.0
    %2595 = vmatprep.subr.mxu0 0.0
    %2596 = vmatpush1.msra.mxu0 0.0
    %2597 = vmatprep.subr.mxu0 0.0
    %2598 = vmatpush1.msra.mxu0 0.0
    %2599 = vmatprep.subr.mxu0 0.0
    %2600 = vmatpush1.msra.mxu0 0.0
    %2601 = vmatprep.subr.mxu0 0.0
    %2602 = vmatpush1.msra.mxu0 0.0
    %2603 = vmatprep.subr.mxu0 0.0
    %2604 = vmatpush1.msra.mxu0 0.0
    %2605 = vmatprep.subr.mxu0 0.0
    %2606 = vmatpush1.msra.mxu0 0.0
    %2607 = vmatprep.subr.mxu0 0.0
    %2608 = vmatpush1.msra.mxu0 0.0
    %2609 = vmatprep.subr.mxu0 0.0
    %2610 = vmatpush1.msra.mxu0 0.0
    %2611 = vmatprep.subr.mxu0 0.0
    %2612 = vmatpush1.msra.mxu0 0.0
    %2613 = vmatprep.subr.mxu0 0.0
    %2614 = vmatpush1.msra.mxu0 0.0
    %2615 = vmatprep.subr.mxu0 0.0
    %2616 = vmatpush1.msra.mxu0 0.0
    %2617 = vmatprep.subr.mxu0 0.0
    %2618 = vmatpush1.msra.mxu0 0.0
    %2619 = vmatprep.subr.mxu0 0.0
    %2620 = vmatpush1.msra.mxu0 0.0
    %2621 = vmatprep.subr.mxu0 0.0
    %2622 = vmatpush1.msra.mxu0 0.0
    %2623 = vmatprep.subr.mxu0 0.0
    %2624 = vmatpush1.msra.mxu0 0.0
    %2625 = vmatprep.subr.mxu0 0.0
    %2626 = vmatpush1.msra.mxu0 0.0
    %2627 = vmatprep.subr.mxu0 0.0
    %2628 = vmatpush1.msra.mxu0 0.0
    %2629 = vmatprep.subr.mxu0 0.0
    %2630 = vmatpush1.msra.mxu0 0.0
    %2631 = vmatprep.mubr.f32.mxu0 0.0
    %v2632 = vand.u32 %v376, 4294901760
    %2633 = vmatmul.mubr.f32.gmra.mrb[0].mxu0 %v2632
    %v2634 = vpop.f32.mrb[0].mxu0
    %v2635 = vadd.f32 %v2488, %v2634
    %v2636 = vpop.f32.mrb[0].mxu0
    %v2637 = vadd.f32 %v2490, %v2636
    %2638 = vmatprep.mubr.f32.mxu0 0.0
    %v2639 = vand.u32 %v379, 4294901760
    %2640 = vmatmul.mubr.f32.gmra.mrb[0].mxu0 %v2639
    %v2641 = vpop.f32.mrb[0].mxu0
    %v2642 = vadd.f32 %v2497, %v2641
    %v2643 = vpop.f32.mrb[0].mxu0
    %v2644 = vadd.f32 %v2499, %v2643
    %2645 = vmatprep.mubr.f32.mxu0 0.0
    %v2646 = vand.u32 %v382, 4294901760
    %2647 = vmatmul.mubr.f32.gmra.mrb[0].mxu0 %v2646
    %v2648 = vpop.f32.mrb[0].mxu0
    %v2649 = vadd.f32 %v2506, %v2648
    %v2650 = vpop.f32.mrb[0].mxu0
    %v2651 = vadd.f32 %v2508, %v2650
    %2652 = vmatprep.mubr.f32.mxu0 0.0
    %v2653 = vand.u32 %v385, 4294901760
    %2654 = vmatmul.mubr.f32.gmra.mrb[0].mxu0 %v2653
    %v2655 = vpop.f32.mrb[0].mxu0
    %v2656 = vadd.f32 %v2515, %v2655
    %v2657 = vpop.f32.mrb[0].mxu0
    %v2658 = vadd.f32 %v2517, %v2657
    %2659 = vdwg.mxu0
    %v2660 = vand.u32 %v311, 4294901760
    %2661 = vmatprep.subr.mxu0 %v2660
    %v2662 = vand.u32 %v310, 4294901760
    %2663 = vmatpush1.msra.mxu0 %v2662
    %v2664 = vand.u32 %v315, 4294901760
    %2665 = vmatprep.subr.mxu0 %v2664
    %v2666 = vand.u32 %v314, 4294901760
    %2667 = vmatpush1.msra.mxu0 %v2666
    %v2668 = vand.u32 %v319, 4294901760
    %2669 = vmatprep.subr.mxu0 %v2668
    %v2670 = vand.u32 %v318, 4294901760
    %2671 = vmatpush1.msra.mxu0 %v2670
    %v2672 = vand.u32 %v323, 4294901760
    %2673 = vmatprep.subr.mxu0 %v2672
    %v2674 = vand.u32 %v322, 4294901760
    %2675 = vmatpush1.msra.mxu0 %v2674
    %v2676 = vand.u32 %v327, 4294901760
    %2677 = vmatprep.subr.mxu0 %v2676
    %v2678 = vand.u32 %v326, 4294901760
    %2679 = vmatpush1.msra.mxu0 %v2678
    %v2680 = vand.u32 %v331, 4294901760
    %2681 = vmatprep.subr.mxu0 %v2680
    %v2682 = vand.u32 %v330, 4294901760
    %2683 = vmatpush1.msra.mxu0 %v2682
    %v2684 = vand.u32 %v335, 4294901760
    %2685 = vmatprep.subr.mxu0 %v2684
    %v2686 = vand.u32 %v334, 4294901760
    %2687 = vmatpush1.msra.mxu0 %v2686
    %v2688 = vand.u32 %v339, 4294901760
    %2689 = vmatprep.subr.mxu0 %v2688
    %v2690 = vand.u32 %v338, 4294901760
    %2691 = vmatpush1.msra.mxu0 %v2690
    %2692 = vmatprep.subr.mxu0 0.0
    %2693 = vmatpush1.msra.mxu0 0.0
    %2694 = vmatprep.subr.mxu0 0.0
    %2695 = vmatpush1.msra.mxu0 0.0
    %2696 = vmatprep.subr.mxu0 0.0
    %2697 = vmatpush1.msra.mxu0 0.0
    %2698 = vmatprep.subr.mxu0 0.0
    %2699 = vmatpush1.msra.mxu0 0.0
    %2700 = vmatprep.subr.mxu0 0.0
    %2701 = vmatpush1.msra.mxu0 0.0
    %2702 = vmatprep.subr.mxu0 0.0
    %2703 = vmatpush1.msra.mxu0 0.0
    %2704 = vmatprep.subr.mxu0 0.0
    %2705 = vmatpush1.msra.mxu0 0.0
    %2706 = vmatprep.subr.mxu0 0.0
    %2707 = vmatpush1.msra.mxu0 0.0
    %2708 = vmatprep.subr.mxu0 0.0
    %2709 = vmatpush1.msra.mxu0 0.0
    %2710 = vmatprep.subr.mxu0 0.0
    %2711 = vmatpush1.msra.mxu0 0.0
    %2712 = vmatprep.subr.mxu0 0.0
    %2713 = vmatpush1.msra.mxu0 0.0
    %2714 = vmatprep.subr.mxu0 0.0
    %2715 = vmatpush1.msra.mxu0 0.0
    %2716 = vmatprep.subr.mxu0 0.0
    %2717 = vmatpush1.msra.mxu0 0.0
    %2718 = vmatprep.subr.mxu0 0.0
    %2719 = vmatpush1.msra.mxu0 0.0
    %2720 = vmatprep.subr.mxu0 0.0
    %2721 = vmatpush1.msra.mxu0 0.0
    %2722 = vmatprep.subr.mxu0 0.0
    %2723 = vmatpush1.msra.mxu0 0.0
    %2724 = vmatprep.subr.mxu0 0.0
    %2725 = vmatpush1.msra.mxu0 0.0
    %2726 = vmatprep.subr.mxu0 0.0
    %2727 = vmatpush1.msra.mxu0 0.0
    %2728 = vmatprep.subr.mxu0 0.0
    %2729 = vmatpush1.msra.mxu0 0.0
    %2730 = vmatprep.subr.mxu0 0.0
    %2731 = vmatpush1.msra.mxu0 0.0
    %2732 = vmatprep.subr.mxu0 0.0
    %2733 = vmatpush1.msra.mxu0 0.0
    %2734 = vmatprep.subr.mxu0 0.0
    %2735 = vmatpush1.msra.mxu0 0.0
    %2736 = vmatprep.subr.mxu0 0.0
    %2737 = vmatpush1.msra.mxu0 0.0
    %2738 = vmatprep.subr.mxu0 0.0
    %2739 = vmatpush1.msra.mxu0 0.0
    %2740 = vmatprep.mubr.f32.mxu0 0.0
    %v2741 = vand.u32 %v376, 4294901760
    %2742 = vmatmul.mubr.f32.gmra.mrb[0].mxu0 %v2741
    %v2743 = vpop.f32.mrb[0].mxu0
    %v2744 = vadd.f32 %v2635, %v2743
    %v2745 = vpop.f32.mrb[0].mxu0
    %v2746 = vadd.f32 %v2637, %v2745
    %2747 = vmatprep.mubr.f32.mxu0 0.0
    %v2748 = vand.u32 %v379, 4294901760
    %2749 = vmatmul.mubr.f32.gmra.mrb[0].mxu0 %v2748
    %v2750 = vpop.f32.mrb[0].mxu0
    %v2751 = vadd.f32 %v2642, %v2750
    %v2752 = vpop.f32.mrb[0].mxu0
    %v2753 = vadd.f32 %v2644, %v2752
    %2754 = vmatprep.mubr.f32.mxu0 0.0
    %v2755 = vand.u32 %v382, 4294901760
    %2756 = vmatmul.mubr.f32.gmra.mrb[0].mxu0 %v2755
    %v2757 = vpop.f32.mrb[0].mxu0
    %v2758 = vadd.f32 %v2649, %v2757
    %v2759 = vpop.f32.mrb[0].mxu0
    %v2760 = vadd.f32 %v2651, %v2759
    %2761 = vmatprep.mubr.f32.mxu0 0.0
    %v2762 = vand.u32 %v385, 4294901760
    %2763 = vmatmul.mubr.f32.gmra.mrb[0].mxu0 %v2762
    %v2764 = vpop.f32.mrb[0].mxu0
    %v2765 = vadd.f32 %v2656, %v2764
    %v2766 = vpop.f32.mrb[0].mxu0
    %v2767 = vadd.f32 %v2658, %v2766
    %2768 = vdwg.mxu0
    %v2769 = vand.u32 %v313, 4294901760
    %2770 = vmatprep.subr.mxu0 %v2769
    %v2771 = vand.u32 %v312, 4294901760
    %2772 = vmatpush1.msra.mxu0 %v2771
    %v2773 = vand.u32 %v317, 4294901760
    %2774 = vmatprep.subr.mxu0 %v2773
    %v2775 = vand.u32 %v316, 4294901760
    %2776 = vmatpush1.msra.mxu0 %v2775
    %v2777 = vand.u32 %v321, 4294901760
    %2778 = vmatprep.subr.mxu0 %v2777
    %v2779 = vand.u32 %v320, 4294901760
    %2780 = vmatpush1.msra.mxu0 %v2779
    %v2781 = vand.u32 %v325, 4294901760
    %2782 = vmatprep.subr.mxu0 %v2781
    %v2783 = vand.u32 %v324, 4294901760
    %2784 = vmatpush1.msra.mxu0 %v2783
    %v2785 = vand.u32 %v329, 4294901760
    %2786 = vmatprep.subr.mxu0 %v2785
    %v2787 = vand.u32 %v328, 4294901760
    %2788 = vmatpush1.msra.mxu0 %v2787
    %v2789 = vand.u32 %v333, 4294901760
    %2790 = vmatprep.subr.mxu0 %v2789
    %v2791 = vand.u32 %v332, 4294901760
    %2792 = vmatpush1.msra.mxu0 %v2791
    %v2793 = vand.u32 %v337, 4294901760
    %2794 = vmatprep.subr.mxu0 %v2793
    %v2795 = vand.u32 %v336, 4294901760
    %2796 = vmatpush1.msra.mxu0 %v2795
    %v2797 = vand.u32 %v341, 4294901760
    %2798 = vmatprep.subr.mxu0 %v2797
    %v2799 = vand.u32 %v340, 4294901760
    %2800 = vmatpush1.msra.mxu0 %v2799
    %2801 = vmatprep.subr.mxu0 0.0
    %2802 = vmatpush1.msra.mxu0 0.0
    %2803 = vmatprep.subr.mxu0 0.0
    %2804 = vmatpush1.msra.mxu0 0.0
    %2805 = vmatprep.subr.mxu0 0.0
    %2806 = vmatpush1.msra.mxu0 0.0
    %2807 = vmatprep.subr.mxu0 0.0
    %2808 = vmatpush1.msra.mxu0 0.0
    %2809 = vmatprep.subr.mxu0 0.0
    %2810 = vmatpush1.msra.mxu0 0.0
    %2811 = vmatprep.subr.mxu0 0.0
    %2812 = vmatpush1.msra.mxu0 0.0
    %2813 = vmatprep.subr.mxu0 0.0
    %2814 = vmatpush1.msra.mxu0 0.0
    %2815 = vmatprep.subr.mxu0 0.0
    %2816 = vmatpush1.msra.mxu0 0.0
    %2817 = vmatprep.subr.mxu0 0.0
    %2818 = vmatpush1.msra.mxu0 0.0
    %2819 = vmatprep.subr.mxu0 0.0
    %2820 = vmatpush1.msra.mxu0 0.0
    %2821 = vmatprep.subr.mxu0 0.0
    %2822 = vmatpush1.msra.mxu0 0.0
    %2823 = vmatprep.subr.mxu0 0.0
    %2824 = vmatpush1.msra.mxu0 0.0
    %2825 = vmatprep.subr.mxu0 0.0
    %2826 = vmatpush1.msra.mxu0 0.0
    %2827 = vmatprep.subr.mxu0 0.0
    %2828 = vmatpush1.msra.mxu0 0.0
    %2829 = vmatprep.subr.mxu0 0.0
    %2830 = vmatpush1.msra.mxu0 0.0
    %2831 = vmatprep.subr.mxu0 0.0
    %2832 = vmatpush1.msra.mxu0 0.0
    %2833 = vmatprep.subr.mxu0 0.0
    %2834 = vmatpush1.msra.mxu0 0.0
    %2835 = vmatprep.subr.mxu0 0.0
    %2836 = vmatpush1.msra.mxu0 0.0
    %2837 = vmatprep.subr.mxu0 0.0
    %2838 = vmatpush1.msra.mxu0 0.0
    %2839 = vmatprep.subr.mxu0 0.0
    %2840 = vmatpush1.msra.mxu0 0.0
    %2841 = vmatprep.subr.mxu0 0.0
    %2842 = vmatpush1.msra.mxu0 0.0
    %2843 = vmatprep.subr.mxu0 0.0
    %2844 = vmatpush1.msra.mxu0 0.0
    %2845 = vmatprep.subr.mxu0 0.0
    %2846 = vmatpush1.msra.mxu0 0.0
    %2847 = vmatprep.subr.mxu0 0.0
    %2848 = vmatpush1.msra.mxu0 0.0
    %2849 = vmatprep.mubr.f32.mxu0 0.0
    %v2850 = vand.u32 %v376, 4294901760
    %v2851 = vsub.f32 %v376, %v2850
    %v2852 = vand.u32 %v2851, 4294901760
    %v2853 = vsub.f32 %v2851, %v2852
    %v2854 = vand.u32 %v2853, 4294901760
    %2855 = vmatmul.mubr.f32.gmra.mrb[0].mxu0 %v2854
    %v2856 = vpop.f32.mrb[0].mxu0
    %v2857 = vadd.f32 0.0, %v2856
    %v2858 = vpop.f32.mrb[0].mxu0
    %v2859 = vadd.f32 0.0, %v2858
    %2860 = vmatprep.mubr.f32.mxu0 0.0
    %v2861 = vand.u32 %v379, 4294901760
    %v2862 = vsub.f32 %v379, %v2861
    %v2863 = vand.u32 %v2862, 4294901760
    %v2864 = vsub.f32 %v2862, %v2863
    %v2865 = vand.u32 %v2864, 4294901760
    %2866 = vmatmul.mubr.f32.gmra.mrb[0].mxu0 %v2865
    %v2867 = vpop.f32.mrb[0].mxu0
    %v2868 = vadd.f32 0.0, %v2867
    %v2869 = vpop.f32.mrb[0].mxu0
    %v2870 = vadd.f32 0.0, %v2869
    %2871 = vmatprep.mubr.f32.mxu0 0.0
    %v2872 = vand.u32 %v382, 4294901760
    %v2873 = vsub.f32 %v382, %v2872
    %v2874 = vand.u32 %v2873, 4294901760
    %v2875 = vsub.f32 %v2873, %v2874
    %v2876 = vand.u32 %v2875, 4294901760
    %2877 = vmatmul.mubr.f32.gmra.mrb[0].mxu0 %v2876
    %v2878 = vpop.f32.mrb[0].mxu0
    %v2879 = vadd.f32 0.0, %v2878
    %v2880 = vpop.f32.mrb[0].mxu0
    %v2881 = vadd.f32 0.0, %v2880
    %2882 = vmatprep.mubr.f32.mxu0 0.0
    %v2883 = vand.u32 %v385, 4294901760
    %v2884 = vsub.f32 %v385, %v2883
    %v2885 = vand.u32 %v2884, 4294901760
    %v2886 = vsub.f32 %v2884, %v2885
    %v2887 = vand.u32 %v2886, 4294901760
    %2888 = vmatmul.mubr.f32.gmra.mrb[0].mxu0 %v2887
    %v2889 = vpop.f32.mrb[0].mxu0
    %v2890 = vadd.f32 0.0, %v2889
    %v2891 = vpop.f32.mrb[0].mxu0
    %v2892 = vadd.f32 0.0, %v2891
    %2893 = vdwg.mxu0
    %v2894 = vand.u32 %v313, 4294901760
    %v2895 = vsub.f32 %v313, %v2894
    %v2896 = vand.u32 %v2895, 4294901760
    %v2897 = vsub.f32 %v2895, %v2896
    %v2898 = vand.u32 %v2897, 4294901760
    %2899 = vmatprep.subr.mxu0 %v2898
    %v2900 = vand.u32 %v312, 4294901760
    %v2901 = vsub.f32 %v312, %v2900
    %v2902 = vand.u32 %v2901, 4294901760
    %v2903 = vsub.f32 %v2901, %v2902
    %v2904 = vand.u32 %v2903, 4294901760
    %2905 = vmatpush1.msra.mxu0 %v2904
    %v2906 = vand.u32 %v317, 4294901760
    %v2907 = vsub.f32 %v317, %v2906
    %v2908 = vand.u32 %v2907, 4294901760
    %v2909 = vsub.f32 %v2907, %v2908
    %v2910 = vand.u32 %v2909, 4294901760
    %2911 = vmatprep.subr.mxu0 %v2910
    %v2912 = vand.u32 %v316, 4294901760
    %v2913 = vsub.f32 %v316, %v2912
    %v2914 = vand.u32 %v2913, 4294901760
    %v2915 = vsub.f32 %v2913, %v2914
    %v2916 = vand.u32 %v2915, 4294901760
    %2917 = vmatpush1.msra.mxu0 %v2916
    %v2918 = vand.u32 %v321, 4294901760
    %v2919 = vsub.f32 %v321, %v2918
    %v2920 = vand.u32 %v2919, 4294901760
    %v2921 = vsub.f32 %v2919, %v2920
    %v2922 = vand.u32 %v2921, 4294901760
    %2923 = vmatprep.subr.mxu0 %v2922
    %v2924 = vand.u32 %v320, 4294901760
    %v2925 = vsub.f32 %v320, %v2924
    %v2926 = vand.u32 %v2925, 4294901760
    %v2927 = vsub.f32 %v2925, %v2926
    %v2928 = vand.u32 %v2927, 4294901760
    %2929 = vmatpush1.msra.mxu0 %v2928
    %v2930 = vand.u32 %v325, 4294901760
    %v2931 = vsub.f32 %v325, %v2930
    %v2932 = vand.u32 %v2931, 4294901760
    %v2933 = vsub.f32 %v2931, %v2932
    %v2934 = vand.u32 %v2933, 4294901760
    %2935 = vmatprep.subr.mxu0 %v2934
    %v2936 = vand.u32 %v324, 4294901760
    %v2937 = vsub.f32 %v324, %v2936
    %v2938 = vand.u32 %v2937, 4294901760
    %v2939 = vsub.f32 %v2937, %v2938
    %v2940 = vand.u32 %v2939, 4294901760
    %2941 = vmatpush1.msra.mxu0 %v2940
    %v2942 = vand.u32 %v329, 4294901760
    %v2943 = vsub.f32 %v329, %v2942
    %v2944 = vand.u32 %v2943, 4294901760
    %v2945 = vsub.f32 %v2943, %v2944
    %v2946 = vand.u32 %v2945, 4294901760
    %2947 = vmatprep.subr.mxu0 %v2946
    %v2948 = vand.u32 %v328, 4294901760
    %v2949 = vsub.f32 %v328, %v2948
    %v2950 = vand.u32 %v2949, 4294901760
    %v2951 = vsub.f32 %v2949, %v2950
    %v2952 = vand.u32 %v2951, 4294901760
    %2953 = vmatpush1.msra.mxu0 %v2952
    %v2954 = vand.u32 %v333, 4294901760
    %v2955 = vsub.f32 %v333, %v2954
    %v2956 = vand.u32 %v2955, 4294901760
    %v2957 = vsub.f32 %v2955, %v2956
    %v2958 = vand.u32 %v2957, 4294901760
    %2959 = vmatprep.subr.mxu0 %v2958
    %v2960 = vand.u32 %v332, 4294901760
    %v2961 = vsub.f32 %v332, %v2960
    %v2962 = vand.u32 %v2961, 4294901760
    %v2963 = vsub.f32 %v2961, %v2962
    %v2964 = vand.u32 %v2963, 4294901760
    %2965 = vmatpush1.msra.mxu0 %v2964
    %v2966 = vand.u32 %v337, 4294901760
    %v2967 = vsub.f32 %v337, %v2966
    %v2968 = vand.u32 %v2967, 4294901760
    %v2969 = vsub.f32 %v2967, %v2968
    %v2970 = vand.u32 %v2969, 4294901760
    %2971 = vmatprep.subr.mxu0 %v2970
    %v2972 = vand.u32 %v336, 4294901760
    %v2973 = vsub.f32 %v336, %v2972
    %v2974 = vand.u32 %v2973, 4294901760
    %v2975 = vsub.f32 %v2973, %v2974
    %v2976 = vand.u32 %v2975, 4294901760
    %2977 = vmatpush1.msra.mxu0 %v2976
    %v2978 = vand.u32 %v341, 4294901760
    %v2979 = vsub.f32 %v341, %v2978
    %v2980 = vand.u32 %v2979, 4294901760
    %v2981 = vsub.f32 %v2979, %v2980
    %v2982 = vand.u32 %v2981, 4294901760
    %2983 = vmatprep.subr.mxu0 %v2982
    %v2984 = vand.u32 %v340, 4294901760
    %v2985 = vsub.f32 %v340, %v2984
    %v2986 = vand.u32 %v2985, 4294901760
    %v2987 = vsub.f32 %v2985, %v2986
    %v2988 = vand.u32 %v2987, 4294901760
    %2989 = vmatpush1.msra.mxu0 %v2988
    %2990 = vmatprep.subr.mxu0 0.0
    %2991 = vmatpush1.msra.mxu0 0.0
    %2992 = vmatprep.subr.mxu0 0.0
    %2993 = vmatpush1.msra.mxu0 0.0
    %2994 = vmatprep.subr.mxu0 0.0
    %2995 = vmatpush1.msra.mxu0 0.0
    %2996 = vmatprep.subr.mxu0 0.0
    %2997 = vmatpush1.msra.mxu0 0.0
    %2998 = vmatprep.subr.mxu0 0.0
    %2999 = vmatpush1.msra.mxu0 0.0
    %3000 = vmatprep.subr.mxu0 0.0
    %3001 = vmatpush1.msra.mxu0 0.0
    %3002 = vmatprep.subr.mxu0 0.0
    %3003 = vmatpush1.msra.mxu0 0.0
    %3004 = vmatprep.subr.mxu0 0.0
    %3005 = vmatpush1.msra.mxu0 0.0
    %3006 = vmatprep.subr.mxu0 0.0
    %3007 = vmatpush1.msra.mxu0 0.0
    %3008 = vmatprep.subr.mxu0 0.0
    %3009 = vmatpush1.msra.mxu0 0.0
    %3010 = vmatprep.subr.mxu0 0.0
    %3011 = vmatpush1.msra.mxu0 0.0
    %3012 = vmatprep.subr.mxu0 0.0
    %3013 = vmatpush1.msra.mxu0 0.0
    %3014 = vmatprep.subr.mxu0 0.0
    %3015 = vmatpush1.msra.mxu0 0.0
    %3016 = vmatprep.subr.mxu0 0.0
    %3017 = vmatpush1.msra.mxu0 0.0
    %3018 = vmatprep.subr.mxu0 0.0
    %3019 = vmatpush1.msra.mxu0 0.0
    %3020 = vmatprep.subr.mxu0 0.0
    %3021 = vmatpush1.msra.mxu0 0.0
    %3022 = vmatprep.subr.mxu0 0.0
    %3023 = vmatpush1.msra.mxu0 0.0
    %3024 = vmatprep.subr.mxu0 0.0
    %3025 = vmatpush1.msra.mxu0 0.0
    %3026 = vmatprep.subr.mxu0 0.0
    %3027 = vmatpush1.msra.mxu0 0.0
    %3028 = vmatprep.subr.mxu0 0.0
    %3029 = vmatpush1.msra.mxu0 0.0
    %3030 = vmatprep.subr.mxu0 0.0
    %3031 = vmatpush1.msra.mxu0 0.0
    %3032 = vmatprep.subr.mxu0 0.0
    %3033 = vmatpush1.msra.mxu0 0.0
    %3034 = vmatprep.subr.mxu0 0.0
    %3035 = vmatpush1.msra.mxu0 0.0
    %3036 = vmatprep.subr.mxu0 0.0
    %3037 = vmatpush1.msra.mxu0 0.0
    %3038 = vmatprep.mubr.f32.mxu0 0.0
    %v3039 = vand.u32 %v376, 4294901760
    %3040 = vmatmul.mubr.f32.gmra.mrb[0].mxu0 %v3039
    %v3041 = vpop.f32.mrb[0].mxu0
    %v3042 = vadd.f32 %v2857, %v3041
    %v3043 = vpop.f32.mrb[0].mxu0
    %v3044 = vadd.f32 %v2859, %v3043
    %3045 = vmatprep.mubr.f32.mxu0 0.0
    %v3046 = vand.u32 %v379, 4294901760
    %3047 = vmatmul.mubr.f32.gmra.mrb[0].mxu0 %v3046
    %v3048 = vpop.f32.mrb[0].mxu0
    %v3049 = vadd.f32 %v2868, %v3048
    %v3050 = vpop.f32.mrb[0].mxu0
    %v3051 = vadd.f32 %v2870, %v3050
    %3052 = vmatprep.mubr.f32.mxu0 0.0
    %v3053 = vand.u32 %v382, 4294901760
    %3054 = vmatmul.mubr.f32.gmra.mrb[0].mxu0 %v3053
    %v3055 = vpop.f32.mrb[0].mxu0
    %v3056 = vadd.f32 %v2879, %v3055
    %v3057 = vpop.f32.mrb[0].mxu0
    %v3058 = vadd.f32 %v2881, %v3057
    %3059 = vmatprep.mubr.f32.mxu0 0.0
    %v3060 = vand.u32 %v385, 4294901760
    %3061 = vmatmul.mubr.f32.gmra.mrb[0].mxu0 %v3060
    %v3062 = vpop.f32.mrb[0].mxu0
    %v3063 = vadd.f32 %v2890, %v3062
    %v3064 = vpop.f32.mrb[0].mxu0
    %v3065 = vadd.f32 %v2892, %v3064
    %3066 = vdwg.mxu0
    %v3067 = vand.u32 %v313, 4294901760
    %v3068 = vsub.f32 %v313, %v3067
    %3069 = vmatprep.subr.mxu0 %v3068
    %v3070 = vand.u32 %v312, 4294901760
    %v3071 = vsub.f32 %v312, %v3070
    %3072 = vmatpush1.msra.mxu0 %v3071
    %v3073 = vand.u32 %v317, 4294901760
    %v3074 = vsub.f32 %v317, %v3073
    %3075 = vmatprep.subr.mxu0 %v3074
    %v3076 = vand.u32 %v316, 4294901760
    %v3077 = vsub.f32 %v316, %v3076
    %3078 = vmatpush1.msra.mxu0 %v3077
    %v3079 = vand.u32 %v321, 4294901760
    %v3080 = vsub.f32 %v321, %v3079
    %3081 = vmatprep.subr.mxu0 %v3080
    %v3082 = vand.u32 %v320, 4294901760
    %v3083 = vsub.f32 %v320, %v3082
    %3084 = vmatpush1.msra.mxu0 %v3083
    %v3085 = vand.u32 %v325, 4294901760
    %v3086 = vsub.f32 %v325, %v3085
    %3087 = vmatprep.subr.mxu0 %v3086
    %v3088 = vand.u32 %v324, 4294901760
    %v3089 = vsub.f32 %v324, %v3088
    %3090 = vmatpush1.msra.mxu0 %v3089
    %v3091 = vand.u32 %v329, 4294901760
    %v3092 = vsub.f32 %v329, %v3091
    %3093 = vmatprep.subr.mxu0 %v3092
    %v3094 = vand.u32 %v328, 4294901760
    %v3095 = vsub.f32 %v328, %v3094
    %3096 = vmatpush1.msra.mxu0 %v3095
    %v3097 = vand.u32 %v333, 4294901760
    %v3098 = vsub.f32 %v333, %v3097
    %3099 = vmatprep.subr.mxu0 %v3098
    %v3100 = vand.u32 %v332, 4294901760
    %v3101 = vsub.f32 %v332, %v3100
    %3102 = vmatpush1.msra.mxu0 %v3101
    %v3103 = vand.u32 %v337, 4294901760
    %v3104 = vsub.f32 %v337, %v3103
    %3105 = vmatprep.subr.mxu0 %v3104
    %v3106 = vand.u32 %v336, 4294901760
    %v3107 = vsub.f32 %v336, %v3106
    %3108 = vmatpush1.msra.mxu0 %v3107
    %v3109 = vand.u32 %v341, 4294901760
    %v3110 = vsub.f32 %v341, %v3109
    %3111 = vmatprep.subr.mxu0 %v3110
    %v3112 = vand.u32 %v340, 4294901760
    %v3113 = vsub.f32 %v340, %v3112
    %3114 = vmatpush1.msra.mxu0 %v3113
    %3115 = vmatprep.subr.mxu0 0.0
    %3116 = vmatpush1.msra.mxu0 0.0
    %3117 = vmatprep.subr.mxu0 0.0
    %3118 = vmatpush1.msra.mxu0 0.0
    %3119 = vmatprep.subr.mxu0 0.0
    %3120 = vmatpush1.msra.mxu0 0.0
    %3121 = vmatprep.subr.mxu0 0.0
    %3122 = vmatpush1.msra.mxu0 0.0
    %3123 = vmatprep.subr.mxu0 0.0
    %3124 = vmatpush1.msra.mxu0 0.0
    %3125 = vmatprep.subr.mxu0 0.0
    %3126 = vmatpush1.msra.mxu0 0.0
    %3127 = vmatprep.subr.mxu0 0.0
    %3128 = vmatpush1.msra.mxu0 0.0
    %3129 = vmatprep.subr.mxu0 0.0
    %3130 = vmatpush1.msra.mxu0 0.0
    %3131 = vmatprep.subr.mxu0 0.0
    %3132 = vmatpush1.msra.mxu0 0.0
    %3133 = vmatprep.subr.mxu0 0.0
    %3134 = vmatpush1.msra.mxu0 0.0
    %3135 = vmatprep.subr.mxu0 0.0
    %3136 = vmatpush1.msra.mxu0 0.0
    %3137 = vmatprep.subr.mxu0 0.0
    %3138 = vmatpush1.msra.mxu0 0.0
    %3139 = vmatprep.subr.mxu0 0.0
    %3140 = vmatpush1.msra.mxu0 0.0
    %3141 = vmatprep.subr.mxu0 0.0
    %3142 = vmatpush1.msra.mxu0 0.0
    %3143 = vmatprep.subr.mxu0 0.0
    %3144 = vmatpush1.msra.mxu0 0.0
    %3145 = vmatprep.subr.mxu0 0.0
    %3146 = vmatpush1.msra.mxu0 0.0
    %3147 = vmatprep.subr.mxu0 0.0
    %3148 = vmatpush1.msra.mxu0 0.0
    %3149 = vmatprep.subr.mxu0 0.0
    %3150 = vmatpush1.msra.mxu0 0.0
    %3151 = vmatprep.subr.mxu0 0.0
    %3152 = vmatpush1.msra.mxu0 0.0
    %3153 = vmatprep.subr.mxu0 0.0
    %3154 = vmatpush1.msra.mxu0 0.0
    %3155 = vmatprep.subr.mxu0 0.0
    %3156 = vmatpush1.msra.mxu0 0.0
    %3157 = vmatprep.subr.mxu0 0.0
    %3158 = vmatpush1.msra.mxu0 0.0
    %3159 = vmatprep.subr.mxu0 0.0
    %3160 = vmatpush1.msra.mxu0 0.0
    %3161 = vmatprep.subr.mxu0 0.0
    %3162 = vmatpush1.msra.mxu0 0.0
    %3163 = vmatprep.mubr.f32.mxu0 0.0
    %v3164 = vand.u32 %v376, 4294901760
    %v3165 = vsub.f32 %v376, %v3164
    %3166 = vmatmul.mubr.f32.gmra.mrb[0].mxu0 %v3165
    %v3167 = vpop.f32.mrb[0].mxu0
    %v3168 = vadd.f32 %v3042, %v3167
    %v3169 = vpop.f32.mrb[0].mxu0
    %v3170 = vadd.f32 %v3044, %v3169
    %3171 = vmatprep.mubr.f32.mxu0 0.0
    %v3172 = vand.u32 %v379, 4294901760
    %v3173 = vsub.f32 %v379, %v3172
    %3174 = vmatmul.mubr.f32.gmra.mrb[0].mxu0 %v3173
    %v3175 = vpop.f32.mrb[0].mxu0
    %v3176 = vadd.f32 %v3049, %v3175
    %v3177 = vpop.f32.mrb[0].mxu0
    %v3178 = vadd.f32 %v3051, %v3177
    %3179 = vmatprep.mubr.f32.mxu0 0.0
    %v3180 = vand.u32 %v382, 4294901760
    %v3181 = vsub.f32 %v382, %v3180
    %3182 = vmatmul.mubr.f32.gmra.mrb[0].mxu0 %v3181
    %v3183 = vpop.f32.mrb[0].mxu0
    %v3184 = vadd.f32 %v3056, %v3183
    %v3185 = vpop.f32.mrb[0].mxu0
    %v3186 = vadd.f32 %v3058, %v3185
    %3187 = vmatprep.mubr.f32.mxu0 0.0
    %v3188 = vand.u32 %v385, 4294901760
    %v3189 = vsub.f32 %v385, %v3188
    %3190 = vmatmul.mubr.f32.gmra.mrb[0].mxu0 %v3189
    %v3191 = vpop.f32.mrb[0].mxu0
    %v3192 = vadd.f32 %v3063, %v3191
    %v3193 = vpop.f32.mrb[0].mxu0
    %v3194 = vadd.f32 %v3065, %v3193
    %3195 = vdwg.mxu0
    %v3196 = vand.u32 %v313, 4294901760
    %3197 = vmatprep.subr.mxu0 %v3196
    %v3198 = vand.u32 %v312, 4294901760
    %3199 = vmatpush1.msra.mxu0 %v3198
    %v3200 = vand.u32 %v317, 4294901760
    %3201 = vmatprep.subr.mxu0 %v3200
    %v3202 = vand.u32 %v316, 4294901760
    %3203 = vmatpush1.msra.mxu0 %v3202
    %v3204 = vand.u32 %v321, 4294901760
    %3205 = vmatprep.subr.mxu0 %v3204
    %v3206 = vand.u32 %v320, 4294901760
    %3207 = vmatpush1.msra.mxu0 %v3206
    %v3208 = vand.u32 %v325, 4294901760
    %3209 = vmatprep.subr.mxu0 %v3208
    %v3210 = vand.u32 %v324, 4294901760
    %3211 = vmatpush1.msra.mxu0 %v3210
    %v3212 = vand.u32 %v329, 4294901760
    %3213 = vmatprep.subr.mxu0 %v3212
    %v3214 = vand.u32 %v328, 4294901760
    %3215 = vmatpush1.msra.mxu0 %v3214
    %v3216 = vand.u32 %v333, 4294901760
    %3217 = vmatprep.subr.mxu0 %v3216
    %v3218 = vand.u32 %v332, 4294901760
    %3219 = vmatpush1.msra.mxu0 %v3218
    %v3220 = vand.u32 %v337, 4294901760
    %3221 = vmatprep.subr.mxu0 %v3220
    %v3222 = vand.u32 %v336, 4294901760
    %3223 = vmatpush1.msra.mxu0 %v3222
    %v3224 = vand.u32 %v341, 4294901760
    %3225 = vmatprep.subr.mxu0 %v3224
    %v3226 = vand.u32 %v340, 4294901760
    %3227 = vmatpush1.msra.mxu0 %v3226
    %3228 = vmatprep.subr.mxu0 0.0
    %3229 = vmatpush1.msra.mxu0 0.0
    %3230 = vmatprep.subr.mxu0 0.0
    %3231 = vmatpush1.msra.mxu0 0.0
    %3232 = vmatprep.subr.mxu0 0.0
    %3233 = vmatpush1.msra.mxu0 0.0
    %3234 = vmatprep.subr.mxu0 0.0
    %3235 = vmatpush1.msra.mxu0 0.0
    %3236 = vmatprep.subr.mxu0 0.0
    %3237 = vmatpush1.msra.mxu0 0.0
    %3238 = vmatprep.subr.mxu0 0.0
    %3239 = vmatpush1.msra.mxu0 0.0
    %3240 = vmatprep.subr.mxu0 0.0
    %3241 = vmatpush1.msra.mxu0 0.0
    %3242 = vmatprep.subr.mxu0 0.0
    %3243 = vmatpush1.msra.mxu0 0.0
    %3244 = vmatprep.subr.mxu0 0.0
    %3245 = vmatpush1.msra.mxu0 0.0
    %3246 = vmatprep.subr.mxu0 0.0
    %3247 = vmatpush1.msra.mxu0 0.0
    %3248 = vmatprep.subr.mxu0 0.0
    %3249 = vmatpush1.msra.mxu0 0.0
    %3250 = vmatprep.subr.mxu0 0.0
    %3251 = vmatpush1.msra.mxu0 0.0
    %3252 = vmatprep.subr.mxu0 0.0
    %3253 = vmatpush1.msra.mxu0 0.0
    %3254 = vmatprep.subr.mxu0 0.0
    %3255 = vmatpush1.msra.mxu0 0.0
    %3256 = vmatprep.subr.mxu0 0.0
    %3257 = vmatpush1.msra.mxu0 0.0
    %3258 = vmatprep.subr.mxu0 0.0
    %3259 = vmatpush1.msra.mxu0 0.0
    %3260 = vmatprep.subr.mxu0 0.0
    %3261 = vmatpush1.msra.mxu0 0.0
    %3262 = vmatprep.subr.mxu0 0.0
    %3263 = vmatpush1.msra.mxu0 0.0
    %3264 = vmatprep.subr.mxu0 0.0
    %3265 = vmatpush1.msra.mxu0 0.0
    %3266 = vmatprep.subr.mxu0 0.0
    %3267 = vmatpush1.msra.mxu0 0.0
    %3268 = vmatprep.subr.mxu0 0.0
    %3269 = vmatpush1.msra.mxu0 0.0
    %3270 = vmatprep.subr.mxu0 0.0
    %3271 = vmatpush1.msra.mxu0 0.0
    %3272 = vmatprep.subr.mxu0 0.0
    %3273 = vmatpush1.msra.mxu0 0.0
    %3274 = vmatprep.subr.mxu0 0.0
    %3275 = vmatpush1.msra.mxu0 0.0
    %3276 = vmatprep.mubr.f32.mxu0 0.0
    %v3277 = vand.u32 %v376, 4294901760
    %v3278 = vsub.f32 %v376, %v3277
    %v3279 = vand.u32 %v3278, 4294901760
    %3280 = vmatmul.mubr.f32.gmra.mrb[0].mxu0 %v3279
    %v3281 = vpop.f32.mrb[0].mxu0
    %v3282 = vadd.f32 %v3168, %v3281
    %v3283 = vpop.f32.mrb[0].mxu0
    %v3284 = vadd.f32 %v3170, %v3283
    %3285 = vmatprep.mubr.f32.mxu0 0.0
    %v3286 = vand.u32 %v379, 4294901760
    %v3287 = vsub.f32 %v379, %v3286
    %v3288 = vand.u32 %v3287, 4294901760
    %3289 = vmatmul.mubr.f32.gmra.mrb[0].mxu0 %v3288
    %v3290 = vpop.f32.mrb[0].mxu0
    %v3291 = vadd.f32 %v3176, %v3290
    %v3292 = vpop.f32.mrb[0].mxu0
    %v3293 = vadd.f32 %v3178, %v3292
    %3294 = vmatprep.mubr.f32.mxu0 0.0
    %v3295 = vand.u32 %v382, 4294901760
    %v3296 = vsub.f32 %v382, %v3295
    %v3297 = vand.u32 %v3296, 4294901760
    %3298 = vmatmul.mubr.f32.gmra.mrb[0].mxu0 %v3297
    %v3299 = vpop.f32.mrb[0].mxu0
    %v3300 = vadd.f32 %v3184, %v3299
    %v3301 = vpop.f32.mrb[0].mxu0
    %v3302 = vadd.f32 %v3186, %v3301
    %3303 = vmatprep.mubr.f32.mxu0 0.0
    %v3304 = vand.u32 %v385, 4294901760
    %v3305 = vsub.f32 %v385, %v3304
    %v3306 = vand.u32 %v3305, 4294901760
    %3307 = vmatmul.mubr.f32.gmra.mrb[0].mxu0 %v3306
    %v3308 = vpop.f32.mrb[0].mxu0
    %v3309 = vadd.f32 %v3192, %v3308
    %v3310 = vpop.f32.mrb[0].mxu0
    %v3311 = vadd.f32 %v3194, %v3310
    %3312 = vdwg.mxu0
    %v3313 = vand.u32 %v313, 4294901760
    %v3314 = vsub.f32 %v313, %v3313
    %v3315 = vand.u32 %v3314, 4294901760
    %3316 = vmatprep.subr.mxu0 %v3315
    %v3317 = vand.u32 %v312, 4294901760
    %v3318 = vsub.f32 %v312, %v3317
    %v3319 = vand.u32 %v3318, 4294901760
    %3320 = vmatpush1.msra.mxu0 %v3319
    %v3321 = vand.u32 %v317, 4294901760
    %v3322 = vsub.f32 %v317, %v3321
    %v3323 = vand.u32 %v3322, 4294901760
    %3324 = vmatprep.subr.mxu0 %v3323
    %v3325 = vand.u32 %v316, 4294901760
    %v3326 = vsub.f32 %v316, %v3325
    %v3327 = vand.u32 %v3326, 4294901760
    %3328 = vmatpush1.msra.mxu0 %v3327
    %v3329 = vand.u32 %v321, 4294901760
    %v3330 = vsub.f32 %v321, %v3329
    %v3331 = vand.u32 %v3330, 4294901760
    %3332 = vmatprep.subr.mxu0 %v3331
    %v3333 = vand.u32 %v320, 4294901760
    %v3334 = vsub.f32 %v320, %v3333
    %v3335 = vand.u32 %v3334, 4294901760
    %3336 = vmatpush1.msra.mxu0 %v3335
    %v3337 = vand.u32 %v325, 4294901760
    %v3338 = vsub.f32 %v325, %v3337
    %v3339 = vand.u32 %v3338, 4294901760
    %3340 = vmatprep.subr.mxu0 %v3339
    %v3341 = vand.u32 %v324, 4294901760
    %v3342 = vsub.f32 %v324, %v3341
    %v3343 = vand.u32 %v3342, 4294901760
    %3344 = vmatpush1.msra.mxu0 %v3343
    %v3345 = vand.u32 %v329, 4294901760
    %v3346 = vsub.f32 %v329, %v3345
    %v3347 = vand.u32 %v3346, 4294901760
    %3348 = vmatprep.subr.mxu0 %v3347
    %v3349 = vand.u32 %v328, 4294901760
    %v3350 = vsub.f32 %v328, %v3349
    %v3351 = vand.u32 %v3350, 4294901760
    %3352 = vmatpush1.msra.mxu0 %v3351
    %v3353 = vand.u32 %v333, 4294901760
    %v3354 = vsub.f32 %v333, %v3353
    %v3355 = vand.u32 %v3354, 4294901760
    %3356 = vmatprep.subr.mxu0 %v3355
    %v3357 = vand.u32 %v332, 4294901760
    %v3358 = vsub.f32 %v332, %v3357
    %v3359 = vand.u32 %v3358, 4294901760
    %3360 = vmatpush1.msra.mxu0 %v3359
    %v3361 = vand.u32 %v337, 4294901760
    %v3362 = vsub.f32 %v337, %v3361
    %v3363 = vand.u32 %v3362, 4294901760
    %3364 = vmatprep.subr.mxu0 %v3363
    %v3365 = vand.u32 %v336, 4294901760
    %v3366 = vsub.f32 %v336, %v3365
    %v3367 = vand.u32 %v3366, 4294901760
    %3368 = vmatpush1.msra.mxu0 %v3367
    %v3369 = vand.u32 %v341, 4294901760
    %v3370 = vsub.f32 %v341, %v3369
    %v3371 = vand.u32 %v3370, 4294901760
    %3372 = vmatprep.subr.mxu0 %v3371
    %v3373 = vand.u32 %v340, 4294901760
    %v3374 = vsub.f32 %v340, %v3373
    %v3375 = vand.u32 %v3374, 4294901760
    %3376 = vmatpush1.msra.mxu0 %v3375
    %3377 = vmatprep.subr.mxu0 0.0
    %3378 = vmatpush1.msra.mxu0 0.0
    %3379 = vmatprep.subr.mxu0 0.0
    %3380 = vmatpush1.msra.mxu0 0.0
    %3381 = vmatprep.subr.mxu0 0.0
    %3382 = vmatpush1.msra.mxu0 0.0
    %3383 = vmatprep.subr.mxu0 0.0
    %3384 = vmatpush1.msra.mxu0 0.0
    %3385 = vmatprep.subr.mxu0 0.0
    %3386 = vmatpush1.msra.mxu0 0.0
    %3387 = vmatprep.subr.mxu0 0.0
    %3388 = vmatpush1.msra.mxu0 0.0
    %3389 = vmatprep.subr.mxu0 0.0
    %3390 = vmatpush1.msra.mxu0 0.0
    %3391 = vmatprep.subr.mxu0 0.0
    %3392 = vmatpush1.msra.mxu0 0.0
    %3393 = vmatprep.subr.mxu0 0.0
    %3394 = vmatpush1.msra.mxu0 0.0
    %3395 = vmatprep.subr.mxu0 0.0
    %3396 = vmatpush1.msra.mxu0 0.0
    %3397 = vmatprep.subr.mxu0 0.0
    %3398 = vmatpush1.msra.mxu0 0.0
    %3399 = vmatprep.subr.mxu0 0.0
    %3400 = vmatpush1.msra.mxu0 0.0
    %3401 = vmatprep.subr.mxu0 0.0
    %3402 = vmatpush1.msra.mxu0 0.0
    %3403 = vmatprep.subr.mxu0 0.0
    %3404 = vmatpush1.msra.mxu0 0.0
    %3405 = vmatprep.subr.mxu0 0.0
    %3406 = vmatpush1.msra.mxu0 0.0
    %3407 = vmatprep.subr.mxu0 0.0
    %3408 = vmatpush1.msra.mxu0 0.0
    %3409 = vmatprep.subr.mxu0 0.0
    %3410 = vmatpush1.msra.mxu0 0.0
    %3411 = vmatprep.subr.mxu0 0.0
    %3412 = vmatpush1.msra.mxu0 0.0
    %3413 = vmatprep.subr.mxu0 0.0
    %3414 = vmatpush1.msra.mxu0 0.0
    %3415 = vmatprep.subr.mxu0 0.0
    %3416 = vmatpush1.msra.mxu0 0.0
    %3417 = vmatprep.subr.mxu0 0.0
    %3418 = vmatpush1.msra.mxu0 0.0
    %3419 = vmatprep.subr.mxu0 0.0
    %3420 = vmatpush1.msra.mxu0 0.0
    %3421 = vmatprep.subr.mxu0 0.0
    %3422 = vmatpush1.msra.mxu0 0.0
    %3423 = vmatprep.subr.mxu0 0.0
    %3424 = vmatpush1.msra.mxu0 0.0
    %3425 = vmatprep.mubr.f32.mxu0 0.0
    %v3426 = vand.u32 %v376, 4294901760
    %3427 = vmatmul.mubr.f32.gmra.mrb[0].mxu0 %v3426
    %v3428 = vpop.f32.mrb[0].mxu0
    %v3429 = vadd.f32 %v3282, %v3428
    %v3430 = vpop.f32.mrb[0].mxu0
    %v3431 = vadd.f32 %v3284, %v3430
    %3432 = vmatprep.mubr.f32.mxu0 0.0
    %v3433 = vand.u32 %v379, 4294901760
    %3434 = vmatmul.mubr.f32.gmra.mrb[0].mxu0 %v3433
    %v3435 = vpop.f32.mrb[0].mxu0
    %v3436 = vadd.f32 %v3291, %v3435
    %v3437 = vpop.f32.mrb[0].mxu0
    %v3438 = vadd.f32 %v3293, %v3437
    %3439 = vmatprep.mubr.f32.mxu0 0.0
    %v3440 = vand.u32 %v382, 4294901760
    %3441 = vmatmul.mubr.f32.gmra.mrb[0].mxu0 %v3440
    %v3442 = vpop.f32.mrb[0].mxu0
    %v3443 = vadd.f32 %v3300, %v3442
    %v3444 = vpop.f32.mrb[0].mxu0
    %v3445 = vadd.f32 %v3302, %v3444
    %3446 = vmatprep.mubr.f32.mxu0 0.0
    %v3447 = vand.u32 %v385, 4294901760
    %3448 = vmatmul.mubr.f32.gmra.mrb[0].mxu0 %v3447
    %v3449 = vpop.f32.mrb[0].mxu0
    %v3450 = vadd.f32 %v3309, %v3449
    %v3451 = vpop.f32.mrb[0].mxu0
    %v3452 = vadd.f32 %v3311, %v3451
    %3453 = vdwg.mxu0
    %v3454 = vand.u32 %v313, 4294901760
    %3455 = vmatprep.subr.mxu0 %v3454
    %v3456 = vand.u32 %v312, 4294901760
    %3457 = vmatpush1.msra.mxu0 %v3456
    %v3458 = vand.u32 %v317, 4294901760
    %3459 = vmatprep.subr.mxu0 %v3458
    %v3460 = vand.u32 %v316, 4294901760
    %3461 = vmatpush1.msra.mxu0 %v3460
    %v3462 = vand.u32 %v321, 4294901760
    %3463 = vmatprep.subr.mxu0 %v3462
    %v3464 = vand.u32 %v320, 4294901760
    %3465 = vmatpush1.msra.mxu0 %v3464
    %v3466 = vand.u32 %v325, 4294901760
    %3467 = vmatprep.subr.mxu0 %v3466
    %v3468 = vand.u32 %v324, 4294901760
    %3469 = vmatpush1.msra.mxu0 %v3468
    %v3470 = vand.u32 %v329, 4294901760
    %3471 = vmatprep.subr.mxu0 %v3470
    %v3472 = vand.u32 %v328, 4294901760
    %3473 = vmatpush1.msra.mxu0 %v3472
    %v3474 = vand.u32 %v333, 4294901760
    %3475 = vmatprep.subr.mxu0 %v3474
    %v3476 = vand.u32 %v332, 4294901760
    %3477 = vmatpush1.msra.mxu0 %v3476
    %v3478 = vand.u32 %v337, 4294901760
    %3479 = vmatprep.subr.mxu0 %v3478
    %v3480 = vand.u32 %v336, 4294901760
    %3481 = vmatpush1.msra.mxu0 %v3480
    %v3482 = vand.u32 %v341, 4294901760
    %3483 = vmatprep.subr.mxu0 %v3482
    %v3484 = vand.u32 %v340, 4294901760
    %3485 = vmatpush1.msra.mxu0 %v3484
    %3486 = vmatprep.subr.mxu0 0.0
    %3487 = vmatpush1.msra.mxu0 0.0
    %3488 = vmatprep.subr.mxu0 0.0
    %3489 = vmatpush1.msra.mxu0 0.0
    %3490 = vmatprep.subr.mxu0 0.0
    %3491 = vmatpush1.msra.mxu0 0.0
    %3492 = vmatprep.subr.mxu0 0.0
    %3493 = vmatpush1.msra.mxu0 0.0
    %3494 = vmatprep.subr.mxu0 0.0
    %3495 = vmatpush1.msra.mxu0 0.0
    %3496 = vmatprep.subr.mxu0 0.0
    %3497 = vmatpush1.msra.mxu0 0.0
    %3498 = vmatprep.subr.mxu0 0.0
    %3499 = vmatpush1.msra.mxu0 0.0
    %3500 = vmatprep.subr.mxu0 0.0
    %3501 = vmatpush1.msra.mxu0 0.0
    %3502 = vmatprep.subr.mxu0 0.0
    %3503 = vmatpush1.msra.mxu0 0.0
    %3504 = vmatprep.subr.mxu0 0.0
    %3505 = vmatpush1.msra.mxu0 0.0
    %3506 = vmatprep.subr.mxu0 0.0
    %3507 = vmatpush1.msra.mxu0 0.0
    %3508 = vmatprep.subr.mxu0 0.0
    %3509 = vmatpush1.msra.mxu0 0.0
    %3510 = vmatprep.subr.mxu0 0.0
    %3511 = vmatpush1.msra.mxu0 0.0
    %3512 = vmatprep.subr.mxu0 0.0
    %3513 = vmatpush1.msra.mxu0 0.0
    %3514 = vmatprep.subr.mxu0 0.0
    %3515 = vmatpush1.msra.mxu0 0.0
    %3516 = vmatprep.subr.mxu0 0.0
    %3517 = vmatpush1.msra.mxu0 0.0
    %3518 = vmatprep.subr.mxu0 0.0
    %3519 = vmatpush1.msra.mxu0 0.0
    %3520 = vmatprep.subr.mxu0 0.0
    %3521 = vmatpush1.msra.mxu0 0.0
    %3522 = vmatprep.subr.mxu0 0.0
    %3523 = vmatpush1.msra.mxu0 0.0
    %3524 = vmatprep.subr.mxu0 0.0
    %3525 = vmatpush1.msra.mxu0 0.0
    %3526 = vmatprep.subr.mxu0 0.0
    %3527 = vmatpush1.msra.mxu0 0.0
    %3528 = vmatprep.subr.mxu0 0.0
    %3529 = vmatpush1.msra.mxu0 0.0
    %3530 = vmatprep.subr.mxu0 0.0
    %3531 = vmatpush1.msra.mxu0 0.0
    %3532 = vmatprep.subr.mxu0 0.0
    %3533 = vmatpush1.msra.mxu0 0.0
    %3534 = vmatprep.mubr.f32.mxu0 0.0
    %v3535 = vand.u32 %v376, 4294901760
    %3536 = vmatmul.mubr.f32.gmra.mrb[0].mxu0 %v3535
    %v3537 = vpop.f32.mrb[0].mxu0
    %v3538 = vadd.f32 %v3429, %v3537
    %v3539 = vpop.f32.mrb[0].mxu0
    %v3540 = vadd.f32 %v3431, %v3539
    %3541 = vmatprep.mubr.f32.mxu0 0.0
    %v3542 = vand.u32 %v379, 4294901760
    %3543 = vmatmul.mubr.f32.gmra.mrb[0].mxu0 %v3542
    %v3544 = vpop.f32.mrb[0].mxu0
    %v3545 = vadd.f32 %v3436, %v3544
    %v3546 = vpop.f32.mrb[0].mxu0
    %v3547 = vadd.f32 %v3438, %v3546
    %3548 = vmatprep.mubr.f32.mxu0 0.0
    %v3549 = vand.u32 %v382, 4294901760
    %3550 = vmatmul.mubr.f32.gmra.mrb[0].mxu0 %v3549
    %v3551 = vpop.f32.mrb[0].mxu0
    %v3552 = vadd.f32 %v3443, %v3551
    %v3553 = vpop.f32.mrb[0].mxu0
    %v3554 = vadd.f32 %v3445, %v3553
    %3555 = vmatprep.mubr.f32.mxu0 0.0
    %v3556 = vand.u32 %v385, 4294901760
    %3557 = vmatmul.mubr.f32.gmra.mrb[0].mxu0 %v3556
    %v3558 = vpop.f32.mrb[0].mxu0
    %v3559 = vadd.f32 %v3450, %v3558
    %v3560 = vpop.f32.mrb[0].mxu0
    %v3561 = vadd.f32 %v3452, %v3560
    %3562 = vdwg.mxu0
    %3563 = vxpose.xlu0.b32.start [1/16] %v99, 128
    %3564 = vxpose.xlu0.b32.cont [2/16] %v100, 128
    %3565 = vxpose.xlu0.b32.cont [3/16] %v101, 128
    %3566 = vxpose.xlu0.b32.cont [4/16] %v102, 128
    %3567 = vxpose.xlu0.b32.cont [5/16] %v103, 128
    %3568 = vxpose.xlu0.b32.cont [6/16] %v104, 128
    %3569 = vxpose.xlu0.b32.cont [7/16] %v105, 128
    %3570 = vxpose.xlu0.b32.cont [8/16] %v106, 128
    %3571 = vxpose.xlu0.b32.cont [9/16] 0.0, 128
    %3572 = vxpose.xlu0.b32.cont [10/16] 0.0, 128
    %3573 = vxpose.xlu0.b32.cont [11/16] 0.0, 128
    %3574 = vxpose.xlu0.b32.cont [12/16] 0.0, 128
    %3575 = vxpose.xlu0.b32.cont [13/16] 0.0, 128
    %3576 = vxpose.xlu0.b32.cont [14/16] 0.0, 128
    %3577 = vxpose.xlu0.b32.cont [15/16] 0.0, 128
    %3578 = vxpose.xlu0.b32.end [16/16] 0.0, 128
    %v3579 = vpop.trf.xlu0
    %v3580 = vpop.trf.xlu0
    %v3581 = vpop.trf.xlu0
    %v3582 = vpop.trf.xlu0
    %v3583 = vpop.trf.xlu0
    %v3584 = vpop.trf.xlu0
    %v3585 = vpop.trf.xlu0
    %v3586 = vpop.trf.xlu0
    %v3587 = vpop.trf.xlu0
    %v3588 = vpop.trf.xlu0
    %v3589 = vpop.trf.xlu0
    %v3590 = vpop.trf.xlu0
    %v3591 = vpop.trf.xlu0
    %v3592 = vpop.trf.xlu0
    %v3593 = vpop.trf.xlu0
    %v3594 = vpop.trf.xlu0
    %v3596 = vsel %vm374, %v3579, 0
    %v3598 = vand.u32 %v198, 4294901760
    %3599 = vmatprep.subr.mxu0 %v3598
    %v3600 = vand.u32 %v197, 4294901760
    %3601 = vmatpush1.msra.mxu0 %v3600
    %v3602 = vand.u32 %v202, 4294901760
    %3603 = vmatprep.subr.mxu0 %v3602
    %v3604 = vand.u32 %v201, 4294901760
    %3605 = vmatpush1.msra.mxu0 %v3604
    %v3606 = vand.u32 %v206, 4294901760
    %3607 = vmatprep.subr.mxu0 %v3606
    %v3608 = vand.u32 %v205, 4294901760
    %3609 = vmatpush1.msra.mxu0 %v3608
    %v3610 = vand.u32 %v210, 4294901760
    %3611 = vmatprep.subr.mxu0 %v3610
    %v3612 = vand.u32 %v209, 4294901760
    %3613 = vmatpush1.msra.mxu0 %v3612
    %v3614 = vand.u32 %v214, 4294901760
    %3615 = vmatprep.subr.mxu0 %v3614
    %v3616 = vand.u32 %v213, 4294901760
    %3617 = vmatpush1.msra.mxu0 %v3616
    %v3618 = vand.u32 %v218, 4294901760
    %3619 = vmatprep.subr.mxu0 %v3618
    %v3620 = vand.u32 %v217, 4294901760
    %3621 = vmatpush1.msra.mxu0 %v3620
    %v3622 = vand.u32 %v222, 4294901760
    %3623 = vmatprep.subr.mxu0 %v3622
    %v3624 = vand.u32 %v221, 4294901760
    %3625 = vmatpush1.msra.mxu0 %v3624
    %v3626 = vand.u32 %v226, 4294901760
    %3627 = vmatprep.subr.mxu0 %v3626
    %v3628 = vand.u32 %v225, 4294901760
    %3629 = vmatpush1.msra.mxu0 %v3628
    %3630 = vmatprep.subr.mxu0 0.0
    %3631 = vmatpush1.msra.mxu0 0.0
    %3632 = vmatprep.subr.mxu0 0.0
    %3633 = vmatpush1.msra.mxu0 0.0
    %3634 = vmatprep.subr.mxu0 0.0
    %3635 = vmatpush1.msra.mxu0 0.0
    %3636 = vmatprep.subr.mxu0 0.0
    %3637 = vmatpush1.msra.mxu0 0.0
    %3638 = vmatprep.subr.mxu0 0.0
    %3639 = vmatpush1.msra.mxu0 0.0
    %3640 = vmatprep.subr.mxu0 0.0
    %3641 = vmatpush1.msra.mxu0 0.0
    %3642 = vmatprep.subr.mxu0 0.0
    %3643 = vmatpush1.msra.mxu0 0.0
    %3644 = vmatprep.subr.mxu0 0.0
    %3645 = vmatpush1.msra.mxu0 0.0
    %3646 = vmatprep.subr.mxu0 0.0
    %3647 = vmatpush1.msra.mxu0 0.0
    %3648 = vmatprep.subr.mxu0 0.0
    %3649 = vmatpush1.msra.mxu0 0.0
    %3650 = vmatprep.subr.mxu0 0.0
    %3651 = vmatpush1.msra.mxu0 0.0
    %3652 = vmatprep.subr.mxu0 0.0
    %3653 = vmatpush1.msra.mxu0 0.0
    %3654 = vmatprep.subr.mxu0 0.0
    %3655 = vmatpush1.msra.mxu0 0.0
    %3656 = vmatprep.subr.mxu0 0.0
    %3657 = vmatpush1.msra.mxu0 0.0
    %3658 = vmatprep.subr.mxu0 0.0
    %3659 = vmatpush1.msra.mxu0 0.0
    %3660 = vmatprep.subr.mxu0 0.0
    %3661 = vmatpush1.msra.mxu0 0.0
    %3662 = vmatprep.subr.mxu0 0.0
    %3663 = vmatpush1.msra.mxu0 0.0
    %3664 = vmatprep.subr.mxu0 0.0
    %3665 = vmatpush1.msra.mxu0 0.0
    %3666 = vmatprep.subr.mxu0 0.0
    %3667 = vmatpush1.msra.mxu0 0.0
    %3668 = vmatprep.subr.mxu0 0.0
    %3669 = vmatpush1.msra.mxu0 0.0
    %3670 = vmatprep.subr.mxu0 0.0
    %3671 = vmatpush1.msra.mxu0 0.0
    %3672 = vmatprep.subr.mxu0 0.0
    %3673 = vmatpush1.msra.mxu0 0.0
    %3674 = vmatprep.subr.mxu0 0.0
    %3675 = vmatpush1.msra.mxu0 0.0
    %3676 = vmatprep.subr.mxu0 0.0
    %3677 = vmatpush1.msra.mxu0 0.0
    %3678 = vmatprep.mubr.f32.mxu0 0.0
    %v3679 = vand.u32 %v3596, 4294901760
    %v3680 = vsub.f32 %v3596, %v3679
    %v3681 = vand.u32 %v3680, 4294901760
    %v3682 = vsub.f32 %v3680, %v3681
    %v3683 = vand.u32 %v3682, 4294901760
    %3684 = vmatmul.mubr.f32.gmra.mrb[0].mxu0 %v3683
    %v3685 = vpop.f32.mrb[0].mxu0
    %v3686 = vadd.f32 0.0, %v3685
    %v3687 = vpop.f32.mrb[0].mxu0
    %v3688 = vadd.f32 0.0, %v3687
    %3689 = vdwg.mxu0
    %v3690 = vand.u32 %v198, 4294901760
    %v3691 = vsub.f32 %v198, %v3690
    %v3692 = vand.u32 %v3691, 4294901760
    %v3693 = vsub.f32 %v3691, %v3692
    %v3694 = vand.u32 %v3693, 4294901760
    %3695 = vmatprep.subr.mxu0 %v3694
    %v3696 = vand.u32 %v197, 4294901760
    %v3697 = vsub.f32 %v197, %v3696
    %v3698 = vand.u32 %v3697, 4294901760
    %v3699 = vsub.f32 %v3697, %v3698
    %v3700 = vand.u32 %v3699, 4294901760
    %3701 = vmatpush1.msra.mxu0 %v3700
    %v3702 = vand.u32 %v202, 4294901760
    %v3703 = vsub.f32 %v202, %v3702
    %v3704 = vand.u32 %v3703, 4294901760
    %v3705 = vsub.f32 %v3703, %v3704
    %v3706 = vand.u32 %v3705, 4294901760
    %3707 = vmatprep.subr.mxu0 %v3706
    %v3708 = vand.u32 %v201, 4294901760
    %v3709 = vsub.f32 %v201, %v3708
    %v3710 = vand.u32 %v3709, 4294901760
    %v3711 = vsub.f32 %v3709, %v3710
    %v3712 = vand.u32 %v3711, 4294901760
    %3713 = vmatpush1.msra.mxu0 %v3712
    %v3714 = vand.u32 %v206, 4294901760
    %v3715 = vsub.f32 %v206, %v3714
    %v3716 = vand.u32 %v3715, 4294901760
    %v3717 = vsub.f32 %v3715, %v3716
    %v3718 = vand.u32 %v3717, 4294901760
    %3719 = vmatprep.subr.mxu0 %v3718
    %v3720 = vand.u32 %v205, 4294901760
    %v3721 = vsub.f32 %v205, %v3720
    %v3722 = vand.u32 %v3721, 4294901760
    %v3723 = vsub.f32 %v3721, %v3722
    %v3724 = vand.u32 %v3723, 4294901760
    %3725 = vmatpush1.msra.mxu0 %v3724
    %v3726 = vand.u32 %v210, 4294901760
    %v3727 = vsub.f32 %v210, %v3726
    %v3728 = vand.u32 %v3727, 4294901760
    %v3729 = vsub.f32 %v3727, %v3728
    %v3730 = vand.u32 %v3729, 4294901760
    %3731 = vmatprep.subr.mxu0 %v3730
    %v3732 = vand.u32 %v209, 4294901760
    %v3733 = vsub.f32 %v209, %v3732
    %v3734 = vand.u32 %v3733, 4294901760
    %v3735 = vsub.f32 %v3733, %v3734
    %v3736 = vand.u32 %v3735, 4294901760
    %3737 = vmatpush1.msra.mxu0 %v3736
    %v3738 = vand.u32 %v214, 4294901760
    %v3739 = vsub.f32 %v214, %v3738
    %v3740 = vand.u32 %v3739, 4294901760
    %v3741 = vsub.f32 %v3739, %v3740
    %v3742 = vand.u32 %v3741, 4294901760
    %3743 = vmatprep.subr.mxu0 %v3742
    %v3744 = vand.u32 %v213, 4294901760
    %v3745 = vsub.f32 %v213, %v3744
    %v3746 = vand.u32 %v3745, 4294901760
    %v3747 = vsub.f32 %v3745, %v3746
    %v3748 = vand.u32 %v3747, 4294901760
    %3749 = vmatpush1.msra.mxu0 %v3748
    %v3750 = vand.u32 %v218, 4294901760
    %v3751 = vsub.f32 %v218, %v3750
    %v3752 = vand.u32 %v3751, 4294901760
    %v3753 = vsub.f32 %v3751, %v3752
    %v3754 = vand.u32 %v3753, 4294901760
    %3755 = vmatprep.subr.mxu0 %v3754
    %v3756 = vand.u32 %v217, 4294901760
    %v3757 = vsub.f32 %v217, %v3756
    %v3758 = vand.u32 %v3757, 4294901760
    %v3759 = vsub.f32 %v3757, %v3758
    %v3760 = vand.u32 %v3759, 4294901760
    %3761 = vmatpush1.msra.mxu0 %v3760
    %v3762 = vand.u32 %v222, 4294901760
    %v3763 = vsub.f32 %v222, %v3762
    %v3764 = vand.u32 %v3763, 4294901760
    %v3765 = vsub.f32 %v3763, %v3764
    %v3766 = vand.u32 %v3765, 4294901760
    %3767 = vmatprep.subr.mxu0 %v3766
    %v3768 = vand.u32 %v221, 4294901760
    %v3769 = vsub.f32 %v221, %v3768
    %v3770 = vand.u32 %v3769, 4294901760
    %v3771 = vsub.f32 %v3769, %v3770
    %v3772 = vand.u32 %v3771, 4294901760
    %3773 = vmatpush1.msra.mxu0 %v3772
    %v3774 = vand.u32 %v226, 4294901760
    %v3775 = vsub.f32 %v226, %v3774
    %v3776 = vand.u32 %v3775, 4294901760
    %v3777 = vsub.f32 %v3775, %v3776
    %v3778 = vand.u32 %v3777, 4294901760
    %3779 = vmatprep.subr.mxu0 %v3778
    %v3780 = vand.u32 %v225, 4294901760
    %v3781 = vsub.f32 %v225, %v3780
    %v3782 = vand.u32 %v3781, 4294901760
    %v3783 = vsub.f32 %v3781, %v3782
    %v3784 = vand.u32 %v3783, 4294901760
    %3785 = vmatpush1.msra.mxu0 %v3784
    %3786 = vmatprep.subr.mxu0 0.0
    %3787 = vmatpush1.msra.mxu0 0.0
    %3788 = vmatprep.subr.mxu0 0.0
    %3789 = vmatpush1.msra.mxu0 0.0
    %3790 = vmatprep.subr.mxu0 0.0
    %3791 = vmatpush1.msra.mxu0 0.0
    %3792 = vmatprep.subr.mxu0 0.0
    %3793 = vmatpush1.msra.mxu0 0.0
    %3794 = vmatprep.subr.mxu0 0.0
    %3795 = vmatpush1.msra.mxu0 0.0
    %3796 = vmatprep.subr.mxu0 0.0
    %3797 = vmatpush1.msra.mxu0 0.0
    %3798 = vmatprep.subr.mxu0 0.0
    %3799 = vmatpush1.msra.mxu0 0.0
    %3800 = vmatprep.subr.mxu0 0.0
    %3801 = vmatpush1.msra.mxu0 0.0
    %3802 = vmatprep.subr.mxu0 0.0
    %3803 = vmatpush1.msra.mxu0 0.0
    %3804 = vmatprep.subr.mxu0 0.0
    %3805 = vmatpush1.msra.mxu0 0.0
    %3806 = vmatprep.subr.mxu0 0.0
    %3807 = vmatpush1.msra.mxu0 0.0
    %3808 = vmatprep.subr.mxu0 0.0
    %3809 = vmatpush1.msra.mxu0 0.0
    %3810 = vmatprep.subr.mxu0 0.0
    %3811 = vmatpush1.msra.mxu0 0.0
    %3812 = vmatprep.subr.mxu0 0.0
    %3813 = vmatpush1.msra.mxu0 0.0
    %3814 = vmatprep.subr.mxu0 0.0
    %3815 = vmatpush1.msra.mxu0 0.0
    %3816 = vmatprep.subr.mxu0 0.0
    %3817 = vmatpush1.msra.mxu0 0.0
    %3818 = vmatprep.subr.mxu0 0.0
    %3819 = vmatpush1.msra.mxu0 0.0
    %3820 = vmatprep.subr.mxu0 0.0
    %3821 = vmatpush1.msra.mxu0 0.0
    %3822 = vmatprep.subr.mxu0 0.0
    %3823 = vmatpush1.msra.mxu0 0.0
    %3824 = vmatprep.subr.mxu0 0.0
    %3825 = vmatpush1.msra.mxu0 0.0
    %3826 = vmatprep.subr.mxu0 0.0
    %3827 = vmatpush1.msra.mxu0 0.0
    %3828 = vmatprep.subr.mxu0 0.0
    %3829 = vmatpush1.msra.mxu0 0.0
    %3830 = vmatprep.subr.mxu0 0.0
    %3831 = vmatpush1.msra.mxu0 0.0
    %3832 = vmatprep.subr.mxu0 0.0
    %3833 = vmatpush1.msra.mxu0 0.0
    %3834 = vmatprep.mubr.f32.mxu0 0.0
    %v3835 = vand.u32 %v3596, 4294901760
    %3836 = vmatmul.mubr.f32.gmra.mrb[0].mxu0 %v3835
    %v3837 = vpop.f32.mrb[0].mxu0
    %v3838 = vadd.f32 %v3686, %v3837
    %v3839 = vpop.f32.mrb[0].mxu0
    %v3840 = vadd.f32 %v3688, %v3839
    %3841 = vdwg.mxu0
    %v3842 = vand.u32 %v198, 4294901760
    %v3843 = vsub.f32 %v198, %v3842
    %3844 = vmatprep.subr.mxu0 %v3843
    %v3845 = vand.u32 %v197, 4294901760
    %v3846 = vsub.f32 %v197, %v3845
    %3847 = vmatpush1.msra.mxu0 %v3846
    %v3848 = vand.u32 %v202, 4294901760
    %v3849 = vsub.f32 %v202, %v3848
    %3850 = vmatprep.subr.mxu0 %v3849
    %v3851 = vand.u32 %v201, 4294901760
    %v3852 = vsub.f32 %v201, %v3851
    %3853 = vmatpush1.msra.mxu0 %v3852
    %v3854 = vand.u32 %v206, 4294901760
    %v3855 = vsub.f32 %v206, %v3854
    %3856 = vmatprep.subr.mxu0 %v3855
    %v3857 = vand.u32 %v205, 4294901760
    %v3858 = vsub.f32 %v205, %v3857
    %3859 = vmatpush1.msra.mxu0 %v3858
    %v3860 = vand.u32 %v210, 4294901760
    %v3861 = vsub.f32 %v210, %v3860
    %3862 = vmatprep.subr.mxu0 %v3861
    %v3863 = vand.u32 %v209, 4294901760
    %v3864 = vsub.f32 %v209, %v3863
    %3865 = vmatpush1.msra.mxu0 %v3864
    %v3866 = vand.u32 %v214, 4294901760
    %v3867 = vsub.f32 %v214, %v3866
    %3868 = vmatprep.subr.mxu0 %v3867
    %v3869 = vand.u32 %v213, 4294901760
    %v3870 = vsub.f32 %v213, %v3869
    %3871 = vmatpush1.msra.mxu0 %v3870
    %v3872 = vand.u32 %v218, 4294901760
    %v3873 = vsub.f32 %v218, %v3872
    %3874 = vmatprep.subr.mxu0 %v3873
    %v3875 = vand.u32 %v217, 4294901760
    %v3876 = vsub.f32 %v217, %v3875
    %3877 = vmatpush1.msra.mxu0 %v3876
    %v3878 = vand.u32 %v222, 4294901760
    %v3879 = vsub.f32 %v222, %v3878
    %3880 = vmatprep.subr.mxu0 %v3879
    %v3881 = vand.u32 %v221, 4294901760
    %v3882 = vsub.f32 %v221, %v3881
    %3883 = vmatpush1.msra.mxu0 %v3882
    %v3884 = vand.u32 %v226, 4294901760
    %v3885 = vsub.f32 %v226, %v3884
    %3886 = vmatprep.subr.mxu0 %v3885
    %v3887 = vand.u32 %v225, 4294901760
    %v3888 = vsub.f32 %v225, %v3887
    %3889 = vmatpush1.msra.mxu0 %v3888
    %3890 = vmatprep.subr.mxu0 0.0
    %3891 = vmatpush1.msra.mxu0 0.0
    %3892 = vmatprep.subr.mxu0 0.0
    %3893 = vmatpush1.msra.mxu0 0.0
    %3894 = vmatprep.subr.mxu0 0.0
    %3895 = vmatpush1.msra.mxu0 0.0
    %3896 = vmatprep.subr.mxu0 0.0
    %3897 = vmatpush1.msra.mxu0 0.0
    %3898 = vmatprep.subr.mxu0 0.0
    %3899 = vmatpush1.msra.mxu0 0.0
    %3900 = vmatprep.subr.mxu0 0.0
    %3901 = vmatpush1.msra.mxu0 0.0
    %3902 = vmatprep.subr.mxu0 0.0
    %3903 = vmatpush1.msra.mxu0 0.0
    %3904 = vmatprep.subr.mxu0 0.0
    %3905 = vmatpush1.msra.mxu0 0.0
    %3906 = vmatprep.subr.mxu0 0.0
    %3907 = vmatpush1.msra.mxu0 0.0
    %3908 = vmatprep.subr.mxu0 0.0
    %3909 = vmatpush1.msra.mxu0 0.0
    %3910 = vmatprep.subr.mxu0 0.0
    %3911 = vmatpush1.msra.mxu0 0.0
    %3912 = vmatprep.subr.mxu0 0.0
    %3913 = vmatpush1.msra.mxu0 0.0
    %3914 = vmatprep.subr.mxu0 0.0
    %3915 = vmatpush1.msra.mxu0 0.0
    %3916 = vmatprep.subr.mxu0 0.0
    %3917 = vmatpush1.msra.mxu0 0.0
    %3918 = vmatprep.subr.mxu0 0.0
    %3919 = vmatpush1.msra.mxu0 0.0
    %3920 = vmatprep.subr.mxu0 0.0
    %3921 = vmatpush1.msra.mxu0 0.0
    %3922 = vmatprep.subr.mxu0 0.0
    %3923 = vmatpush1.msra.mxu0 0.0
    %3924 = vmatprep.subr.mxu0 0.0
    %3925 = vmatpush1.msra.mxu0 0.0
    %3926 = vmatprep.subr.mxu0 0.0
    %3927 = vmatpush1.msra.mxu0 0.0
    %3928 = vmatprep.subr.mxu0 0.0
    %3929 = vmatpush1.msra.mxu0 0.0
    %3930 = vmatprep.subr.mxu0 0.0
    %3931 = vmatpush1.msra.mxu0 0.0
    %3932 = vmatprep.subr.mxu0 0.0
    %3933 = vmatpush1.msra.mxu0 0.0
    %3934 = vmatprep.subr.mxu0 0.0
    %3935 = vmatpush1.msra.mxu0 0.0
    %3936 = vmatprep.subr.mxu0 0.0
    %3937 = vmatpush1.msra.mxu0 0.0
    %3938 = vmatprep.mubr.f32.mxu0 0.0
    %v3939 = vand.u32 %v3596, 4294901760
    %v3940 = vsub.f32 %v3596, %v3939
    %3941 = vmatmul.mubr.f32.gmra.mrb[0].mxu0 %v3940
    %v3942 = vpop.f32.mrb[0].mxu0
    %v3943 = vadd.f32 %v3838, %v3942
    %v3944 = vpop.f32.mrb[0].mxu0
    %v3945 = vadd.f32 %v3840, %v3944
    %3946 = vdwg.mxu0
    %v3947 = vand.u32 %v198, 4294901760
    %3948 = vmatprep.subr.mxu0 %v3947
    %v3949 = vand.u32 %v197, 4294901760
    %3950 = vmatpush1.msra.mxu0 %v3949
    %v3951 = vand.u32 %v202, 4294901760
    %3952 = vmatprep.subr.mxu0 %v3951
    %v3953 = vand.u32 %v201, 4294901760
    %3954 = vmatpush1.msra.mxu0 %v3953
    %v3955 = vand.u32 %v206, 4294901760
    %3956 = vmatprep.subr.mxu0 %v3955
    %v3957 = vand.u32 %v205, 4294901760
    %3958 = vmatpush1.msra.mxu0 %v3957
    %v3959 = vand.u32 %v210, 4294901760
    %3960 = vmatprep.subr.mxu0 %v3959
    %v3961 = vand.u32 %v209, 4294901760
    %3962 = vmatpush1.msra.mxu0 %v3961
    %v3963 = vand.u32 %v214, 4294901760
    %3964 = vmatprep.subr.mxu0 %v3963
    %v3965 = vand.u32 %v213, 4294901760
    %3966 = vmatpush1.msra.mxu0 %v3965
    %v3967 = vand.u32 %v218, 4294901760
    %3968 = vmatprep.subr.mxu0 %v3967
    %v3969 = vand.u32 %v217, 4294901760
    %3970 = vmatpush1.msra.mxu0 %v3969
    %v3971 = vand.u32 %v222, 4294901760
    %3972 = vmatprep.subr.mxu0 %v3971
    %v3973 = vand.u32 %v221, 4294901760
    %3974 = vmatpush1.msra.mxu0 %v3973
    %v3975 = vand.u32 %v226, 4294901760
    %3976 = vmatprep.subr.mxu0 %v3975
    %v3977 = vand.u32 %v225, 4294901760
    %3978 = vmatpush1.msra.mxu0 %v3977
    %3979 = vmatprep.subr.mxu0 0.0
    %3980 = vmatpush1.msra.mxu0 0.0
    %3981 = vmatprep.subr.mxu0 0.0
    %3982 = vmatpush1.msra.mxu0 0.0
    %3983 = vmatprep.subr.mxu0 0.0
    %3984 = vmatpush1.msra.mxu0 0.0
    %3985 = vmatprep.subr.mxu0 0.0
    %3986 = vmatpush1.msra.mxu0 0.0
    %3987 = vmatprep.subr.mxu0 0.0
    %3988 = vmatpush1.msra.mxu0 0.0
    %3989 = vmatprep.subr.mxu0 0.0
    %3990 = vmatpush1.msra.mxu0 0.0
    %3991 = vmatprep.subr.mxu0 0.0
    %3992 = vmatpush1.msra.mxu0 0.0
    %3993 = vmatprep.subr.mxu0 0.0
    %3994 = vmatpush1.msra.mxu0 0.0
    %3995 = vmatprep.subr.mxu0 0.0
    %3996 = vmatpush1.msra.mxu0 0.0
    %3997 = vmatprep.subr.mxu0 0.0
    %3998 = vmatpush1.msra.mxu0 0.0
    %3999 = vmatprep.subr.mxu0 0.0
    %4000 = vmatpush1.msra.mxu0 0.0
    %4001 = vmatprep.subr.mxu0 0.0
    %4002 = vmatpush1.msra.mxu0 0.0
    %4003 = vmatprep.subr.mxu0 0.0
    %4004 = vmatpush1.msra.mxu0 0.0
    %4005 = vmatprep.subr.mxu0 0.0
    %4006 = vmatpush1.msra.mxu0 0.0
    %4007 = vmatprep.subr.mxu0 0.0
    %4008 = vmatpush1.msra.mxu0 0.0
    %4009 = vmatprep.subr.mxu0 0.0
    %4010 = vmatpush1.msra.mxu0 0.0
    %4011 = vmatprep.subr.mxu0 0.0
    %4012 = vmatpush1.msra.mxu0 0.0
    %4013 = vmatprep.subr.mxu0 0.0
    %4014 = vmatpush1.msra.mxu0 0.0
    %4015 = vmatprep.subr.mxu0 0.0
    %4016 = vmatpush1.msra.mxu0 0.0
    %4017 = vmatprep.subr.mxu0 0.0
    %4018 = vmatpush1.msra.mxu0 0.0
    %4019 = vmatprep.subr.mxu0 0.0
    %4020 = vmatpush1.msra.mxu0 0.0
    %4021 = vmatprep.subr.mxu0 0.0
    %4022 = vmatpush1.msra.mxu0 0.0
    %4023 = vmatprep.subr.mxu0 0.0
    %4024 = vmatpush1.msra.mxu0 0.0
    %4025 = vmatprep.subr.mxu0 0.0
    %4026 = vmatpush1.msra.mxu0 0.0
    %4027 = vmatprep.mubr.f32.mxu0 0.0
    %v4028 = vand.u32 %v3596, 4294901760
    %v4029 = vsub.f32 %v3596, %v4028
    %v4030 = vand.u32 %v4029, 4294901760
    %4031 = vmatmul.mubr.f32.gmra.mrb[0].mxu0 %v4030
    %v4032 = vpop.f32.mrb[0].mxu0
    %v4033 = vadd.f32 %v3943, %v4032
    %v4034 = vpop.f32.mrb[0].mxu0
    %v4035 = vadd.f32 %v3945, %v4034
    %4036 = vdwg.mxu0
    %v4037 = vand.u32 %v198, 4294901760
    %v4038 = vsub.f32 %v198, %v4037
    %v4039 = vand.u32 %v4038, 4294901760
    %4040 = vmatprep.subr.mxu0 %v4039
    %v4041 = vand.u32 %v197, 4294901760
    %v4042 = vsub.f32 %v197, %v4041
    %v4043 = vand.u32 %v4042, 4294901760
    %4044 = vmatpush1.msra.mxu0 %v4043
    %v4045 = vand.u32 %v202, 4294901760
    %v4046 = vsub.f32 %v202, %v4045
    %v4047 = vand.u32 %v4046, 4294901760
    %4048 = vmatprep.subr.mxu0 %v4047
    %v4049 = vand.u32 %v201, 4294901760
    %v4050 = vsub.f32 %v201, %v4049
    %v4051 = vand.u32 %v4050, 4294901760
    %4052 = vmatpush1.msra.mxu0 %v4051
    %v4053 = vand.u32 %v206, 4294901760
    %v4054 = vsub.f32 %v206, %v4053
    %v4055 = vand.u32 %v4054, 4294901760
    %4056 = vmatprep.subr.mxu0 %v4055
    %v4057 = vand.u32 %v205, 4294901760
    %v4058 = vsub.f32 %v205, %v4057
    %v4059 = vand.u32 %v4058, 4294901760
    %4060 = vmatpush1.msra.mxu0 %v4059
    %v4061 = vand.u32 %v210, 4294901760
    %v4062 = vsub.f32 %v210, %v4061
    %v4063 = vand.u32 %v4062, 4294901760
    %4064 = vmatprep.subr.mxu0 %v4063
    %v4065 = vand.u32 %v209, 4294901760
    %v4066 = vsub.f32 %v209, %v4065
    %v4067 = vand.u32 %v4066, 4294901760
    %4068 = vmatpush1.msra.mxu0 %v4067
    %v4069 = vand.u32 %v214, 4294901760
    %v4070 = vsub.f32 %v214, %v4069
    %v4071 = vand.u32 %v4070, 4294901760
    %4072 = vmatprep.subr.mxu0 %v4071
    %v4073 = vand.u32 %v213, 4294901760
    %v4074 = vsub.f32 %v213, %v4073
    %v4075 = vand.u32 %v4074, 4294901760
    %4076 = vmatpush1.msra.mxu0 %v4075
    %v4077 = vand.u32 %v218, 4294901760
    %v4078 = vsub.f32 %v218, %v4077
    %v4079 = vand.u32 %v4078, 4294901760
    %4080 = vmatprep.subr.mxu0 %v4079
    %v4081 = vand.u32 %v217, 4294901760
    %v4082 = vsub.f32 %v217, %v4081
    %v4083 = vand.u32 %v4082, 4294901760
    %4084 = vmatpush1.msra.mxu0 %v4083
    %v4085 = vand.u32 %v222, 4294901760
    %v4086 = vsub.f32 %v222, %v4085
    %v4087 = vand.u32 %v4086, 4294901760
    %4088 = vmatprep.subr.mxu0 %v4087
    %v4089 = vand.u32 %v221, 4294901760
    %v4090 = vsub.f32 %v221, %v4089
    %v4091 = vand.u32 %v4090, 4294901760
    %4092 = vmatpush1.msra.mxu0 %v4091
    %v4093 = vand.u32 %v226, 4294901760
    %v4094 = vsub.f32 %v226, %v4093
    %v4095 = vand.u32 %v4094, 4294901760
    %4096 = vmatprep.subr.mxu0 %v4095
    %v4097 = vand.u32 %v225, 4294901760
    %v4098 = vsub.f32 %v225, %v4097
    %v4099 = vand.u32 %v4098, 4294901760
    %4100 = vmatpush1.msra.mxu0 %v4099
    %4101 = vmatprep.subr.mxu0 0.0
    %4102 = vmatpush1.msra.mxu0 0.0
    %4103 = vmatprep.subr.mxu0 0.0
    %4104 = vmatpush1.msra.mxu0 0.0
    %4105 = vmatprep.subr.mxu0 0.0
    %4106 = vmatpush1.msra.mxu0 0.0
    %4107 = vmatprep.subr.mxu0 0.0
    %4108 = vmatpush1.msra.mxu0 0.0
    %4109 = vmatprep.subr.mxu0 0.0
    %4110 = vmatpush1.msra.mxu0 0.0
    %4111 = vmatprep.subr.mxu0 0.0
    %4112 = vmatpush1.msra.mxu0 0.0
    %4113 = vmatprep.subr.mxu0 0.0
    %4114 = vmatpush1.msra.mxu0 0.0
    %4115 = vmatprep.subr.mxu0 0.0
    %4116 = vmatpush1.msra.mxu0 0.0
    %4117 = vmatprep.subr.mxu0 0.0
    %4118 = vmatpush1.msra.mxu0 0.0
    %4119 = vmatprep.subr.mxu0 0.0
    %4120 = vmatpush1.msra.mxu0 0.0
    %4121 = vmatprep.subr.mxu0 0.0
    %4122 = vmatpush1.msra.mxu0 0.0
    %4123 = vmatprep.subr.mxu0 0.0
    %4124 = vmatpush1.msra.mxu0 0.0
    %4125 = vmatprep.subr.mxu0 0.0
    %4126 = vmatpush1.msra.mxu0 0.0
    %4127 = vmatprep.subr.mxu0 0.0
    %4128 = vmatpush1.msra.mxu0 0.0
    %4129 = vmatprep.subr.mxu0 0.0
    %4130 = vmatpush1.msra.mxu0 0.0
    %4131 = vmatprep.subr.mxu0 0.0
    %4132 = vmatpush1.msra.mxu0 0.0
    %4133 = vmatprep.subr.mxu0 0.0
    %4134 = vmatpush1.msra.mxu0 0.0
    %4135 = vmatprep.subr.mxu0 0.0
    %4136 = vmatpush1.msra.mxu0 0.0
    %4137 = vmatprep.subr.mxu0 0.0
    %4138 = vmatpush1.msra.mxu0 0.0
    %4139 = vmatprep.subr.mxu0 0.0
    %4140 = vmatpush1.msra.mxu0 0.0
    %4141 = vmatprep.subr.mxu0 0.0
    %4142 = vmatpush1.msra.mxu0 0.0
    %4143 = vmatprep.subr.mxu0 0.0
    %4144 = vmatpush1.msra.mxu0 0.0
    %4145 = vmatprep.subr.mxu0 0.0
    %4146 = vmatpush1.msra.mxu0 0.0
    %4147 = vmatprep.subr.mxu0 0.0
    %4148 = vmatpush1.msra.mxu0 0.0
    %4149 = vmatprep.mubr.f32.mxu0 0.0
    %v4150 = vand.u32 %v3596, 4294901760
    %4151 = vmatmul.mubr.f32.gmra.mrb[0].mxu0 %v4150
    %v4152 = vpop.f32.mrb[0].mxu0
    %v4153 = vadd.f32 %v4033, %v4152
    %v4154 = vpop.f32.mrb[0].mxu0
    %v4155 = vadd.f32 %v4035, %v4154
    %4156 = vdwg.mxu0
    %v4157 = vand.u32 %v198, 4294901760
    %4158 = vmatprep.subr.mxu0 %v4157
    %v4159 = vand.u32 %v197, 4294901760
    %4160 = vmatpush1.msra.mxu0 %v4159
    %v4161 = vand.u32 %v202, 4294901760
    %4162 = vmatprep.subr.mxu0 %v4161
    %v4163 = vand.u32 %v201, 4294901760
    %4164 = vmatpush1.msra.mxu0 %v4163
    %v4165 = vand.u32 %v206, 4294901760
    %4166 = vmatprep.subr.mxu0 %v4165
    %v4167 = vand.u32 %v205, 4294901760
    %4168 = vmatpush1.msra.mxu0 %v4167
    %v4169 = vand.u32 %v210, 4294901760
    %4170 = vmatprep.subr.mxu0 %v4169
    %v4171 = vand.u32 %v209, 4294901760
    %4172 = vmatpush1.msra.mxu0 %v4171
    %v4173 = vand.u32 %v214, 4294901760
    %4174 = vmatprep.subr.mxu0 %v4173
    %v4175 = vand.u32 %v213, 4294901760
    %4176 = vmatpush1.msra.mxu0 %v4175
    %v4177 = vand.u32 %v218, 4294901760
    %4178 = vmatprep.subr.mxu0 %v4177
    %v4179 = vand.u32 %v217, 4294901760
    %4180 = vmatpush1.msra.mxu0 %v4179
    %v4181 = vand.u32 %v222, 4294901760
    %4182 = vmatprep.subr.mxu0 %v4181
    %v4183 = vand.u32 %v221, 4294901760
    %4184 = vmatpush1.msra.mxu0 %v4183
    %v4185 = vand.u32 %v226, 4294901760
    %4186 = vmatprep.subr.mxu0 %v4185
    %v4187 = vand.u32 %v225, 4294901760
    %4188 = vmatpush1.msra.mxu0 %v4187
    %4189 = vmatprep.subr.mxu0 0.0
    %4190 = vmatpush1.msra.mxu0 0.0
    %4191 = vmatprep.subr.mxu0 0.0
    %4192 = vmatpush1.msra.mxu0 0.0
    %4193 = vmatprep.subr.mxu0 0.0
    %4194 = vmatpush1.msra.mxu0 0.0
    %4195 = vmatprep.subr.mxu0 0.0
    %4196 = vmatpush1.msra.mxu0 0.0
    %4197 = vmatprep.subr.mxu0 0.0
    %4198 = vmatpush1.msra.mxu0 0.0
    %4199 = vmatprep.subr.mxu0 0.0
    %4200 = vmatpush1.msra.mxu0 0.0
    %4201 = vmatprep.subr.mxu0 0.0
    %4202 = vmatpush1.msra.mxu0 0.0
    %4203 = vmatprep.subr.mxu0 0.0
    %4204 = vmatpush1.msra.mxu0 0.0
    %4205 = vmatprep.subr.mxu0 0.0
    %4206 = vmatpush1.msra.mxu0 0.0
    %4207 = vmatprep.subr.mxu0 0.0
    %4208 = vmatpush1.msra.mxu0 0.0
    %4209 = vmatprep.subr.mxu0 0.0
    %4210 = vmatpush1.msra.mxu0 0.0
    %4211 = vmatprep.subr.mxu0 0.0
    %4212 = vmatpush1.msra.mxu0 0.0
    %4213 = vmatprep.subr.mxu0 0.0
    %4214 = vmatpush1.msra.mxu0 0.0
    %4215 = vmatprep.subr.mxu0 0.0
    %4216 = vmatpush1.msra.mxu0 0.0
    %4217 = vmatprep.subr.mxu0 0.0
    %4218 = vmatpush1.msra.mxu0 0.0
    %4219 = vmatprep.subr.mxu0 0.0
    %4220 = vmatpush1.msra.mxu0 0.0
    %4221 = vmatprep.subr.mxu0 0.0
    %4222 = vmatpush1.msra.mxu0 0.0
    %4223 = vmatprep.subr.mxu0 0.0
    %4224 = vmatpush1.msra.mxu0 0.0
    %4225 = vmatprep.subr.mxu0 0.0
    %4226 = vmatpush1.msra.mxu0 0.0
    %4227 = vmatprep.subr.mxu0 0.0
    %4228 = vmatpush1.msra.mxu0 0.0
    %4229 = vmatprep.subr.mxu0 0.0
    %4230 = vmatpush1.msra.mxu0 0.0
    %4231 = vmatprep.subr.mxu0 0.0
    %4232 = vmatpush1.msra.mxu0 0.0
    %4233 = vmatprep.subr.mxu0 0.0
    %4234 = vmatpush1.msra.mxu0 0.0
    %4235 = vmatprep.subr.mxu0 0.0
    %4236 = vmatpush1.msra.mxu0 0.0
    %4237 = vmatprep.mubr.f32.mxu0 0.0
    %v4238 = vand.u32 %v3596, 4294901760
    %4239 = vmatmul.mubr.f32.gmra.mrb[0].mxu0 %v4238
    %v4240 = vpop.f32.mrb[0].mxu0
    %v4241 = vadd.f32 %v4153, %v4240
    %v4242 = vpop.f32.mrb[0].mxu0
    %v4243 = vadd.f32 %v4155, %v4242
    %4244 = vdwg.mxu0
    %v4245 = vand.u32 %v200, 4294901760
    %4246 = vmatprep.subr.mxu0 %v4245
    %v4247 = vand.u32 %v199, 4294901760
    %4248 = vmatpush1.msra.mxu0 %v4247
    %v4249 = vand.u32 %v204, 4294901760
    %4250 = vmatprep.subr.mxu0 %v4249
    %v4251 = vand.u32 %v203, 4294901760
    %4252 = vmatpush1.msra.mxu0 %v4251
    %v4253 = vand.u32 %v208, 4294901760
    %4254 = vmatprep.subr.mxu0 %v4253
    %v4255 = vand.u32 %v207, 4294901760
    %4256 = vmatpush1.msra.mxu0 %v4255
    %v4257 = vand.u32 %v212, 4294901760
    %4258 = vmatprep.subr.mxu0 %v4257
    %v4259 = vand.u32 %v211, 4294901760
    %4260 = vmatpush1.msra.mxu0 %v4259
    %v4261 = vand.u32 %v216, 4294901760
    %4262 = vmatprep.subr.mxu0 %v4261
    %v4263 = vand.u32 %v215, 4294901760
    %4264 = vmatpush1.msra.mxu0 %v4263
    %v4265 = vand.u32 %v220, 4294901760
    %4266 = vmatprep.subr.mxu0 %v4265
    %v4267 = vand.u32 %v219, 4294901760
    %4268 = vmatpush1.msra.mxu0 %v4267
    %v4269 = vand.u32 %v224, 4294901760
    %4270 = vmatprep.subr.mxu0 %v4269
    %v4271 = vand.u32 %v223, 4294901760
    %4272 = vmatpush1.msra.mxu0 %v4271
    %v4273 = vand.u32 %v228, 4294901760
    %4274 = vmatprep.subr.mxu0 %v4273
    %v4275 = vand.u32 %v227, 4294901760
    %4276 = vmatpush1.msra.mxu0 %v4275
    %4277 = vmatprep.subr.mxu0 0.0
    %4278 = vmatpush1.msra.mxu0 0.0
    %4279 = vmatprep.subr.mxu0 0.0
    %4280 = vmatpush1.msra.mxu0 0.0
    %4281 = vmatprep.subr.mxu0 0.0
    %4282 = vmatpush1.msra.mxu0 0.0
    %4283 = vmatprep.subr.mxu0 0.0
    %4284 = vmatpush1.msra.mxu0 0.0
    %4285 = vmatprep.subr.mxu0 0.0
    %4286 = vmatpush1.msra.mxu0 0.0
    %4287 = vmatprep.subr.mxu0 0.0
    %4288 = vmatpush1.msra.mxu0 0.0
    %4289 = vmatprep.subr.mxu0 0.0
    %4290 = vmatpush1.msra.mxu0 0.0
    %4291 = vmatprep.subr.mxu0 0.0
    %4292 = vmatpush1.msra.mxu0 0.0
    %4293 = vmatprep.subr.mxu0 0.0
    %4294 = vmatpush1.msra.mxu0 0.0
    %4295 = vmatprep.subr.mxu0 0.0
    %4296 = vmatpush1.msra.mxu0 0.0
    %4297 = vmatprep.subr.mxu0 0.0
    %4298 = vmatpush1.msra.mxu0 0.0
    %4299 = vmatprep.subr.mxu0 0.0
    %4300 = vmatpush1.msra.mxu0 0.0
    %4301 = vmatprep.subr.mxu0 0.0
    %4302 = vmatpush1.msra.mxu0 0.0
    %4303 = vmatprep.subr.mxu0 0.0
    %4304 = vmatpush1.msra.mxu0 0.0
    %4305 = vmatprep.subr.mxu0 0.0
    %4306 = vmatpush1.msra.mxu0 0.0
    %4307 = vmatprep.subr.mxu0 0.0
    %4308 = vmatpush1.msra.mxu0 0.0
    %4309 = vmatprep.subr.mxu0 0.0
    %4310 = vmatpush1.msra.mxu0 0.0
    %4311 = vmatprep.subr.mxu0 0.0
    %4312 = vmatpush1.msra.mxu0 0.0
    %4313 = vmatprep.subr.mxu0 0.0
    %4314 = vmatpush1.msra.mxu0 0.0
    %4315 = vmatprep.subr.mxu0 0.0
    %4316 = vmatpush1.msra.mxu0 0.0
    %4317 = vmatprep.subr.mxu0 0.0
    %4318 = vmatpush1.msra.mxu0 0.0
    %4319 = vmatprep.subr.mxu0 0.0
    %4320 = vmatpush1.msra.mxu0 0.0
    %4321 = vmatprep.subr.mxu0 0.0
    %4322 = vmatpush1.msra.mxu0 0.0
    %4323 = vmatprep.subr.mxu0 0.0
    %4324 = vmatpush1.msra.mxu0 0.0
    %4325 = vmatprep.mubr.f32.mxu0 0.0
    %v4326 = vand.u32 %v3596, 4294901760
    %v4327 = vsub.f32 %v3596, %v4326
    %v4328 = vand.u32 %v4327, 4294901760
    %v4329 = vsub.f32 %v4327, %v4328
    %v4330 = vand.u32 %v4329, 4294901760
    %4331 = vmatmul.mubr.f32.gmra.mrb[0].mxu0 %v4330
    %v4332 = vpop.f32.mrb[0].mxu0
    %v4333 = vadd.f32 0.0, %v4332
    %v4334 = vpop.f32.mrb[0].mxu0
    %v4335 = vadd.f32 0.0, %v4334
    %4336 = vdwg.mxu0
    %v4337 = vand.u32 %v200, 4294901760
    %v4338 = vsub.f32 %v200, %v4337
    %v4339 = vand.u32 %v4338, 4294901760
    %v4340 = vsub.f32 %v4338, %v4339
    %v4341 = vand.u32 %v4340, 4294901760
    %4342 = vmatprep.subr.mxu0 %v4341
    %v4343 = vand.u32 %v199, 4294901760
    %v4344 = vsub.f32 %v199, %v4343
    %v4345 = vand.u32 %v4344, 4294901760
    %v4346 = vsub.f32 %v4344, %v4345
    %v4347 = vand.u32 %v4346, 4294901760
    %4348 = vmatpush1.msra.mxu0 %v4347
    %v4349 = vand.u32 %v204, 4294901760
    %v4350 = vsub.f32 %v204, %v4349
    %v4351 = vand.u32 %v4350, 4294901760
    %v4352 = vsub.f32 %v4350, %v4351
    %v4353 = vand.u32 %v4352, 4294901760
    %4354 = vmatprep.subr.mxu0 %v4353
    %v4355 = vand.u32 %v203, 4294901760
    %v4356 = vsub.f32 %v203, %v4355
    %v4357 = vand.u32 %v4356, 4294901760
    %v4358 = vsub.f32 %v4356, %v4357
    %v4359 = vand.u32 %v4358, 4294901760
    %4360 = vmatpush1.msra.mxu0 %v4359
    %v4361 = vand.u32 %v208, 4294901760
    %v4362 = vsub.f32 %v208, %v4361
    %v4363 = vand.u32 %v4362, 4294901760
    %v4364 = vsub.f32 %v4362, %v4363
    %v4365 = vand.u32 %v4364, 4294901760
    %4366 = vmatprep.subr.mxu0 %v4365
    %v4367 = vand.u32 %v207, 4294901760
    %v4368 = vsub.f32 %v207, %v4367
    %v4369 = vand.u32 %v4368, 4294901760
    %v4370 = vsub.f32 %v4368, %v4369
    %v4371 = vand.u32 %v4370, 4294901760
    %4372 = vmatpush1.msra.mxu0 %v4371
    %v4373 = vand.u32 %v212, 4294901760
    %v4374 = vsub.f32 %v212, %v4373
    %v4375 = vand.u32 %v4374, 4294901760
    %v4376 = vsub.f32 %v4374, %v4375
    %v4377 = vand.u32 %v4376, 4294901760
    %4378 = vmatprep.subr.mxu0 %v4377
    %v4379 = vand.u32 %v211, 4294901760
    %v4380 = vsub.f32 %v211, %v4379
    %v4381 = vand.u32 %v4380, 4294901760
    %v4382 = vsub.f32 %v4380, %v4381
    %v4383 = vand.u32 %v4382, 4294901760
    %4384 = vmatpush1.msra.mxu0 %v4383
    %v4385 = vand.u32 %v216, 4294901760
    %v4386 = vsub.f32 %v216, %v4385
    %v4387 = vand.u32 %v4386, 4294901760
    %v4388 = vsub.f32 %v4386, %v4387
    %v4389 = vand.u32 %v4388, 4294901760
    %4390 = vmatprep.subr.mxu0 %v4389
    %v4391 = vand.u32 %v215, 4294901760
    %v4392 = vsub.f32 %v215, %v4391
    %v4393 = vand.u32 %v4392, 4294901760
    %v4394 = vsub.f32 %v4392, %v4393
    %v4395 = vand.u32 %v4394, 4294901760
    %4396 = vmatpush1.msra.mxu0 %v4395
    %v4397 = vand.u32 %v220, 4294901760
    %v4398 = vsub.f32 %v220, %v4397
    %v4399 = vand.u32 %v4398, 4294901760
    %v4400 = vsub.f32 %v4398, %v4399
    %v4401 = vand.u32 %v4400, 4294901760
    %4402 = vmatprep.subr.mxu0 %v4401
    %v4403 = vand.u32 %v219, 4294901760
    %v4404 = vsub.f32 %v219, %v4403
    %v4405 = vand.u32 %v4404, 4294901760
    %v4406 = vsub.f32 %v4404, %v4405
    %v4407 = vand.u32 %v4406, 4294901760
    %4408 = vmatpush1.msra.mxu0 %v4407
    %v4409 = vand.u32 %v224, 4294901760
    %v4410 = vsub.f32 %v224, %v4409
    %v4411 = vand.u32 %v4410, 4294901760
    %v4412 = vsub.f32 %v4410, %v4411
    %v4413 = vand.u32 %v4412, 4294901760
    %4414 = vmatprep.subr.mxu0 %v4413
    %v4415 = vand.u32 %v223, 4294901760
    %v4416 = vsub.f32 %v223, %v4415
    %v4417 = vand.u32 %v4416, 4294901760
    %v4418 = vsub.f32 %v4416, %v4417
    %v4419 = vand.u32 %v4418, 4294901760
    %4420 = vmatpush1.msra.mxu0 %v4419
    %v4421 = vand.u32 %v228, 4294901760
    %v4422 = vsub.f32 %v228, %v4421
    %v4423 = vand.u32 %v4422, 4294901760
    %v4424 = vsub.f32 %v4422, %v4423
    %v4425 = vand.u32 %v4424, 4294901760
    %4426 = vmatprep.subr.mxu0 %v4425
    %v4427 = vand.u32 %v227, 4294901760
    %v4428 = vsub.f32 %v227, %v4427
    %v4429 = vand.u32 %v4428, 4294901760
    %v4430 = vsub.f32 %v4428, %v4429
    %v4431 = vand.u32 %v4430, 4294901760
    %4432 = vmatpush1.msra.mxu0 %v4431
    %4433 = vmatprep.subr.mxu0 0.0
    %4434 = vmatpush1.msra.mxu0 0.0
    %4435 = vmatprep.subr.mxu0 0.0
    %4436 = vmatpush1.msra.mxu0 0.0
    %4437 = vmatprep.subr.mxu0 0.0
    %4438 = vmatpush1.msra.mxu0 0.0
    %4439 = vmatprep.subr.mxu0 0.0
    %4440 = vmatpush1.msra.mxu0 0.0
    %4441 = vmatprep.subr.mxu0 0.0
    %4442 = vmatpush1.msra.mxu0 0.0
    %4443 = vmatprep.subr.mxu0 0.0
    %4444 = vmatpush1.msra.mxu0 0.0
    %4445 = vmatprep.subr.mxu0 0.0
    %4446 = vmatpush1.msra.mxu0 0.0
    %4447 = vmatprep.subr.mxu0 0.0
    %4448 = vmatpush1.msra.mxu0 0.0
    %4449 = vmatprep.subr.mxu0 0.0
    %4450 = vmatpush1.msra.mxu0 0.0
    %4451 = vmatprep.subr.mxu0 0.0
    %4452 = vmatpush1.msra.mxu0 0.0
    %4453 = vmatprep.subr.mxu0 0.0
    %4454 = vmatpush1.msra.mxu0 0.0
    %4455 = vmatprep.subr.mxu0 0.0
    %4456 = vmatpush1.msra.mxu0 0.0
    %4457 = vmatprep.subr.mxu0 0.0
    %4458 = vmatpush1.msra.mxu0 0.0
    %4459 = vmatprep.subr.mxu0 0.0
    %4460 = vmatpush1.msra.mxu0 0.0
    %4461 = vmatprep.subr.mxu0 0.0
    %4462 = vmatpush1.msra.mxu0 0.0
    %4463 = vmatprep.subr.mxu0 0.0
    %4464 = vmatpush1.msra.mxu0 0.0
    %4465 = vmatprep.subr.mxu0 0.0
    %4466 = vmatpush1.msra.mxu0 0.0
    %4467 = vmatprep.subr.mxu0 0.0
    %4468 = vmatpush1.msra.mxu0 0.0
    %4469 = vmatprep.subr.mxu0 0.0
    %4470 = vmatpush1.msra.mxu0 0.0
    %4471 = vmatprep.subr.mxu0 0.0
    %4472 = vmatpush1.msra.mxu0 0.0
    %4473 = vmatprep.subr.mxu0 0.0
    %4474 = vmatpush1.msra.mxu0 0.0
    %4475 = vmatprep.subr.mxu0 0.0
    %4476 = vmatpush1.msra.mxu0 0.0
    %4477 = vmatprep.subr.mxu0 0.0
    %4478 = vmatpush1.msra.mxu0 0.0
    %4479 = vmatprep.subr.mxu0 0.0
    %4480 = vmatpush1.msra.mxu0 0.0
    %4481 = vmatprep.mubr.f32.mxu0 0.0
    %v4482 = vand.u32 %v3596, 4294901760
    %4483 = vmatmul.mubr.f32.gmra.mrb[0].mxu0 %v4482
    %v4484 = vpop.f32.mrb[0].mxu0
    %v4485 = vadd.f32 %v4333, %v4484
    %v4486 = vpop.f32.mrb[0].mxu0
    %v4487 = vadd.f32 %v4335, %v4486
    %4488 = vdwg.mxu0
    %v4489 = vand.u32 %v200, 4294901760
    %v4490 = vsub.f32 %v200, %v4489
    %4491 = vmatprep.subr.mxu0 %v4490
    %v4492 = vand.u32 %v199, 4294901760
    %v4493 = vsub.f32 %v199, %v4492
    %4494 = vmatpush1.msra.mxu0 %v4493
    %v4495 = vand.u32 %v204, 4294901760
    %v4496 = vsub.f32 %v204, %v4495
    %4497 = vmatprep.subr.mxu0 %v4496
    %v4498 = vand.u32 %v203, 4294901760
    %v4499 = vsub.f32 %v203, %v4498
    %4500 = vmatpush1.msra.mxu0 %v4499
    %v4501 = vand.u32 %v208, 4294901760
    %v4502 = vsub.f32 %v208, %v4501
    %4503 = vmatprep.subr.mxu0 %v4502
    %v4504 = vand.u32 %v207, 4294901760
    %v4505 = vsub.f32 %v207, %v4504
    %4506 = vmatpush1.msra.mxu0 %v4505
    %v4507 = vand.u32 %v212, 4294901760
    %v4508 = vsub.f32 %v212, %v4507
    %4509 = vmatprep.subr.mxu0 %v4508
    %v4510 = vand.u32 %v211, 4294901760
    %v4511 = vsub.f32 %v211, %v4510
    %4512 = vmatpush1.msra.mxu0 %v4511
    %v4513 = vand.u32 %v216, 4294901760
    %v4514 = vsub.f32 %v216, %v4513
    %4515 = vmatprep.subr.mxu0 %v4514
    %v4516 = vand.u32 %v215, 4294901760
    %v4517 = vsub.f32 %v215, %v4516
    %4518 = vmatpush1.msra.mxu0 %v4517
    %v4519 = vand.u32 %v220, 4294901760
    %v4520 = vsub.f32 %v220, %v4519
    %4521 = vmatprep.subr.mxu0 %v4520
    %v4522 = vand.u32 %v219, 4294901760
    %v4523 = vsub.f32 %v219, %v4522
    %4524 = vmatpush1.msra.mxu0 %v4523
    %v4525 = vand.u32 %v224, 4294901760
    %v4526 = vsub.f32 %v224, %v4525
    %4527 = vmatprep.subr.mxu0 %v4526
    %v4528 = vand.u32 %v223, 4294901760
    %v4529 = vsub.f32 %v223, %v4528
    %4530 = vmatpush1.msra.mxu0 %v4529
    %v4531 = vand.u32 %v228, 4294901760
    %v4532 = vsub.f32 %v228, %v4531
    %4533 = vmatprep.subr.mxu0 %v4532
    %v4534 = vand.u32 %v227, 4294901760
    %v4535 = vsub.f32 %v227, %v4534
    %4536 = vmatpush1.msra.mxu0 %v4535
    %4537 = vmatprep.subr.mxu0 0.0
    %4538 = vmatpush1.msra.mxu0 0.0
    %4539 = vmatprep.subr.mxu0 0.0
    %4540 = vmatpush1.msra.mxu0 0.0
    %4541 = vmatprep.subr.mxu0 0.0
    %4542 = vmatpush1.msra.mxu0 0.0
    %4543 = vmatprep.subr.mxu0 0.0
    %4544 = vmatpush1.msra.mxu0 0.0
    %4545 = vmatprep.subr.mxu0 0.0
    %4546 = vmatpush1.msra.mxu0 0.0
    %4547 = vmatprep.subr.mxu0 0.0
    %4548 = vmatpush1.msra.mxu0 0.0
    %4549 = vmatprep.subr.mxu0 0.0
    %4550 = vmatpush1.msra.mxu0 0.0
    %4551 = vmatprep.subr.mxu0 0.0
    %4552 = vmatpush1.msra.mxu0 0.0
    %4553 = vmatprep.subr.mxu0 0.0
    %4554 = vmatpush1.msra.mxu0 0.0
    %4555 = vmatprep.subr.mxu0 0.0
    %4556 = vmatpush1.msra.mxu0 0.0
    %4557 = vmatprep.subr.mxu0 0.0
    %4558 = vmatpush1.msra.mxu0 0.0
    %4559 = vmatprep.subr.mxu0 0.0
    %4560 = vmatpush1.msra.mxu0 0.0
    %4561 = vmatprep.subr.mxu0 0.0
    %4562 = vmatpush1.msra.mxu0 0.0
    %4563 = vmatprep.subr.mxu0 0.0
    %4564 = vmatpush1.msra.mxu0 0.0
    %4565 = vmatprep.subr.mxu0 0.0
    %4566 = vmatpush1.msra.mxu0 0.0
    %4567 = vmatprep.subr.mxu0 0.0
    %4568 = vmatpush1.msra.mxu0 0.0
    %4569 = vmatprep.subr.mxu0 0.0
    %4570 = vmatpush1.msra.mxu0 0.0
    %4571 = vmatprep.subr.mxu0 0.0
    %4572 = vmatpush1.msra.mxu0 0.0
    %4573 = vmatprep.subr.mxu0 0.0
    %4574 = vmatpush1.msra.mxu0 0.0
    %4575 = vmatprep.subr.mxu0 0.0
    %4576 = vmatpush1.msra.mxu0 0.0
    %4577 = vmatprep.subr.mxu0 0.0
    %4578 = vmatpush1.msra.mxu0 0.0
    %4579 = vmatprep.subr.mxu0 0.0
    %4580 = vmatpush1.msra.mxu0 0.0
    %4581 = vmatprep.subr.mxu0 0.0
    %4582 = vmatpush1.msra.mxu0 0.0
    %4583 = vmatprep.subr.mxu0 0.0
    %4584 = vmatpush1.msra.mxu0 0.0
    %4585 = vmatprep.mubr.f32.mxu0 0.0
    %v4586 = vand.u32 %v3596, 4294901760
    %v4587 = vsub.f32 %v3596, %v4586
    %4588 = vmatmul.mubr.f32.gmra.mrb[0].mxu0 %v4587
    %v4589 = vpop.f32.mrb[0].mxu0
    %v4590 = vadd.f32 %v4485, %v4589
    %v4591 = vpop.f32.mrb[0].mxu0
    %v4592 = vadd.f32 %v4487, %v4591
    %4593 = vdwg.mxu0
    %v4594 = vand.u32 %v200, 4294901760
    %4595 = vmatprep.subr.mxu0 %v4594
    %v4596 = vand.u32 %v199, 4294901760
    %4597 = vmatpush1.msra.mxu0 %v4596
    %v4598 = vand.u32 %v204, 4294901760
    %4599 = vmatprep.subr.mxu0 %v4598
    %v4600 = vand.u32 %v203, 4294901760
    %4601 = vmatpush1.msra.mxu0 %v4600
    %v4602 = vand.u32 %v208, 4294901760
    %4603 = vmatprep.subr.mxu0 %v4602
    %v4604 = vand.u32 %v207, 4294901760
    %4605 = vmatpush1.msra.mxu0 %v4604
    %v4606 = vand.u32 %v212, 4294901760
    %4607 = vmatprep.subr.mxu0 %v4606
    %v4608 = vand.u32 %v211, 4294901760
    %4609 = vmatpush1.msra.mxu0 %v4608
    %v4610 = vand.u32 %v216, 4294901760
    %4611 = vmatprep.subr.mxu0 %v4610
    %v4612 = vand.u32 %v215, 4294901760
    %4613 = vmatpush1.msra.mxu0 %v4612
    %v4614 = vand.u32 %v220, 4294901760
    %4615 = vmatprep.subr.mxu0 %v4614
    %v4616 = vand.u32 %v219, 4294901760
    %4617 = vmatpush1.msra.mxu0 %v4616
    %v4618 = vand.u32 %v224, 4294901760
    %4619 = vmatprep.subr.mxu0 %v4618
    %v4620 = vand.u32 %v223, 4294901760
    %4621 = vmatpush1.msra.mxu0 %v4620
    %v4622 = vand.u32 %v228, 4294901760
    %4623 = vmatprep.subr.mxu0 %v4622
    %v4624 = vand.u32 %v227, 4294901760
    %4625 = vmatpush1.msra.mxu0 %v4624
    %4626 = vmatprep.subr.mxu0 0.0
    %4627 = vmatpush1.msra.mxu0 0.0
    %4628 = vmatprep.subr.mxu0 0.0
    %4629 = vmatpush1.msra.mxu0 0.0
    %4630 = vmatprep.subr.mxu0 0.0
    %4631 = vmatpush1.msra.mxu0 0.0
    %4632 = vmatprep.subr.mxu0 0.0
    %4633 = vmatpush1.msra.mxu0 0.0
    %4634 = vmatprep.subr.mxu0 0.0
    %4635 = vmatpush1.msra.mxu0 0.0
    %4636 = vmatprep.subr.mxu0 0.0
    %4637 = vmatpush1.msra.mxu0 0.0
    %4638 = vmatprep.subr.mxu0 0.0
    %4639 = vmatpush1.msra.mxu0 0.0
    %4640 = vmatprep.subr.mxu0 0.0
    %4641 = vmatpush1.msra.mxu0 0.0
    %4642 = vmatprep.subr.mxu0 0.0
    %4643 = vmatpush1.msra.mxu0 0.0
    %4644 = vmatprep.subr.mxu0 0.0
    %4645 = vmatpush1.msra.mxu0 0.0
    %4646 = vmatprep.subr.mxu0 0.0
    %4647 = vmatpush1.msra.mxu0 0.0
    %4648 = vmatprep.subr.mxu0 0.0
    %4649 = vmatpush1.msra.mxu0 0.0
    %4650 = vmatprep.subr.mxu0 0.0
    %4651 = vmatpush1.msra.mxu0 0.0
    %4652 = vmatprep.subr.mxu0 0.0
    %4653 = vmatpush1.msra.mxu0 0.0
    %4654 = vmatprep.subr.mxu0 0.0
    %4655 = vmatpush1.msra.mxu0 0.0
    %4656 = vmatprep.subr.mxu0 0.0
    %4657 = vmatpush1.msra.mxu0 0.0
    %4658 = vmatprep.subr.mxu0 0.0
    %4659 = vmatpush1.msra.mxu0 0.0
    %4660 = vmatprep.subr.mxu0 0.0
    %4661 = vmatpush1.msra.mxu0 0.0
    %4662 = vmatprep.subr.mxu0 0.0
    %4663 = vmatpush1.msra.mxu0 0.0
    %4664 = vmatprep.subr.mxu0 0.0
    %4665 = vmatpush1.msra.mxu0 0.0
    %4666 = vmatprep.subr.mxu0 0.0
    %4667 = vmatpush1.msra.mxu0 0.0
    %4668 = vmatprep.subr.mxu0 0.0
    %4669 = vmatpush1.msra.mxu0 0.0
    %4670 = vmatprep.subr.mxu0 0.0
    %4671 = vmatpush1.msra.mxu0 0.0
    %4672 = vmatprep.subr.mxu0 0.0
    %4673 = vmatpush1.msra.mxu0 0.0
    %4674 = vmatprep.mubr.f32.mxu0 0.0
    %v4675 = vand.u32 %v3596, 4294901760
    %v4676 = vsub.f32 %v3596, %v4675
    %v4677 = vand.u32 %v4676, 4294901760
    %4678 = vmatmul.mubr.f32.gmra.mrb[0].mxu0 %v4677
    %v4679 = vpop.f32.mrb[0].mxu0
    %v4680 = vadd.f32 %v4590, %v4679
    %v4681 = vpop.f32.mrb[0].mxu0
    %v4682 = vadd.f32 %v4592, %v4681
    %4683 = vdwg.mxu0
    %v4684 = vand.u32 %v200, 4294901760
    %v4685 = vsub.f32 %v200, %v4684
    %v4686 = vand.u32 %v4685, 4294901760
    %4687 = vmatprep.subr.mxu0 %v4686
    %v4688 = vand.u32 %v199, 4294901760
    %v4689 = vsub.f32 %v199, %v4688
    %v4690 = vand.u32 %v4689, 4294901760
    %4691 = vmatpush1.msra.mxu0 %v4690
    %v4692 = vand.u32 %v204, 4294901760
    %v4693 = vsub.f32 %v204, %v4692
    %v4694 = vand.u32 %v4693, 4294901760
    %4695 = vmatprep.subr.mxu0 %v4694
    %v4696 = vand.u32 %v203, 4294901760
    %v4697 = vsub.f32 %v203, %v4696
    %v4698 = vand.u32 %v4697, 4294901760
    %4699 = vmatpush1.msra.mxu0 %v4698
    %v4700 = vand.u32 %v208, 4294901760
    %v4701 = vsub.f32 %v208, %v4700
    %v4702 = vand.u32 %v4701, 4294901760
    %4703 = vmatprep.subr.mxu0 %v4702
    %v4704 = vand.u32 %v207, 4294901760
    %v4705 = vsub.f32 %v207, %v4704
    %v4706 = vand.u32 %v4705, 4294901760
    %4707 = vmatpush1.msra.mxu0 %v4706
    %v4708 = vand.u32 %v212, 4294901760
    %v4709 = vsub.f32 %v212, %v4708
    %v4710 = vand.u32 %v4709, 4294901760
    %4711 = vmatprep.subr.mxu0 %v4710
    %v4712 = vand.u32 %v211, 4294901760
    %v4713 = vsub.f32 %v211, %v4712
    %v4714 = vand.u32 %v4713, 4294901760
    %4715 = vmatpush1.msra.mxu0 %v4714
    %v4716 = vand.u32 %v216, 4294901760
    %v4717 = vsub.f32 %v216, %v4716
    %v4718 = vand.u32 %v4717, 4294901760
    %4719 = vmatprep.subr.mxu0 %v4718
    %v4720 = vand.u32 %v215, 4294901760
    %v4721 = vsub.f32 %v215, %v4720
    %v4722 = vand.u32 %v4721, 4294901760
    %4723 = vmatpush1.msra.mxu0 %v4722
    %v4724 = vand.u32 %v220, 4294901760
    %v4725 = vsub.f32 %v220, %v4724
    %v4726 = vand.u32 %v4725, 4294901760
    %4727 = vmatprep.subr.mxu0 %v4726
    %v4728 = vand.u32 %v219, 4294901760
    %v4729 = vsub.f32 %v219, %v4728
    %v4730 = vand.u32 %v4729, 4294901760
    %4731 = vmatpush1.msra.mxu0 %v4730
    %v4732 = vand.u32 %v224, 4294901760
    %v4733 = vsub.f32 %v224, %v4732
    %v4734 = vand.u32 %v4733, 4294901760
    %4735 = vmatprep.subr.mxu0 %v4734
    %v4736 = vand.u32 %v223, 4294901760
    %v4737 = vsub.f32 %v223, %v4736
    %v4738 = vand.u32 %v4737, 4294901760
    %4739 = vmatpush1.msra.mxu0 %v4738
    %v4740 = vand.u32 %v228, 4294901760
    %v4741 = vsub.f32 %v228, %v4740
    %v4742 = vand.u32 %v4741, 4294901760
    %4743 = vmatprep.subr.mxu0 %v4742
    %v4744 = vand.u32 %v227, 4294901760
    %v4745 = vsub.f32 %v227, %v4744
    %v4746 = vand.u32 %v4745, 4294901760
    %4747 = vmatpush1.msra.mxu0 %v4746
    %4748 = vmatprep.subr.mxu0 0.0
    %4749 = vmatpush1.msra.mxu0 0.0
    %4750 = vmatprep.subr.mxu0 0.0
    %4751 = vmatpush1.msra.mxu0 0.0
    %4752 = vmatprep.subr.mxu0 0.0
    %4753 = vmatpush1.msra.mxu0 0.0
    %4754 = vmatprep.subr.mxu0 0.0
    %4755 = vmatpush1.msra.mxu0 0.0
    %4756 = vmatprep.subr.mxu0 0.0
    %4757 = vmatpush1.msra.mxu0 0.0
    %4758 = vmatprep.subr.mxu0 0.0
    %4759 = vmatpush1.msra.mxu0 0.0
    %4760 = vmatprep.subr.mxu0 0.0
    %4761 = vmatpush1.msra.mxu0 0.0
    %4762 = vmatprep.subr.mxu0 0.0
    %4763 = vmatpush1.msra.mxu0 0.0
    %4764 = vmatprep.subr.mxu0 0.0
    %4765 = vmatpush1.msra.mxu0 0.0
    %4766 = vmatprep.subr.mxu0 0.0
    %4767 = vmatpush1.msra.mxu0 0.0
    %4768 = vmatprep.subr.mxu0 0.0
    %4769 = vmatpush1.msra.mxu0 0.0
    %4770 = vmatprep.subr.mxu0 0.0
    %4771 = vmatpush1.msra.mxu0 0.0
    %4772 = vmatprep.subr.mxu0 0.0
    %4773 = vmatpush1.msra.mxu0 0.0
    %4774 = vmatprep.subr.mxu0 0.0
    %4775 = vmatpush1.msra.mxu0 0.0
    %4776 = vmatprep.subr.mxu0 0.0
    %4777 = vmatpush1.msra.mxu0 0.0
    %4778 = vmatprep.subr.mxu0 0.0
    %4779 = vmatpush1.msra.mxu0 0.0
    %4780 = vmatprep.subr.mxu0 0.0
    %4781 = vmatpush1.msra.mxu0 0.0
    %4782 = vmatprep.subr.mxu0 0.0
    %4783 = vmatpush1.msra.mxu0 0.0
    %4784 = vmatprep.subr.mxu0 0.0
    %4785 = vmatpush1.msra.mxu0 0.0
    %4786 = vmatprep.subr.mxu0 0.0
    %4787 = vmatpush1.msra.mxu0 0.0
    %4788 = vmatprep.subr.mxu0 0.0
    %4789 = vmatpush1.msra.mxu0 0.0
    %4790 = vmatprep.subr.mxu0 0.0
    %4791 = vmatpush1.msra.mxu0 0.0
    %4792 = vmatprep.subr.mxu0 0.0
    %4793 = vmatpush1.msra.mxu0 0.0
    %4794 = vmatprep.subr.mxu0 0.0
    %4795 = vmatpush1.msra.mxu0 0.0
    %4796 = vmatprep.mubr.f32.mxu0 0.0
    %v4797 = vand.u32 %v3596, 4294901760
    %4798 = vmatmul.mubr.f32.gmra.mrb[0].mxu0 %v4797
    %v4799 = vpop.f32.mrb[0].mxu0
    %v4800 = vadd.f32 %v4680, %v4799
    %v4801 = vpop.f32.mrb[0].mxu0
    %v4802 = vadd.f32 %v4682, %v4801
    %4803 = vdwg.mxu0
    %v4804 = vand.u32 %v200, 4294901760
    %4805 = vmatprep.subr.mxu0 %v4804
    %v4806 = vand.u32 %v199, 4294901760
    %4807 = vmatpush1.msra.mxu0 %v4806
    %v4808 = vand.u32 %v204, 4294901760
    %4809 = vmatprep.subr.mxu0 %v4808
    %v4810 = vand.u32 %v203, 4294901760
    %4811 = vmatpush1.msra.mxu0 %v4810
    %v4812 = vand.u32 %v208, 4294901760
    %4813 = vmatprep.subr.mxu0 %v4812
    %v4814 = vand.u32 %v207, 4294901760
    %4815 = vmatpush1.msra.mxu0 %v4814
    %v4816 = vand.u32 %v212, 4294901760
    %4817 = vmatprep.subr.mxu0 %v4816
    %v4818 = vand.u32 %v211, 4294901760
    %4819 = vmatpush1.msra.mxu0 %v4818
    %v4820 = vand.u32 %v216, 4294901760
    %4821 = vmatprep.subr.mxu0 %v4820
    %v4822 = vand.u32 %v215, 4294901760
    %4823 = vmatpush1.msra.mxu0 %v4822
    %v4824 = vand.u32 %v220, 4294901760
    %4825 = vmatprep.subr.mxu0 %v4824
    %v4826 = vand.u32 %v219, 4294901760
    %4827 = vmatpush1.msra.mxu0 %v4826
    %v4828 = vand.u32 %v224, 4294901760
    %4829 = vmatprep.subr.mxu0 %v4828
    %v4830 = vand.u32 %v223, 4294901760
    %4831 = vmatpush1.msra.mxu0 %v4830
    %v4832 = vand.u32 %v228, 4294901760
    %4833 = vmatprep.subr.mxu0 %v4832
    %v4834 = vand.u32 %v227, 4294901760
    %4835 = vmatpush1.msra.mxu0 %v4834
    %4836 = vmatprep.subr.mxu0 0.0
    %4837 = vmatpush1.msra.mxu0 0.0
    %4838 = vmatprep.subr.mxu0 0.0
    %4839 = vmatpush1.msra.mxu0 0.0
    %4840 = vmatprep.subr.mxu0 0.0
    %4841 = vmatpush1.msra.mxu0 0.0
    %4842 = vmatprep.subr.mxu0 0.0
    %4843 = vmatpush1.msra.mxu0 0.0
    %4844 = vmatprep.subr.mxu0 0.0
    %4845 = vmatpush1.msra.mxu0 0.0
    %4846 = vmatprep.subr.mxu0 0.0
    %4847 = vmatpush1.msra.mxu0 0.0
    %4848 = vmatprep.subr.mxu0 0.0
    %4849 = vmatpush1.msra.mxu0 0.0
    %4850 = vmatprep.subr.mxu0 0.0
    %4851 = vmatpush1.msra.mxu0 0.0
    %4852 = vmatprep.subr.mxu0 0.0
    %4853 = vmatpush1.msra.mxu0 0.0
    %4854 = vmatprep.subr.mxu0 0.0
    %4855 = vmatpush1.msra.mxu0 0.0
    %4856 = vmatprep.subr.mxu0 0.0
    %4857 = vmatpush1.msra.mxu0 0.0
    %4858 = vmatprep.subr.mxu0 0.0
    %4859 = vmatpush1.msra.mxu0 0.0
    %4860 = vmatprep.subr.mxu0 0.0
    %4861 = vmatpush1.msra.mxu0 0.0
    %4862 = vmatprep.subr.mxu0 0.0
    %4863 = vmatpush1.msra.mxu0 0.0
    %4864 = vmatprep.subr.mxu0 0.0
    %4865 = vmatpush1.msra.mxu0 0.0
    %4866 = vmatprep.subr.mxu0 0.0
    %4867 = vmatpush1.msra.mxu0 0.0
    %4868 = vmatprep.subr.mxu0 0.0
    %4869 = vmatpush1.msra.mxu0 0.0
    %4870 = vmatprep.subr.mxu0 0.0
    %4871 = vmatpush1.msra.mxu0 0.0
    %4872 = vmatprep.subr.mxu0 0.0
    %4873 = vmatpush1.msra.mxu0 0.0
    %4874 = vmatprep.subr.mxu0 0.0
    %4875 = vmatpush1.msra.mxu0 0.0
    %4876 = vmatprep.subr.mxu0 0.0
    %4877 = vmatpush1.msra.mxu0 0.0
    %4878 = vmatprep.subr.mxu0 0.0
    %4879 = vmatpush1.msra.mxu0 0.0
    %4880 = vmatprep.subr.mxu0 0.0
    %4881 = vmatpush1.msra.mxu0 0.0
    %4882 = vmatprep.subr.mxu0 0.0
    %4883 = vmatpush1.msra.mxu0 0.0
    %4884 = vmatprep.mubr.f32.mxu0 0.0
    %v4885 = vand.u32 %v3596, 4294901760
    %4886 = vmatmul.mubr.f32.gmra.mrb[0].mxu0 %v4885
    %v4887 = vpop.f32.mrb[0].mxu0
    %v4888 = vadd.f32 %v4800, %v4887
    %v4889 = vpop.f32.mrb[0].mxu0
    %v4890 = vadd.f32 %v4802, %v4889
    %4891 = vdwg.mxu0
    %v4892 = vand.u32 %v311, 4294901760
    %4893 = vmatprep.subr.mxu0 %v4892
    %v4894 = vand.u32 %v310, 4294901760
    %4895 = vmatpush1.msra.mxu0 %v4894
    %v4896 = vand.u32 %v315, 4294901760
    %4897 = vmatprep.subr.mxu0 %v4896
    %v4898 = vand.u32 %v314, 4294901760
    %4899 = vmatpush1.msra.mxu0 %v4898
    %v4900 = vand.u32 %v319, 4294901760
    %4901 = vmatprep.subr.mxu0 %v4900
    %v4902 = vand.u32 %v318, 4294901760
    %4903 = vmatpush1.msra.mxu0 %v4902
    %v4904 = vand.u32 %v323, 4294901760
    %4905 = vmatprep.subr.mxu0 %v4904
    %v4906 = vand.u32 %v322, 4294901760
    %4907 = vmatpush1.msra.mxu0 %v4906
    %v4908 = vand.u32 %v327, 4294901760
    %4909 = vmatprep.subr.mxu0 %v4908
    %v4910 = vand.u32 %v326, 4294901760
    %4911 = vmatpush1.msra.mxu0 %v4910
    %v4912 = vand.u32 %v331, 4294901760
    %4913 = vmatprep.subr.mxu0 %v4912
    %v4914 = vand.u32 %v330, 4294901760
    %4915 = vmatpush1.msra.mxu0 %v4914
    %v4916 = vand.u32 %v335, 4294901760
    %4917 = vmatprep.subr.mxu0 %v4916
    %v4918 = vand.u32 %v334, 4294901760
    %4919 = vmatpush1.msra.mxu0 %v4918
    %v4920 = vand.u32 %v339, 4294901760
    %4921 = vmatprep.subr.mxu0 %v4920
    %v4922 = vand.u32 %v338, 4294901760
    %4923 = vmatpush1.msra.mxu0 %v4922
    %4924 = vmatprep.subr.mxu0 0.0
    %4925 = vmatpush1.msra.mxu0 0.0
    %4926 = vmatprep.subr.mxu0 0.0
    %4927 = vmatpush1.msra.mxu0 0.0
    %4928 = vmatprep.subr.mxu0 0.0
    %4929 = vmatpush1.msra.mxu0 0.0
    %4930 = vmatprep.subr.mxu0 0.0
    %4931 = vmatpush1.msra.mxu0 0.0
    %4932 = vmatprep.subr.mxu0 0.0
    %4933 = vmatpush1.msra.mxu0 0.0
    %4934 = vmatprep.subr.mxu0 0.0
    %4935 = vmatpush1.msra.mxu0 0.0
    %4936 = vmatprep.subr.mxu0 0.0
    %4937 = vmatpush1.msra.mxu0 0.0
    %4938 = vmatprep.subr.mxu0 0.0
    %4939 = vmatpush1.msra.mxu0 0.0
    %4940 = vmatprep.subr.mxu0 0.0
    %4941 = vmatpush1.msra.mxu0 0.0
    %4942 = vmatprep.subr.mxu0 0.0
    %4943 = vmatpush1.msra.mxu0 0.0
    %4944 = vmatprep.subr.mxu0 0.0
    %4945 = vmatpush1.msra.mxu0 0.0
    %4946 = vmatprep.subr.mxu0 0.0
    %4947 = vmatpush1.msra.mxu0 0.0
    %4948 = vmatprep.subr.mxu0 0.0
    %4949 = vmatpush1.msra.mxu0 0.0
    %4950 = vmatprep.subr.mxu0 0.0
    %4951 = vmatpush1.msra.mxu0 0.0
    %4952 = vmatprep.subr.mxu0 0.0
    %4953 = vmatpush1.msra.mxu0 0.0
    %4954 = vmatprep.subr.mxu0 0.0
    %4955 = vmatpush1.msra.mxu0 0.0
    %4956 = vmatprep.subr.mxu0 0.0
    %4957 = vmatpush1.msra.mxu0 0.0
    %4958 = vmatprep.subr.mxu0 0.0
    %4959 = vmatpush1.msra.mxu0 0.0
    %4960 = vmatprep.subr.mxu0 0.0
    %4961 = vmatpush1.msra.mxu0 0.0
    %4962 = vmatprep.subr.mxu0 0.0
    %4963 = vmatpush1.msra.mxu0 0.0
    %4964 = vmatprep.subr.mxu0 0.0
    %4965 = vmatpush1.msra.mxu0 0.0
    %4966 = vmatprep.subr.mxu0 0.0
    %4967 = vmatpush1.msra.mxu0 0.0
    %4968 = vmatprep.subr.mxu0 0.0
    %4969 = vmatpush1.msra.mxu0 0.0
    %4970 = vmatprep.subr.mxu0 0.0
    %4971 = vmatpush1.msra.mxu0 0.0
    %4972 = vmatprep.mubr.f32.mxu0 0.0
    %v4973 = vand.u32 %v3596, 4294901760
    %v4974 = vsub.f32 %v3596, %v4973
    %v4975 = vand.u32 %v4974, 4294901760
    %v4976 = vsub.f32 %v4974, %v4975
    %v4977 = vand.u32 %v4976, 4294901760
    %4978 = vmatmul.mubr.f32.gmra.mrb[0].mxu0 %v4977
    %v4979 = vpop.f32.mrb[0].mxu0
    %v4980 = vadd.f32 0.0, %v4979
    %v4981 = vpop.f32.mrb[0].mxu0
    %v4982 = vadd.f32 0.0, %v4981
    %4983 = vdwg.mxu0
    %v4984 = vand.u32 %v311, 4294901760
    %v4985 = vsub.f32 %v311, %v4984
    %v4986 = vand.u32 %v4985, 4294901760
    %v4987 = vsub.f32 %v4985, %v4986
    %v4988 = vand.u32 %v4987, 4294901760
    %4989 = vmatprep.subr.mxu0 %v4988
    %v4990 = vand.u32 %v310, 4294901760
    %v4991 = vsub.f32 %v310, %v4990
    %v4992 = vand.u32 %v4991, 4294901760
    %v4993 = vsub.f32 %v4991, %v4992
    %v4994 = vand.u32 %v4993, 4294901760
    %4995 = vmatpush1.msra.mxu0 %v4994
    %v4996 = vand.u32 %v315, 4294901760
    %v4997 = vsub.f32 %v315, %v4996
    %v4998 = vand.u32 %v4997, 4294901760
    %v4999 = vsub.f32 %v4997, %v4998
    %v5000 = vand.u32 %v4999, 4294901760
    %5001 = vmatprep.subr.mxu0 %v5000
    %v5002 = vand.u32 %v314, 4294901760
    %v5003 = vsub.f32 %v314, %v5002
    %v5004 = vand.u32 %v5003, 4294901760
    %v5005 = vsub.f32 %v5003, %v5004
    %v5006 = vand.u32 %v5005, 4294901760
    %5007 = vmatpush1.msra.mxu0 %v5006
    %v5008 = vand.u32 %v319, 4294901760
    %v5009 = vsub.f32 %v319, %v5008
    %v5010 = vand.u32 %v5009, 4294901760
    %v5011 = vsub.f32 %v5009, %v5010
    %v5012 = vand.u32 %v5011, 4294901760
    %5013 = vmatprep.subr.mxu0 %v5012
    %v5014 = vand.u32 %v318, 4294901760
    %v5015 = vsub.f32 %v318, %v5014
    %v5016 = vand.u32 %v5015, 4294901760
    %v5017 = vsub.f32 %v5015, %v5016
    %v5018 = vand.u32 %v5017, 4294901760
    %5019 = vmatpush1.msra.mxu0 %v5018
    %v5020 = vand.u32 %v323, 4294901760
    %v5021 = vsub.f32 %v323, %v5020
    %v5022 = vand.u32 %v5021, 4294901760
    %v5023 = vsub.f32 %v5021, %v5022
    %v5024 = vand.u32 %v5023, 4294901760
    %5025 = vmatprep.subr.mxu0 %v5024
    %v5026 = vand.u32 %v322, 4294901760
    %v5027 = vsub.f32 %v322, %v5026
    %v5028 = vand.u32 %v5027, 4294901760
    %v5029 = vsub.f32 %v5027, %v5028
    %v5030 = vand.u32 %v5029, 4294901760
    %5031 = vmatpush1.msra.mxu0 %v5030
    %v5032 = vand.u32 %v327, 4294901760
    %v5033 = vsub.f32 %v327, %v5032
    %v5034 = vand.u32 %v5033, 4294901760
    %v5035 = vsub.f32 %v5033, %v5034
    %v5036 = vand.u32 %v5035, 4294901760
    %5037 = vmatprep.subr.mxu0 %v5036
    %v5038 = vand.u32 %v326, 4294901760
    %v5039 = vsub.f32 %v326, %v5038
    %v5040 = vand.u32 %v5039, 4294901760
    %v5041 = vsub.f32 %v5039, %v5040
    %v5042 = vand.u32 %v5041, 4294901760
    %5043 = vmatpush1.msra.mxu0 %v5042
    %v5044 = vand.u32 %v331, 4294901760
    %v5045 = vsub.f32 %v331, %v5044
    %v5046 = vand.u32 %v5045, 4294901760
    %v5047 = vsub.f32 %v5045, %v5046
    %v5048 = vand.u32 %v5047, 4294901760
    %5049 = vmatprep.subr.mxu0 %v5048
    %v5050 = vand.u32 %v330, 4294901760
    %v5051 = vsub.f32 %v330, %v5050
    %v5052 = vand.u32 %v5051, 4294901760
    %v5053 = vsub.f32 %v5051, %v5052
    %v5054 = vand.u32 %v5053, 4294901760
    %5055 = vmatpush1.msra.mxu0 %v5054
    %v5056 = vand.u32 %v335, 4294901760
    %v5057 = vsub.f32 %v335, %v5056
    %v5058 = vand.u32 %v5057, 4294901760
    %v5059 = vsub.f32 %v5057, %v5058
    %v5060 = vand.u32 %v5059, 4294901760
    %5061 = vmatprep.subr.mxu0 %v5060
    %v5062 = vand.u32 %v334, 4294901760
    %v5063 = vsub.f32 %v334, %v5062
    %v5064 = vand.u32 %v5063, 4294901760
    %v5065 = vsub.f32 %v5063, %v5064
    %v5066 = vand.u32 %v5065, 4294901760
    %5067 = vmatpush1.msra.mxu0 %v5066
    %v5068 = vand.u32 %v339, 4294901760
    %v5069 = vsub.f32 %v339, %v5068
    %v5070 = vand.u32 %v5069, 4294901760
    %v5071 = vsub.f32 %v5069, %v5070
    %v5072 = vand.u32 %v5071, 4294901760
    %5073 = vmatprep.subr.mxu0 %v5072
    %v5074 = vand.u32 %v338, 4294901760
    %v5075 = vsub.f32 %v338, %v5074
    %v5076 = vand.u32 %v5075, 4294901760
    %v5077 = vsub.f32 %v5075, %v5076
    %v5078 = vand.u32 %v5077, 4294901760
    %5079 = vmatpush1.msra.mxu0 %v5078
    %5080 = vmatprep.subr.mxu0 0.0
    %5081 = vmatpush1.msra.mxu0 0.0
    %5082 = vmatprep.subr.mxu0 0.0
    %5083 = vmatpush1.msra.mxu0 0.0
    %5084 = vmatprep.subr.mxu0 0.0
    %5085 = vmatpush1.msra.mxu0 0.0
    %5086 = vmatprep.subr.mxu0 0.0
    %5087 = vmatpush1.msra.mxu0 0.0
    %5088 = vmatprep.subr.mxu0 0.0
    %5089 = vmatpush1.msra.mxu0 0.0
    %5090 = vmatprep.subr.mxu0 0.0
    %5091 = vmatpush1.msra.mxu0 0.0
    %5092 = vmatprep.subr.mxu0 0.0
    %5093 = vmatpush1.msra.mxu0 0.0
    %5094 = vmatprep.subr.mxu0 0.0
    %5095 = vmatpush1.msra.mxu0 0.0
    %5096 = vmatprep.subr.mxu0 0.0
    %5097 = vmatpush1.msra.mxu0 0.0
    %5098 = vmatprep.subr.mxu0 0.0
    %5099 = vmatpush1.msra.mxu0 0.0
    %5100 = vmatprep.subr.mxu0 0.0
    %5101 = vmatpush1.msra.mxu0 0.0
    %5102 = vmatprep.subr.mxu0 0.0
    %5103 = vmatpush1.msra.mxu0 0.0
    %5104 = vmatprep.subr.mxu0 0.0
    %5105 = vmatpush1.msra.mxu0 0.0
    %5106 = vmatprep.subr.mxu0 0.0
    %5107 = vmatpush1.msra.mxu0 0.0
    %5108 = vmatprep.subr.mxu0 0.0
    %5109 = vmatpush1.msra.mxu0 0.0
    %5110 = vmatprep.subr.mxu0 0.0
    %5111 = vmatpush1.msra.mxu0 0.0
    %5112 = vmatprep.subr.mxu0 0.0
    %5113 = vmatpush1.msra.mxu0 0.0
    %5114 = vmatprep.subr.mxu0 0.0
    %5115 = vmatpush1.msra.mxu0 0.0
    %5116 = vmatprep.subr.mxu0 0.0
    %5117 = vmatpush1.msra.mxu0 0.0
    %5118 = vmatprep.subr.mxu0 0.0
    %5119 = vmatpush1.msra.mxu0 0.0
    %5120 = vmatprep.subr.mxu0 0.0
    %5121 = vmatpush1.msra.mxu0 0.0
    %5122 = vmatprep.subr.mxu0 0.0
    %5123 = vmatpush1.msra.mxu0 0.0
    %5124 = vmatprep.subr.mxu0 0.0
    %5125 = vmatpush1.msra.mxu0 0.0
    %5126 = vmatprep.subr.mxu0 0.0
    %5127 = vmatpush1.msra.mxu0 0.0
    %5128 = vmatprep.mubr.f32.mxu0 0.0
    %v5129 = vand.u32 %v3596, 4294901760
    %5130 = vmatmul.mubr.f32.gmra.mrb[0].mxu0 %v5129
    %v5131 = vpop.f32.mrb[0].mxu0
    %v5132 = vadd.f32 %v4980, %v5131
    %v5133 = vpop.f32.mrb[0].mxu0
    %v5134 = vadd.f32 %v4982, %v5133
    %5135 = vdwg.mxu0
    %v5136 = vand.u32 %v311, 4294901760
    %v5137 = vsub.f32 %v311, %v5136
    %5138 = vmatprep.subr.mxu0 %v5137
    %v5139 = vand.u32 %v310, 4294901760
    %v5140 = vsub.f32 %v310, %v5139
    %5141 = vmatpush1.msra.mxu0 %v5140
    %v5142 = vand.u32 %v315, 4294901760
    %v5143 = vsub.f32 %v315, %v5142
    %5144 = vmatprep.subr.mxu0 %v5143
    %v5145 = vand.u32 %v314, 4294901760
    %v5146 = vsub.f32 %v314, %v5145
    %5147 = vmatpush1.msra.mxu0 %v5146
    %v5148 = vand.u32 %v319, 4294901760
    %v5149 = vsub.f32 %v319, %v5148
    %5150 = vmatprep.subr.mxu0 %v5149
    %v5151 = vand.u32 %v318, 4294901760
    %v5152 = vsub.f32 %v318, %v5151
    %5153 = vmatpush1.msra.mxu0 %v5152
    %v5154 = vand.u32 %v323, 4294901760
    %v5155 = vsub.f32 %v323, %v5154
    %5156 = vmatprep.subr.mxu0 %v5155
    %v5157 = vand.u32 %v322, 4294901760
    %v5158 = vsub.f32 %v322, %v5157
    %5159 = vmatpush1.msra.mxu0 %v5158
    %v5160 = vand.u32 %v327, 4294901760
    %v5161 = vsub.f32 %v327, %v5160
    %5162 = vmatprep.subr.mxu0 %v5161
    %v5163 = vand.u32 %v326, 4294901760
    %v5164 = vsub.f32 %v326, %v5163
    %5165 = vmatpush1.msra.mxu0 %v5164
    %v5166 = vand.u32 %v331, 4294901760
    %v5167 = vsub.f32 %v331, %v5166
    %5168 = vmatprep.subr.mxu0 %v5167
    %v5169 = vand.u32 %v330, 4294901760
    %v5170 = vsub.f32 %v330, %v5169
    %5171 = vmatpush1.msra.mxu0 %v5170
    %v5172 = vand.u32 %v335, 4294901760
    %v5173 = vsub.f32 %v335, %v5172
    %5174 = vmatprep.subr.mxu0 %v5173
    %v5175 = vand.u32 %v334, 4294901760
    %v5176 = vsub.f32 %v334, %v5175
    %5177 = vmatpush1.msra.mxu0 %v5176
    %v5178 = vand.u32 %v339, 4294901760
    %v5179 = vsub.f32 %v339, %v5178
    %5180 = vmatprep.subr.mxu0 %v5179
    %v5181 = vand.u32 %v338, 4294901760
    %v5182 = vsub.f32 %v338, %v5181
    %5183 = vmatpush1.msra.mxu0 %v5182
    %5184 = vmatprep.subr.mxu0 0.0
    %5185 = vmatpush1.msra.mxu0 0.0
    %5186 = vmatprep.subr.mxu0 0.0
    %5187 = vmatpush1.msra.mxu0 0.0
    %5188 = vmatprep.subr.mxu0 0.0
    %5189 = vmatpush1.msra.mxu0 0.0
    %5190 = vmatprep.subr.mxu0 0.0
    %5191 = vmatpush1.msra.mxu0 0.0
    %5192 = vmatprep.subr.mxu0 0.0
    %5193 = vmatpush1.msra.mxu0 0.0
    %5194 = vmatprep.subr.mxu0 0.0
    %5195 = vmatpush1.msra.mxu0 0.0
    %5196 = vmatprep.subr.mxu0 0.0
    %5197 = vmatpush1.msra.mxu0 0.0
    %5198 = vmatprep.subr.mxu0 0.0
    %5199 = vmatpush1.msra.mxu0 0.0
    %5200 = vmatprep.subr.mxu0 0.0
    %5201 = vmatpush1.msra.mxu0 0.0
    %5202 = vmatprep.subr.mxu0 0.0
    %5203 = vmatpush1.msra.mxu0 0.0
    %5204 = vmatprep.subr.mxu0 0.0
    %5205 = vmatpush1.msra.mxu0 0.0
    %5206 = vmatprep.subr.mxu0 0.0
    %5207 = vmatpush1.msra.mxu0 0.0
    %5208 = vmatprep.subr.mxu0 0.0
    %5209 = vmatpush1.msra.mxu0 0.0
    %5210 = vmatprep.subr.mxu0 0.0
    %5211 = vmatpush1.msra.mxu0 0.0
    %5212 = vmatprep.subr.mxu0 0.0
    %5213 = vmatpush1.msra.mxu0 0.0
    %5214 = vmatprep.subr.mxu0 0.0
    %5215 = vmatpush1.msra.mxu0 0.0
    %5216 = vmatprep.subr.mxu0 0.0
    %5217 = vmatpush1.msra.mxu0 0.0
    %5218 = vmatprep.subr.mxu0 0.0
    %5219 = vmatpush1.msra.mxu0 0.0
    %5220 = vmatprep.subr.mxu0 0.0
    %5221 = vmatpush1.msra.mxu0 0.0
    %5222 = vmatprep.subr.mxu0 0.0
    %5223 = vmatpush1.msra.mxu0 0.0
    %5224 = vmatprep.subr.mxu0 0.0
    %5225 = vmatpush1.msra.mxu0 0.0
    %5226 = vmatprep.subr.mxu0 0.0
    %5227 = vmatpush1.msra.mxu0 0.0
    %5228 = vmatprep.subr.mxu0 0.0
    %5229 = vmatpush1.msra.mxu0 0.0
    %5230 = vmatprep.subr.mxu0 0.0
    %5231 = vmatpush1.msra.mxu0 0.0
    %5232 = vmatprep.mubr.f32.mxu0 0.0
    %v5233 = vand.u32 %v3596, 4294901760
    %v5234 = vsub.f32 %v3596, %v5233
    %5235 = vmatmul.mubr.f32.gmra.mrb[0].mxu0 %v5234
    %v5236 = vpop.f32.mrb[0].mxu0
    %v5237 = vadd.f32 %v5132, %v5236
    %v5238 = vpop.f32.mrb[0].mxu0
    %v5239 = vadd.f32 %v5134, %v5238
    %5240 = vdwg.mxu0
    %v5241 = vand.u32 %v311, 4294901760
    %5242 = vmatprep.subr.mxu0 %v5241
    %v5243 = vand.u32 %v310, 4294901760
    %5244 = vmatpush1.msra.mxu0 %v5243
    %v5245 = vand.u32 %v315, 4294901760
    %5246 = vmatprep.subr.mxu0 %v5245
    %v5247 = vand.u32 %v314, 4294901760
    %5248 = vmatpush1.msra.mxu0 %v5247
    %v5249 = vand.u32 %v319, 4294901760
    %5250 = vmatprep.subr.mxu0 %v5249
    %v5251 = vand.u32 %v318, 4294901760
    %5252 = vmatpush1.msra.mxu0 %v5251
    %v5253 = vand.u32 %v323, 4294901760
    %5254 = vmatprep.subr.mxu0 %v5253
    %v5255 = vand.u32 %v322, 4294901760
    %5256 = vmatpush1.msra.mxu0 %v5255
    %v5257 = vand.u32 %v327, 4294901760
    %5258 = vmatprep.subr.mxu0 %v5257
    %v5259 = vand.u32 %v326, 4294901760
    %5260 = vmatpush1.msra.mxu0 %v5259
    %v5261 = vand.u32 %v331, 4294901760
    %5262 = vmatprep.subr.mxu0 %v5261
    %v5263 = vand.u32 %v330, 4294901760
    %5264 = vmatpush1.msra.mxu0 %v5263
    %v5265 = vand.u32 %v335, 4294901760
    %5266 = vmatprep.subr.mxu0 %v5265
    %v5267 = vand.u32 %v334, 4294901760
    %5268 = vmatpush1.msra.mxu0 %v5267
    %v5269 = vand.u32 %v339, 4294901760
    %5270 = vmatprep.subr.mxu0 %v5269
    %v5271 = vand.u32 %v338, 4294901760
    %5272 = vmatpush1.msra.mxu0 %v5271
    %5273 = vmatprep.subr.mxu0 0.0
    %5274 = vmatpush1.msra.mxu0 0.0
    %5275 = vmatprep.subr.mxu0 0.0
    %5276 = vmatpush1.msra.mxu0 0.0
    %5277 = vmatprep.subr.mxu0 0.0
    %5278 = vmatpush1.msra.mxu0 0.0
    %5279 = vmatprep.subr.mxu0 0.0
    %5280 = vmatpush1.msra.mxu0 0.0
    %5281 = vmatprep.subr.mxu0 0.0
    %5282 = vmatpush1.msra.mxu0 0.0
    %5283 = vmatprep.subr.mxu0 0.0
    %5284 = vmatpush1.msra.mxu0 0.0
    %5285 = vmatprep.subr.mxu0 0.0
    %5286 = vmatpush1.msra.mxu0 0.0
    %5287 = vmatprep.subr.mxu0 0.0
    %5288 = vmatpush1.msra.mxu0 0.0
    %5289 = vmatprep.subr.mxu0 0.0
    %5290 = vmatpush1.msra.mxu0 0.0
    %5291 = vmatprep.subr.mxu0 0.0
    %5292 = vmatpush1.msra.mxu0 0.0
    %5293 = vmatprep.subr.mxu0 0.0
    %5294 = vmatpush1.msra.mxu0 0.0
    %5295 = vmatprep.subr.mxu0 0.0
    %5296 = vmatpush1.msra.mxu0 0.0
    %5297 = vmatprep.subr.mxu0 0.0
    %5298 = vmatpush1.msra.mxu0 0.0
    %5299 = vmatprep.subr.mxu0 0.0
    %5300 = vmatpush1.msra.mxu0 0.0
    %5301 = vmatprep.subr.mxu0 0.0
    %5302 = vmatpush1.msra.mxu0 0.0
    %5303 = vmatprep.subr.mxu0 0.0
    %5304 = vmatpush1.msra.mxu0 0.0
    %5305 = vmatprep.subr.mxu0 0.0
    %5306 = vmatpush1.msra.mxu0 0.0
    %5307 = vmatprep.subr.mxu0 0.0
    %5308 = vmatpush1.msra.mxu0 0.0
    %5309 = vmatprep.subr.mxu0 0.0
    %5310 = vmatpush1.msra.mxu0 0.0
    %5311 = vmatprep.subr.mxu0 0.0
    %5312 = vmatpush1.msra.mxu0 0.0
    %5313 = vmatprep.subr.mxu0 0.0
    %5314 = vmatpush1.msra.mxu0 0.0
    %5315 = vmatprep.subr.mxu0 0.0
    %5316 = vmatpush1.msra.mxu0 0.0
    %5317 = vmatprep.subr.mxu0 0.0
    %5318 = vmatpush1.msra.mxu0 0.0
    %5319 = vmatprep.subr.mxu0 0.0
    %5320 = vmatpush1.msra.mxu0 0.0
    %5321 = vmatprep.mubr.f32.mxu0 0.0
    %v5322 = vand.u32 %v3596, 4294901760
    %v5323 = vsub.f32 %v3596, %v5322
    %v5324 = vand.u32 %v5323, 4294901760
    %5325 = vmatmul.mubr.f32.gmra.mrb[0].mxu0 %v5324
    %v5326 = vpop.f32.mrb[0].mxu0
    %v5327 = vadd.f32 %v5237, %v5326
    %v5328 = vpop.f32.mrb[0].mxu0
    %v5329 = vadd.f32 %v5239, %v5328
    %5330 = vdwg.mxu0
    %v5331 = vand.u32 %v311, 4294901760
    %v5332 = vsub.f32 %v311, %v5331
    %v5333 = vand.u32 %v5332, 4294901760
    %5334 = vmatprep.subr.mxu0 %v5333
    %v5335 = vand.u32 %v310, 4294901760
    %v5336 = vsub.f32 %v310, %v5335
    %v5337 = vand.u32 %v5336, 4294901760
    %5338 = vmatpush1.msra.mxu0 %v5337
    %v5339 = vand.u32 %v315, 4294901760
    %v5340 = vsub.f32 %v315, %v5339
    %v5341 = vand.u32 %v5340, 4294901760
    %5342 = vmatprep.subr.mxu0 %v5341
    %v5343 = vand.u32 %v314, 4294901760
    %v5344 = vsub.f32 %v314, %v5343
    %v5345 = vand.u32 %v5344, 4294901760
    %5346 = vmatpush1.msra.mxu0 %v5345
    %v5347 = vand.u32 %v319, 4294901760
    %v5348 = vsub.f32 %v319, %v5347
    %v5349 = vand.u32 %v5348, 4294901760
    %5350 = vmatprep.subr.mxu0 %v5349
    %v5351 = vand.u32 %v318, 4294901760
    %v5352 = vsub.f32 %v318, %v5351
    %v5353 = vand.u32 %v5352, 4294901760
    %5354 = vmatpush1.msra.mxu0 %v5353
    %v5355 = vand.u32 %v323, 4294901760
    %v5356 = vsub.f32 %v323, %v5355
    %v5357 = vand.u32 %v5356, 4294901760
    %5358 = vmatprep.subr.mxu0 %v5357
    %v5359 = vand.u32 %v322, 4294901760
    %v5360 = vsub.f32 %v322, %v5359
    %v5361 = vand.u32 %v5360, 4294901760
    %5362 = vmatpush1.msra.mxu0 %v5361
    %v5363 = vand.u32 %v327, 4294901760
    %v5364 = vsub.f32 %v327, %v5363
    %v5365 = vand.u32 %v5364, 4294901760
    %5366 = vmatprep.subr.mxu0 %v5365
    %v5367 = vand.u32 %v326, 4294901760
    %v5368 = vsub.f32 %v326, %v5367
    %v5369 = vand.u32 %v5368, 4294901760
    %5370 = vmatpush1.msra.mxu0 %v5369
    %v5371 = vand.u32 %v331, 4294901760
    %v5372 = vsub.f32 %v331, %v5371
    %v5373 = vand.u32 %v5372, 4294901760
    %5374 = vmatprep.subr.mxu0 %v5373
    %v5375 = vand.u32 %v330, 4294901760
    %v5376 = vsub.f32 %v330, %v5375
    %v5377 = vand.u32 %v5376, 4294901760
    %5378 = vmatpush1.msra.mxu0 %v5377
    %v5379 = vand.u32 %v335, 4294901760
    %v5380 = vsub.f32 %v335, %v5379
    %v5381 = vand.u32 %v5380, 4294901760
    %5382 = vmatprep.subr.mxu0 %v5381
    %v5383 = vand.u32 %v334, 4294901760
    %v5384 = vsub.f32 %v334, %v5383
    %v5385 = vand.u32 %v5384, 4294901760
    %5386 = vmatpush1.msra.mxu0 %v5385
    %v5387 = vand.u32 %v339, 4294901760
    %v5388 = vsub.f32 %v339, %v5387
    %v5389 = vand.u32 %v5388, 4294901760
    %5390 = vmatprep.subr.mxu0 %v5389
    %v5391 = vand.u32 %v338, 4294901760
    %v5392 = vsub.f32 %v338, %v5391
    %v5393 = vand.u32 %v5392, 4294901760
    %5394 = vmatpush1.msra.mxu0 %v5393
    %5395 = vmatprep.subr.mxu0 0.0
    %5396 = vmatpush1.msra.mxu0 0.0
    %5397 = vmatprep.subr.mxu0 0.0
    %5398 = vmatpush1.msra.mxu0 0.0
    %5399 = vmatprep.subr.mxu0 0.0
    %5400 = vmatpush1.msra.mxu0 0.0
    %5401 = vmatprep.subr.mxu0 0.0
    %5402 = vmatpush1.msra.mxu0 0.0
    %5403 = vmatprep.subr.mxu0 0.0
    %5404 = vmatpush1.msra.mxu0 0.0
    %5405 = vmatprep.subr.mxu0 0.0
    %5406 = vmatpush1.msra.mxu0 0.0
    %5407 = vmatprep.subr.mxu0 0.0
    %5408 = vmatpush1.msra.mxu0 0.0
    %5409 = vmatprep.subr.mxu0 0.0
    %5410 = vmatpush1.msra.mxu0 0.0
    %5411 = vmatprep.subr.mxu0 0.0
    %5412 = vmatpush1.msra.mxu0 0.0
    %5413 = vmatprep.subr.mxu0 0.0
    %5414 = vmatpush1.msra.mxu0 0.0
    %5415 = vmatprep.subr.mxu0 0.0
    %5416 = vmatpush1.msra.mxu0 0.0
    %5417 = vmatprep.subr.mxu0 0.0
    %5418 = vmatpush1.msra.mxu0 0.0
    %5419 = vmatprep.subr.mxu0 0.0
    %5420 = vmatpush1.msra.mxu0 0.0
    %5421 = vmatprep.subr.mxu0 0.0
    %5422 = vmatpush1.msra.mxu0 0.0
    %5423 = vmatprep.subr.mxu0 0.0
    %5424 = vmatpush1.msra.mxu0 0.0
    %5425 = vmatprep.subr.mxu0 0.0
    %5426 = vmatpush1.msra.mxu0 0.0
    %5427 = vmatprep.subr.mxu0 0.0
    %5428 = vmatpush1.msra.mxu0 0.0
    %5429 = vmatprep.subr.mxu0 0.0
    %5430 = vmatpush1.msra.mxu0 0.0
    %5431 = vmatprep.subr.mxu0 0.0
    %5432 = vmatpush1.msra.mxu0 0.0
    %5433 = vmatprep.subr.mxu0 0.0
    %5434 = vmatpush1.msra.mxu0 0.0
    %5435 = vmatprep.subr.mxu0 0.0
    %5436 = vmatpush1.msra.mxu0 0.0
    %5437 = vmatprep.subr.mxu0 0.0
    %5438 = vmatpush1.msra.mxu0 0.0
    %5439 = vmatprep.subr.mxu0 0.0
    %5440 = vmatpush1.msra.mxu0 0.0
    %5441 = vmatprep.subr.mxu0 0.0
    %5442 = vmatpush1.msra.mxu0 0.0
    %5443 = vmatprep.mubr.f32.mxu0 0.0
    %v5444 = vand.u32 %v3596, 4294901760
    %5445 = vmatmul.mubr.f32.gmra.mrb[0].mxu0 %v5444
    %v5446 = vpop.f32.mrb[0].mxu0
    %v5447 = vadd.f32 %v5327, %v5446
    %v5448 = vpop.f32.mrb[0].mxu0
    %v5449 = vadd.f32 %v5329, %v5448
    %5450 = vdwg.mxu0
    %v5451 = vand.u32 %v311, 4294901760
    %5452 = vmatprep.subr.mxu0 %v5451
    %v5453 = vand.u32 %v310, 4294901760
    %5454 = vmatpush1.msra.mxu0 %v5453
    %v5455 = vand.u32 %v315, 4294901760
    %5456 = vmatprep.subr.mxu0 %v5455
    %v5457 = vand.u32 %v314, 4294901760
    %5458 = vmatpush1.msra.mxu0 %v5457
    %v5459 = vand.u32 %v319, 4294901760
    %5460 = vmatprep.subr.mxu0 %v5459
    %v5461 = vand.u32 %v318, 4294901760
    %5462 = vmatpush1.msra.mxu0 %v5461
    %v5463 = vand.u32 %v323, 4294901760
    %5464 = vmatprep.subr.mxu0 %v5463
    %v5465 = vand.u32 %v322, 4294901760
    %5466 = vmatpush1.msra.mxu0 %v5465
    %v5467 = vand.u32 %v327, 4294901760
    %5468 = vmatprep.subr.mxu0 %v5467
    %v5469 = vand.u32 %v326, 4294901760
    %5470 = vmatpush1.msra.mxu0 %v5469
    %v5471 = vand.u32 %v331, 4294901760
    %5472 = vmatprep.subr.mxu0 %v5471
    %v5473 = vand.u32 %v330, 4294901760
    %5474 = vmatpush1.msra.mxu0 %v5473
    %v5475 = vand.u32 %v335, 4294901760
    %5476 = vmatprep.subr.mxu0 %v5475
    %v5477 = vand.u32 %v334, 4294901760
    %5478 = vmatpush1.msra.mxu0 %v5477
    %v5479 = vand.u32 %v339, 4294901760
    %5480 = vmatprep.subr.mxu0 %v5479
    %v5481 = vand.u32 %v338, 4294901760
    %5482 = vmatpush1.msra.mxu0 %v5481
    %5483 = vmatprep.subr.mxu0 0.0
    %5484 = vmatpush1.msra.mxu0 0.0
    %5485 = vmatprep.subr.mxu0 0.0
    %5486 = vmatpush1.msra.mxu0 0.0
    %5487 = vmatprep.subr.mxu0 0.0
    %5488 = vmatpush1.msra.mxu0 0.0
    %5489 = vmatprep.subr.mxu0 0.0
    %5490 = vmatpush1.msra.mxu0 0.0
    %5491 = vmatprep.subr.mxu0 0.0
    %5492 = vmatpush1.msra.mxu0 0.0
    %5493 = vmatprep.subr.mxu0 0.0
    %5494 = vmatpush1.msra.mxu0 0.0
    %5495 = vmatprep.subr.mxu0 0.0
    %5496 = vmatpush1.msra.mxu0 0.0
    %5497 = vmatprep.subr.mxu0 0.0
    %5498 = vmatpush1.msra.mxu0 0.0
    %5499 = vmatprep.subr.mxu0 0.0
    %5500 = vmatpush1.msra.mxu0 0.0
    %5501 = vmatprep.subr.mxu0 0.0
    %5502 = vmatpush1.msra.mxu0 0.0
    %5503 = vmatprep.subr.mxu0 0.0
    %5504 = vmatpush1.msra.mxu0 0.0
    %5505 = vmatprep.subr.mxu0 0.0
    %5506 = vmatpush1.msra.mxu0 0.0
    %5507 = vmatprep.subr.mxu0 0.0
    %5508 = vmatpush1.msra.mxu0 0.0
    %5509 = vmatprep.subr.mxu0 0.0
    %5510 = vmatpush1.msra.mxu0 0.0
    %5511 = vmatprep.subr.mxu0 0.0
    %5512 = vmatpush1.msra.mxu0 0.0
    %5513 = vmatprep.subr.mxu0 0.0
    %5514 = vmatpush1.msra.mxu0 0.0
    %5515 = vmatprep.subr.mxu0 0.0
    %5516 = vmatpush1.msra.mxu0 0.0
    %5517 = vmatprep.subr.mxu0 0.0
    %5518 = vmatpush1.msra.mxu0 0.0
    %5519 = vmatprep.subr.mxu0 0.0
    %5520 = vmatpush1.msra.mxu0 0.0
    %5521 = vmatprep.subr.mxu0 0.0
    %5522 = vmatpush1.msra.mxu0 0.0
    %5523 = vmatprep.subr.mxu0 0.0
    %5524 = vmatpush1.msra.mxu0 0.0
    %5525 = vmatprep.subr.mxu0 0.0
    %5526 = vmatpush1.msra.mxu0 0.0
    %5527 = vmatprep.subr.mxu0 0.0
    %5528 = vmatpush1.msra.mxu0 0.0
    %5529 = vmatprep.subr.mxu0 0.0
    %5530 = vmatpush1.msra.mxu0 0.0
    %5531 = vmatprep.mubr.f32.mxu0 0.0
    %v5532 = vand.u32 %v3596, 4294901760
    %5533 = vmatmul.mubr.f32.gmra.mrb[0].mxu0 %v5532
    %v5534 = vpop.f32.mrb[0].mxu0
    %v5535 = vadd.f32 %v5447, %v5534
    %v5536 = vpop.f32.mrb[0].mxu0
    %v5537 = vadd.f32 %v5449, %v5536
    %5538 = vdwg.mxu0
    %v5539 = vand.u32 %v313, 4294901760
    %5540 = vmatprep.subr.mxu0 %v5539
    %v5541 = vand.u32 %v312, 4294901760
    %5542 = vmatpush1.msra.mxu0 %v5541
    %v5543 = vand.u32 %v317, 4294901760
    %5544 = vmatprep.subr.mxu0 %v5543
    %v5545 = vand.u32 %v316, 4294901760
    %5546 = vmatpush1.msra.mxu0 %v5545
    %v5547 = vand.u32 %v321, 4294901760
    %5548 = vmatprep.subr.mxu0 %v5547
    %v5549 = vand.u32 %v320, 4294901760
    %5550 = vmatpush1.msra.mxu0 %v5549
    %v5551 = vand.u32 %v325, 4294901760
    %5552 = vmatprep.subr.mxu0 %v5551
    %v5553 = vand.u32 %v324, 4294901760
    %5554 = vmatpush1.msra.mxu0 %v5553
    %v5555 = vand.u32 %v329, 4294901760
    %5556 = vmatprep.subr.mxu0 %v5555
    %v5557 = vand.u32 %v328, 4294901760
    %5558 = vmatpush1.msra.mxu0 %v5557
    %v5559 = vand.u32 %v333, 4294901760
    %5560 = vmatprep.subr.mxu0 %v5559
    %v5561 = vand.u32 %v332, 4294901760
    %5562 = vmatpush1.msra.mxu0 %v5561
    %v5563 = vand.u32 %v337, 4294901760
    %5564 = vmatprep.subr.mxu0 %v5563
    %v5565 = vand.u32 %v336, 4294901760
    %5566 = vmatpush1.msra.mxu0 %v5565
    %v5567 = vand.u32 %v341, 4294901760
    %5568 = vmatprep.subr.mxu0 %v5567
    %v5569 = vand.u32 %v340, 4294901760
    %5570 = vmatpush1.msra.mxu0 %v5569
    %5571 = vmatprep.subr.mxu0 0.0
    %5572 = vmatpush1.msra.mxu0 0.0
    %5573 = vmatprep.subr.mxu0 0.0
    %5574 = vmatpush1.msra.mxu0 0.0
    %5575 = vmatprep.subr.mxu0 0.0
    %5576 = vmatpush1.msra.mxu0 0.0
    %5577 = vmatprep.subr.mxu0 0.0
    %5578 = vmatpush1.msra.mxu0 0.0
    %5579 = vmatprep.subr.mxu0 0.0
    %5580 = vmatpush1.msra.mxu0 0.0
    %5581 = vmatprep.subr.mxu0 0.0
    %5582 = vmatpush1.msra.mxu0 0.0
    %5583 = vmatprep.subr.mxu0 0.0
    %5584 = vmatpush1.msra.mxu0 0.0
    %5585 = vmatprep.subr.mxu0 0.0
    %5586 = vmatpush1.msra.mxu0 0.0
    %5587 = vmatprep.subr.mxu0 0.0
    %5588 = vmatpush1.msra.mxu0 0.0
    %5589 = vmatprep.subr.mxu0 0.0
    %5590 = vmatpush1.msra.mxu0 0.0
    %5591 = vmatprep.subr.mxu0 0.0
    %5592 = vmatpush1.msra.mxu0 0.0
    %5593 = vmatprep.subr.mxu0 0.0
    %5594 = vmatpush1.msra.mxu0 0.0
    %5595 = vmatprep.subr.mxu0 0.0
    %5596 = vmatpush1.msra.mxu0 0.0
    %5597 = vmatprep.subr.mxu0 0.0
    %5598 = vmatpush1.msra.mxu0 0.0
    %5599 = vmatprep.subr.mxu0 0.0
    %5600 = vmatpush1.msra.mxu0 0.0
    %5601 = vmatprep.subr.mxu0 0.0
    %5602 = vmatpush1.msra.mxu0 0.0
    %5603 = vmatprep.subr.mxu0 0.0
    %5604 = vmatpush1.msra.mxu0 0.0
    %5605 = vmatprep.subr.mxu0 0.0
    %5606 = vmatpush1.msra.mxu0 0.0
    %5607 = vmatprep.subr.mxu0 0.0
    %5608 = vmatpush1.msra.mxu0 0.0
    %5609 = vmatprep.subr.mxu0 0.0
    %5610 = vmatpush1.msra.mxu0 0.0
    %5611 = vmatprep.subr.mxu0 0.0
    %5612 = vmatpush1.msra.mxu0 0.0
    %5613 = vmatprep.subr.mxu0 0.0
    %5614 = vmatpush1.msra.mxu0 0.0
    %5615 = vmatprep.subr.mxu0 0.0
    %5616 = vmatpush1.msra.mxu0 0.0
    %5617 = vmatprep.subr.mxu0 0.0
    %5618 = vmatpush1.msra.mxu0 0.0
    %5619 = vmatprep.mubr.f32.mxu0 0.0
    %v5620 = vand.u32 %v3596, 4294901760
    %v5621 = vsub.f32 %v3596, %v5620
    %v5622 = vand.u32 %v5621, 4294901760
    %v5623 = vsub.f32 %v5621, %v5622
    %v5624 = vand.u32 %v5623, 4294901760
    %5625 = vmatmul.mubr.f32.gmra.mrb[0].mxu0 %v5624
    %v5626 = vpop.f32.mrb[0].mxu0
    %v5627 = vadd.f32 0.0, %v5626
    %v5628 = vpop.f32.mrb[0].mxu0
    %v5629 = vadd.f32 0.0, %v5628
    %5630 = vdwg.mxu0
    %v5631 = vand.u32 %v313, 4294901760
    %v5632 = vsub.f32 %v313, %v5631
    %v5633 = vand.u32 %v5632, 4294901760
    %v5634 = vsub.f32 %v5632, %v5633
    %v5635 = vand.u32 %v5634, 4294901760
    %5636 = vmatprep.subr.mxu0 %v5635
    %v5637 = vand.u32 %v312, 4294901760
    %v5638 = vsub.f32 %v312, %v5637
    %v5639 = vand.u32 %v5638, 4294901760
    %v5640 = vsub.f32 %v5638, %v5639
    %v5641 = vand.u32 %v5640, 4294901760
    %5642 = vmatpush1.msra.mxu0 %v5641
    %v5643 = vand.u32 %v317, 4294901760
    %v5644 = vsub.f32 %v317, %v5643
    %v5645 = vand.u32 %v5644, 4294901760
    %v5646 = vsub.f32 %v5644, %v5645
    %v5647 = vand.u32 %v5646, 4294901760
    %5648 = vmatprep.subr.mxu0 %v5647
    %v5649 = vand.u32 %v316, 4294901760
    %v5650 = vsub.f32 %v316, %v5649
    %v5651 = vand.u32 %v5650, 4294901760
    %v5652 = vsub.f32 %v5650, %v5651
    %v5653 = vand.u32 %v5652, 4294901760
    %5654 = vmatpush1.msra.mxu0 %v5653
    %v5655 = vand.u32 %v321, 4294901760
    %v5656 = vsub.f32 %v321, %v5655
    %v5657 = vand.u32 %v5656, 4294901760
    %v5658 = vsub.f32 %v5656, %v5657
    %v5659 = vand.u32 %v5658, 4294901760
    %5660 = vmatprep.subr.mxu0 %v5659
    %v5661 = vand.u32 %v320, 4294901760
    %v5662 = vsub.f32 %v320, %v5661
    %v5663 = vand.u32 %v5662, 4294901760
    %v5664 = vsub.f32 %v5662, %v5663
    %v5665 = vand.u32 %v5664, 4294901760
    %5666 = vmatpush1.msra.mxu0 %v5665
    %v5667 = vand.u32 %v325, 4294901760
    %v5668 = vsub.f32 %v325, %v5667
    %v5669 = vand.u32 %v5668, 4294901760
    %v5670 = vsub.f32 %v5668, %v5669
    %v5671 = vand.u32 %v5670, 4294901760
    %5672 = vmatprep.subr.mxu0 %v5671
    %v5673 = vand.u32 %v324, 4294901760
    %v5674 = vsub.f32 %v324, %v5673
    %v5675 = vand.u32 %v5674, 4294901760
    %v5676 = vsub.f32 %v5674, %v5675
    %v5677 = vand.u32 %v5676, 4294901760
    %5678 = vmatpush1.msra.mxu0 %v5677
    %v5679 = vand.u32 %v329, 4294901760
    %v5680 = vsub.f32 %v329, %v5679
    %v5681 = vand.u32 %v5680, 4294901760
    %v5682 = vsub.f32 %v5680, %v5681
    %v5683 = vand.u32 %v5682, 4294901760
    %5684 = vmatprep.subr.mxu0 %v5683
    %v5685 = vand.u32 %v328, 4294901760
    %v5686 = vsub.f32 %v328, %v5685
    %v5687 = vand.u32 %v5686, 4294901760
    %v5688 = vsub.f32 %v5686, %v5687
    %v5689 = vand.u32 %v5688, 4294901760
    %5690 = vmatpush1.msra.mxu0 %v5689
    %v5691 = vand.u32 %v333, 4294901760
    %v5692 = vsub.f32 %v333, %v5691
    %v5693 = vand.u32 %v5692, 4294901760
    %v5694 = vsub.f32 %v5692, %v5693
    %v5695 = vand.u32 %v5694, 4294901760
    %5696 = vmatprep.subr.mxu0 %v5695
    %v5697 = vand.u32 %v332, 4294901760
    %v5698 = vsub.f32 %v332, %v5697
    %v5699 = vand.u32 %v5698, 4294901760
    %v5700 = vsub.f32 %v5698, %v5699
    %v5701 = vand.u32 %v5700, 4294901760
    %5702 = vmatpush1.msra.mxu0 %v5701
    %v5703 = vand.u32 %v337, 4294901760
    %v5704 = vsub.f32 %v337, %v5703
    %v5705 = vand.u32 %v5704, 4294901760
    %v5706 = vsub.f32 %v5704, %v5705
    %v5707 = vand.u32 %v5706, 4294901760
    %5708 = vmatprep.subr.mxu0 %v5707
    %v5709 = vand.u32 %v336, 4294901760
    %v5710 = vsub.f32 %v336, %v5709
    %v5711 = vand.u32 %v5710, 4294901760
    %v5712 = vsub.f32 %v5710, %v5711
    %v5713 = vand.u32 %v5712, 4294901760
    %5714 = vmatpush1.msra.mxu0 %v5713
    %v5715 = vand.u32 %v341, 4294901760
    %v5716 = vsub.f32 %v341, %v5715
    %v5717 = vand.u32 %v5716, 4294901760
    %v5718 = vsub.f32 %v5716, %v5717
    %v5719 = vand.u32 %v5718, 4294901760
    %5720 = vmatprep.subr.mxu0 %v5719
    %v5721 = vand.u32 %v340, 4294901760
    %v5722 = vsub.f32 %v340, %v5721
    %v5723 = vand.u32 %v5722, 4294901760
    %v5724 = vsub.f32 %v5722, %v5723
    %v5725 = vand.u32 %v5724, 4294901760
    %5726 = vmatpush1.msra.mxu0 %v5725
    %5727 = vmatprep.subr.mxu0 0.0
    %5728 = vmatpush1.msra.mxu0 0.0
    %5729 = vmatprep.subr.mxu0 0.0
    %5730 = vmatpush1.msra.mxu0 0.0
    %5731 = vmatprep.subr.mxu0 0.0
    %5732 = vmatpush1.msra.mxu0 0.0
    %5733 = vmatprep.subr.mxu0 0.0
    %5734 = vmatpush1.msra.mxu0 0.0
    %5735 = vmatprep.subr.mxu0 0.0
    %5736 = vmatpush1.msra.mxu0 0.0
    %5737 = vmatprep.subr.mxu0 0.0
    %5738 = vmatpush1.msra.mxu0 0.0
    %5739 = vmatprep.subr.mxu0 0.0
    %5740 = vmatpush1.msra.mxu0 0.0
    %5741 = vmatprep.subr.mxu0 0.0
    %5742 = vmatpush1.msra.mxu0 0.0
    %5743 = vmatprep.subr.mxu0 0.0
    %5744 = vmatpush1.msra.mxu0 0.0
    %5745 = vmatprep.subr.mxu0 0.0
    %5746 = vmatpush1.msra.mxu0 0.0
    %5747 = vmatprep.subr.mxu0 0.0
    %5748 = vmatpush1.msra.mxu0 0.0
    %5749 = vmatprep.subr.mxu0 0.0
    %5750 = vmatpush1.msra.mxu0 0.0
    %5751 = vmatprep.subr.mxu0 0.0
    %5752 = vmatpush1.msra.mxu0 0.0
    %5753 = vmatprep.subr.mxu0 0.0
    %5754 = vmatpush1.msra.mxu0 0.0
    %5755 = vmatprep.subr.mxu0 0.0
    %5756 = vmatpush1.msra.mxu0 0.0
    %5757 = vmatprep.subr.mxu0 0.0
    %5758 = vmatpush1.msra.mxu0 0.0
    %5759 = vmatprep.subr.mxu0 0.0
    %5760 = vmatpush1.msra.mxu0 0.0
    %5761 = vmatprep.subr.mxu0 0.0
    %5762 = vmatpush1.msra.mxu0 0.0
    %5763 = vmatprep.subr.mxu0 0.0
    %5764 = vmatpush1.msra.mxu0 0.0
    %5765 = vmatprep.subr.mxu0 0.0
    %5766 = vmatpush1.msra.mxu0 0.0
    %5767 = vmatprep.subr.mxu0 0.0
    %5768 = vmatpush1.msra.mxu0 0.0
    %5769 = vmatprep.subr.mxu0 0.0
    %5770 = vmatpush1.msra.mxu0 0.0
    %5771 = vmatprep.subr.mxu0 0.0
    %5772 = vmatpush1.msra.mxu0 0.0
    %5773 = vmatprep.subr.mxu0 0.0
    %5774 = vmatpush1.msra.mxu0 0.0
    %5775 = vmatprep.mubr.f32.mxu0 0.0
    %v5776 = vand.u32 %v3596, 4294901760
    %5777 = vmatmul.mubr.f32.gmra.mrb[0].mxu0 %v5776
    %v5778 = vpop.f32.mrb[0].mxu0
    %v5779 = vadd.f32 %v5627, %v5778
    %v5780 = vpop.f32.mrb[0].mxu0
    %v5781 = vadd.f32 %v5629, %v5780
    %5782 = vdwg.mxu0
    %v5783 = vand.u32 %v313, 4294901760
    %v5784 = vsub.f32 %v313, %v5783
    %5785 = vmatprep.subr.mxu0 %v5784
    %v5786 = vand.u32 %v312, 4294901760
    %v5787 = vsub.f32 %v312, %v5786
    %5788 = vmatpush1.msra.mxu0 %v5787
    %v5789 = vand.u32 %v317, 4294901760
    %v5790 = vsub.f32 %v317, %v5789
    %5791 = vmatprep.subr.mxu0 %v5790
    %v5792 = vand.u32 %v316, 4294901760
    %v5793 = vsub.f32 %v316, %v5792
    %5794 = vmatpush1.msra.mxu0 %v5793
    %v5795 = vand.u32 %v321, 4294901760
    %v5796 = vsub.f32 %v321, %v5795
    %5797 = vmatprep.subr.mxu0 %v5796
    %v5798 = vand.u32 %v320, 4294901760
    %v5799 = vsub.f32 %v320, %v5798
    %5800 = vmatpush1.msra.mxu0 %v5799
    %v5801 = vand.u32 %v325, 4294901760
    %v5802 = vsub.f32 %v325, %v5801
    %5803 = vmatprep.subr.mxu0 %v5802
    %v5804 = vand.u32 %v324, 4294901760
    %v5805 = vsub.f32 %v324, %v5804
    %5806 = vmatpush1.msra.mxu0 %v5805
    %v5807 = vand.u32 %v329, 4294901760
    %v5808 = vsub.f32 %v329, %v5807
    %5809 = vmatprep.subr.mxu0 %v5808
    %v5810 = vand.u32 %v328, 4294901760
    %v5811 = vsub.f32 %v328, %v5810
    %5812 = vmatpush1.msra.mxu0 %v5811
    %v5813 = vand.u32 %v333, 4294901760
    %v5814 = vsub.f32 %v333, %v5813
    %5815 = vmatprep.subr.mxu0 %v5814
    %v5816 = vand.u32 %v332, 4294901760
    %v5817 = vsub.f32 %v332, %v5816
    %5818 = vmatpush1.msra.mxu0 %v5817
    %v5819 = vand.u32 %v337, 4294901760
    %v5820 = vsub.f32 %v337, %v5819
    %5821 = vmatprep.subr.mxu0 %v5820
    %v5822 = vand.u32 %v336, 4294901760
    %v5823 = vsub.f32 %v336, %v5822
    %5824 = vmatpush1.msra.mxu0 %v5823
    %v5825 = vand.u32 %v341, 4294901760
    %v5826 = vsub.f32 %v341, %v5825
    %5827 = vmatprep.subr.mxu0 %v5826
    %v5828 = vand.u32 %v340, 4294901760
    %v5829 = vsub.f32 %v340, %v5828
    %5830 = vmatpush1.msra.mxu0 %v5829
    %5831 = vmatprep.subr.mxu0 0.0
    %5832 = vmatpush1.msra.mxu0 0.0
    %5833 = vmatprep.subr.mxu0 0.0
    %5834 = vmatpush1.msra.mxu0 0.0
    %5835 = vmatprep.subr.mxu0 0.0
    %5836 = vmatpush1.msra.mxu0 0.0
    %5837 = vmatprep.subr.mxu0 0.0
    %5838 = vmatpush1.msra.mxu0 0.0
    %5839 = vmatprep.subr.mxu0 0.0
    %5840 = vmatpush1.msra.mxu0 0.0
    %5841 = vmatprep.subr.mxu0 0.0
    %5842 = vmatpush1.msra.mxu0 0.0
    %5843 = vmatprep.subr.mxu0 0.0
    %5844 = vmatpush1.msra.mxu0 0.0
    %5845 = vmatprep.subr.mxu0 0.0
    %5846 = vmatpush1.msra.mxu0 0.0
    %5847 = vmatprep.subr.mxu0 0.0
    %5848 = vmatpush1.msra.mxu0 0.0
    %5849 = vmatprep.subr.mxu0 0.0
    %5850 = vmatpush1.msra.mxu0 0.0
    %5851 = vmatprep.subr.mxu0 0.0
    %5852 = vmatpush1.msra.mxu0 0.0
    %5853 = vmatprep.subr.mxu0 0.0
    %5854 = vmatpush1.msra.mxu0 0.0
    %5855 = vmatprep.subr.mxu0 0.0
    %5856 = vmatpush1.msra.mxu0 0.0
    %5857 = vmatprep.subr.mxu0 0.0
    %5858 = vmatpush1.msra.mxu0 0.0
    %5859 = vmatprep.subr.mxu0 0.0
    %5860 = vmatpush1.msra.mxu0 0.0
    %5861 = vmatprep.subr.mxu0 0.0
    %5862 = vmatpush1.msra.mxu0 0.0
    %5863 = vmatprep.subr.mxu0 0.0
    %5864 = vmatpush1.msra.mxu0 0.0
    %5865 = vmatprep.subr.mxu0 0.0
    %5866 = vmatpush1.msra.mxu0 0.0
    %5867 = vmatprep.subr.mxu0 0.0
    %5868 = vmatpush1.msra.mxu0 0.0
    %5869 = vmatprep.subr.mxu0 0.0
    %5870 = vmatpush1.msra.mxu0 0.0
    %5871 = vmatprep.subr.mxu0 0.0
    %5872 = vmatpush1.msra.mxu0 0.0
    %5873 = vmatprep.subr.mxu0 0.0
    %5874 = vmatpush1.msra.mxu0 0.0
    %5875 = vmatprep.subr.mxu0 0.0
    %5876 = vmatpush1.msra.mxu0 0.0
    %5877 = vmatprep.subr.mxu0 0.0
    %5878 = vmatpush1.msra.mxu0 0.0
    %5879 = vmatprep.mubr.f32.mxu0 0.0
    %v5880 = vand.u32 %v3596, 4294901760
    %v5881 = vsub.f32 %v3596, %v5880
    %5882 = vmatmul.mubr.f32.gmra.mrb[0].mxu0 %v5881
    %v5883 = vpop.f32.mrb[0].mxu0
    %v5884 = vadd.f32 %v5779, %v5883
    %v5885 = vpop.f32.mrb[0].mxu0
    %v5886 = vadd.f32 %v5781, %v5885
    %5887 = vdwg.mxu0
    %v5888 = vand.u32 %v313, 4294901760
    %5889 = vmatprep.subr.mxu0 %v5888
    %v5890 = vand.u32 %v312, 4294901760
    %5891 = vmatpush1.msra.mxu0 %v5890
    %v5892 = vand.u32 %v317, 4294901760
    %5893 = vmatprep.subr.mxu0 %v5892
    %v5894 = vand.u32 %v316, 4294901760
    %5895 = vmatpush1.msra.mxu0 %v5894
    %v5896 = vand.u32 %v321, 4294901760
    %5897 = vmatprep.subr.mxu0 %v5896
    %v5898 = vand.u32 %v320, 4294901760
    %5899 = vmatpush1.msra.mxu0 %v5898
    %v5900 = vand.u32 %v325, 4294901760
    %5901 = vmatprep.subr.mxu0 %v5900
    %v5902 = vand.u32 %v324, 4294901760
    %5903 = vmatpush1.msra.mxu0 %v5902
    %v5904 = vand.u32 %v329, 4294901760
    %5905 = vmatprep.subr.mxu0 %v5904
    %v5906 = vand.u32 %v328, 4294901760
    %5907 = vmatpush1.msra.mxu0 %v5906
    %v5908 = vand.u32 %v333, 4294901760
    %5909 = vmatprep.subr.mxu0 %v5908
    %v5910 = vand.u32 %v332, 4294901760
    %5911 = vmatpush1.msra.mxu0 %v5910
    %v5912 = vand.u32 %v337, 4294901760
    %5913 = vmatprep.subr.mxu0 %v5912
    %v5914 = vand.u32 %v336, 4294901760
    %5915 = vmatpush1.msra.mxu0 %v5914
    %v5916 = vand.u32 %v341, 4294901760
    %5917 = vmatprep.subr.mxu0 %v5916
    %v5918 = vand.u32 %v340, 4294901760
    %5919 = vmatpush1.msra.mxu0 %v5918
    %5920 = vmatprep.subr.mxu0 0.0
    %5921 = vmatpush1.msra.mxu0 0.0
    %5922 = vmatprep.subr.mxu0 0.0
    %5923 = vmatpush1.msra.mxu0 0.0
    %5924 = vmatprep.subr.mxu0 0.0
    %5925 = vmatpush1.msra.mxu0 0.0
    %5926 = vmatprep.subr.mxu0 0.0
    %5927 = vmatpush1.msra.mxu0 0.0
    %5928 = vmatprep.subr.mxu0 0.0
    %5929 = vmatpush1.msra.mxu0 0.0
    %5930 = vmatprep.subr.mxu0 0.0
    %5931 = vmatpush1.msra.mxu0 0.0
    %5932 = vmatprep.subr.mxu0 0.0
    %5933 = vmatpush1.msra.mxu0 0.0
    %5934 = vmatprep.subr.mxu0 0.0
    %5935 = vmatpush1.msra.mxu0 0.0
    %5936 = vmatprep.subr.mxu0 0.0
    %5937 = vmatpush1.msra.mxu0 0.0
    %5938 = vmatprep.subr.mxu0 0.0
    %5939 = vmatpush1.msra.mxu0 0.0
    %5940 = vmatprep.subr.mxu0 0.0
    %5941 = vmatpush1.msra.mxu0 0.0
    %5942 = vmatprep.subr.mxu0 0.0
    %5943 = vmatpush1.msra.mxu0 0.0
    %5944 = vmatprep.subr.mxu0 0.0
    %5945 = vmatpush1.msra.mxu0 0.0
    %5946 = vmatprep.subr.mxu0 0.0
    %5947 = vmatpush1.msra.mxu0 0.0
    %5948 = vmatprep.subr.mxu0 0.0
    %5949 = vmatpush1.msra.mxu0 0.0
    %5950 = vmatprep.subr.mxu0 0.0
    %5951 = vmatpush1.msra.mxu0 0.0
    %5952 = vmatprep.subr.mxu0 0.0
    %5953 = vmatpush1.msra.mxu0 0.0
    %5954 = vmatprep.subr.mxu0 0.0
    %5955 = vmatpush1.msra.mxu0 0.0
    %5956 = vmatprep.subr.mxu0 0.0
    %5957 = vmatpush1.msra.mxu0 0.0
    %5958 = vmatprep.subr.mxu0 0.0
    %5959 = vmatpush1.msra.mxu0 0.0
    %5960 = vmatprep.subr.mxu0 0.0
    %5961 = vmatpush1.msra.mxu0 0.0
    %5962 = vmatprep.subr.mxu0 0.0
    %5963 = vmatpush1.msra.mxu0 0.0
    %5964 = vmatprep.subr.mxu0 0.0
    %5965 = vmatpush1.msra.mxu0 0.0
    %5966 = vmatprep.subr.mxu0 0.0
    %5967 = vmatpush1.msra.mxu0 0.0
    %5968 = vmatprep.mubr.f32.mxu0 0.0
    %v5969 = vand.u32 %v3596, 4294901760
    %v5970 = vsub.f32 %v3596, %v5969
    %v5971 = vand.u32 %v5970, 4294901760
    %5972 = vmatmul.mubr.f32.gmra.mrb[0].mxu0 %v5971
    %v5973 = vpop.f32.mrb[0].mxu0
    %v5974 = vadd.f32 %v5884, %v5973
    %v5975 = vpop.f32.mrb[0].mxu0
    %v5976 = vadd.f32 %v5886, %v5975
    %5977 = vdwg.mxu0
    %v5978 = vand.u32 %v313, 4294901760
    %v5979 = vsub.f32 %v313, %v5978
    %v5980 = vand.u32 %v5979, 4294901760
    %5981 = vmatprep.subr.mxu0 %v5980
    %v5982 = vand.u32 %v312, 4294901760
    %v5983 = vsub.f32 %v312, %v5982
    %v5984 = vand.u32 %v5983, 4294901760
    %5985 = vmatpush1.msra.mxu0 %v5984
    %v5986 = vand.u32 %v317, 4294901760
    %v5987 = vsub.f32 %v317, %v5986
    %v5988 = vand.u32 %v5987, 4294901760
    %5989 = vmatprep.subr.mxu0 %v5988
    %v5990 = vand.u32 %v316, 4294901760
    %v5991 = vsub.f32 %v316, %v5990
    %v5992 = vand.u32 %v5991, 4294901760
    %5993 = vmatpush1.msra.mxu0 %v5992
    %v5994 = vand.u32 %v321, 4294901760
    %v5995 = vsub.f32 %v321, %v5994
    %v5996 = vand.u32 %v5995, 4294901760
    %5997 = vmatprep.subr.mxu0 %v5996
    %v5998 = vand.u32 %v320, 4294901760
    %v5999 = vsub.f32 %v320, %v5998
    %v6000 = vand.u32 %v5999, 4294901760
    %6001 = vmatpush1.msra.mxu0 %v6000
    %v6002 = vand.u32 %v325, 4294901760
    %v6003 = vsub.f32 %v325, %v6002
    %v6004 = vand.u32 %v6003, 4294901760
    %6005 = vmatprep.subr.mxu0 %v6004
    %v6006 = vand.u32 %v324, 4294901760
    %v6007 = vsub.f32 %v324, %v6006
    %v6008 = vand.u32 %v6007, 4294901760
    %6009 = vmatpush1.msra.mxu0 %v6008
    %v6010 = vand.u32 %v329, 4294901760
    %v6011 = vsub.f32 %v329, %v6010
    %v6012 = vand.u32 %v6011, 4294901760
    %6013 = vmatprep.subr.mxu0 %v6012
    %v6014 = vand.u32 %v328, 4294901760
    %v6015 = vsub.f32 %v328, %v6014
    %v6016 = vand.u32 %v6015, 4294901760
    %6017 = vmatpush1.msra.mxu0 %v6016
    %v6018 = vand.u32 %v333, 4294901760
    %v6019 = vsub.f32 %v333, %v6018
    %v6020 = vand.u32 %v6019, 4294901760
    %6021 = vmatprep.subr.mxu0 %v6020
    %v6022 = vand.u32 %v332, 4294901760
    %v6023 = vsub.f32 %v332, %v6022
    %v6024 = vand.u32 %v6023, 4294901760
    %6025 = vmatpush1.msra.mxu0 %v6024
    %v6026 = vand.u32 %v337, 4294901760
    %v6027 = vsub.f32 %v337, %v6026
    %v6028 = vand.u32 %v6027, 4294901760
    %6029 = vmatprep.subr.mxu0 %v6028
    %v6030 = vand.u32 %v336, 4294901760
    %v6031 = vsub.f32 %v336, %v6030
    %v6032 = vand.u32 %v6031, 4294901760
    %6033 = vmatpush1.msra.mxu0 %v6032
    %v6034 = vand.u32 %v341, 4294901760
    %v6035 = vsub.f32 %v341, %v6034
    %v6036 = vand.u32 %v6035, 4294901760
    %6037 = vmatprep.subr.mxu0 %v6036
    %v6038 = vand.u32 %v340, 4294901760
    %v6039 = vsub.f32 %v340, %v6038
    %v6040 = vand.u32 %v6039, 4294901760
    %6041 = vmatpush1.msra.mxu0 %v6040
    %6042 = vmatprep.subr.mxu0 0.0
    %6043 = vmatpush1.msra.mxu0 0.0
    %6044 = vmatprep.subr.mxu0 0.0
    %6045 = vmatpush1.msra.mxu0 0.0
    %6046 = vmatprep.subr.mxu0 0.0
    %6047 = vmatpush1.msra.mxu0 0.0
    %6048 = vmatprep.subr.mxu0 0.0
    %6049 = vmatpush1.msra.mxu0 0.0
    %6050 = vmatprep.subr.mxu0 0.0
    %6051 = vmatpush1.msra.mxu0 0.0
    %6052 = vmatprep.subr.mxu0 0.0
    %6053 = vmatpush1.msra.mxu0 0.0
    %6054 = vmatprep.subr.mxu0 0.0
    %6055 = vmatpush1.msra.mxu0 0.0
    %6056 = vmatprep.subr.mxu0 0.0
    %6057 = vmatpush1.msra.mxu0 0.0
    %6058 = vmatprep.subr.mxu0 0.0
    %6059 = vmatpush1.msra.mxu0 0.0
    %6060 = vmatprep.subr.mxu0 0.0
    %6061 = vmatpush1.msra.mxu0 0.0
    %6062 = vmatprep.subr.mxu0 0.0
    %6063 = vmatpush1.msra.mxu0 0.0
    %6064 = vmatprep.subr.mxu0 0.0
    %6065 = vmatpush1.msra.mxu0 0.0
    %6066 = vmatprep.subr.mxu0 0.0
    %6067 = vmatpush1.msra.mxu0 0.0
    %6068 = vmatprep.subr.mxu0 0.0
    %6069 = vmatpush1.msra.mxu0 0.0
    %6070 = vmatprep.subr.mxu0 0.0
    %6071 = vmatpush1.msra.mxu0 0.0
    %6072 = vmatprep.subr.mxu0 0.0
    %6073 = vmatpush1.msra.mxu0 0.0
    %6074 = vmatprep.subr.mxu0 0.0
    %6075 = vmatpush1.msra.mxu0 0.0
    %6076 = vmatprep.subr.mxu0 0.0
    %6077 = vmatpush1.msra.mxu0 0.0
    %6078 = vmatprep.subr.mxu0 0.0
    %6079 = vmatpush1.msra.mxu0 0.0
    %6080 = vmatprep.subr.mxu0 0.0
    %6081 = vmatpush1.msra.mxu0 0.0
    %6082 = vmatprep.subr.mxu0 0.0
    %6083 = vmatpush1.msra.mxu0 0.0
    %6084 = vmatprep.subr.mxu0 0.0
    %6085 = vmatpush1.msra.mxu0 0.0
    %6086 = vmatprep.subr.mxu0 0.0
    %6087 = vmatpush1.msra.mxu0 0.0
    %6088 = vmatprep.subr.mxu0 0.0
    %6089 = vmatpush1.msra.mxu0 0.0
    %6090 = vmatprep.mubr.f32.mxu0 0.0
    %v6091 = vand.u32 %v3596, 4294901760
    %6092 = vmatmul.mubr.f32.gmra.mrb[0].mxu0 %v6091
    %v6093 = vpop.f32.mrb[0].mxu0
    %v6094 = vadd.f32 %v5974, %v6093
    %v6095 = vpop.f32.mrb[0].mxu0
    %v6096 = vadd.f32 %v5976, %v6095
    %6097 = vdwg.mxu0
    %v6098 = vand.u32 %v313, 4294901760
    %6099 = vmatprep.subr.mxu0 %v6098
    %v6100 = vand.u32 %v312, 4294901760
    %6101 = vmatpush1.msra.mxu0 %v6100
    %v6102 = vand.u32 %v317, 4294901760
    %6103 = vmatprep.subr.mxu0 %v6102
    %v6104 = vand.u32 %v316, 4294901760
    %6105 = vmatpush1.msra.mxu0 %v6104
    %v6106 = vand.u32 %v321, 4294901760
    %6107 = vmatprep.subr.mxu0 %v6106
    %v6108 = vand.u32 %v320, 4294901760
    %6109 = vmatpush1.msra.mxu0 %v6108
    %v6110 = vand.u32 %v325, 4294901760
    %6111 = vmatprep.subr.mxu0 %v6110
    %v6112 = vand.u32 %v324, 4294901760
    %6113 = vmatpush1.msra.mxu0 %v6112
    %v6114 = vand.u32 %v329, 4294901760
    %6115 = vmatprep.subr.mxu0 %v6114
    %v6116 = vand.u32 %v328, 4294901760
    %6117 = vmatpush1.msra.mxu0 %v6116
    %v6118 = vand.u32 %v333, 4294901760
    %6119 = vmatprep.subr.mxu0 %v6118
    %v6120 = vand.u32 %v332, 4294901760
    %6121 = vmatpush1.msra.mxu0 %v6120
    %v6122 = vand.u32 %v337, 4294901760
    %6123 = vmatprep.subr.mxu0 %v6122
    %v6124 = vand.u32 %v336, 4294901760
    %6125 = vmatpush1.msra.mxu0 %v6124
    %v6126 = vand.u32 %v341, 4294901760
    %6127 = vmatprep.subr.mxu0 %v6126
    %v6128 = vand.u32 %v340, 4294901760
    %6129 = vmatpush1.msra.mxu0 %v6128
    %6130 = vmatprep.subr.mxu0 0.0
    %6131 = vmatpush1.msra.mxu0 0.0
    %6132 = vmatprep.subr.mxu0 0.0
    %6133 = vmatpush1.msra.mxu0 0.0
    %6134 = vmatprep.subr.mxu0 0.0
    %6135 = vmatpush1.msra.mxu0 0.0
    %6136 = vmatprep.subr.mxu0 0.0
    %6137 = vmatpush1.msra.mxu0 0.0
    %6138 = vmatprep.subr.mxu0 0.0
    %6139 = vmatpush1.msra.mxu0 0.0
    %6140 = vmatprep.subr.mxu0 0.0
    %6141 = vmatpush1.msra.mxu0 0.0
    %6142 = vmatprep.subr.mxu0 0.0
    %6143 = vmatpush1.msra.mxu0 0.0
    %6144 = vmatprep.subr.mxu0 0.0
    %6145 = vmatpush1.msra.mxu0 0.0
    %6146 = vmatprep.subr.mxu0 0.0
    %6147 = vmatpush1.msra.mxu0 0.0
    %6148 = vmatprep.subr.mxu0 0.0
    %6149 = vmatpush1.msra.mxu0 0.0
    %6150 = vmatprep.subr.mxu0 0.0
    %6151 = vmatpush1.msra.mxu0 0.0
    %6152 = vmatprep.subr.mxu0 0.0
    %6153 = vmatpush1.msra.mxu0 0.0
    %6154 = vmatprep.subr.mxu0 0.0
    %6155 = vmatpush1.msra.mxu0 0.0
    %6156 = vmatprep.subr.mxu0 0.0
    %6157 = vmatpush1.msra.mxu0 0.0
    %6158 = vmatprep.subr.mxu0 0.0
    %6159 = vmatpush1.msra.mxu0 0.0
    %6160 = vmatprep.subr.mxu0 0.0
    %6161 = vmatpush1.msra.mxu0 0.0
    %6162 = vmatprep.subr.mxu0 0.0
    %6163 = vmatpush1.msra.mxu0 0.0
    %6164 = vmatprep.subr.mxu0 0.0
    %6165 = vmatpush1.msra.mxu0 0.0
    %6166 = vmatprep.subr.mxu0 0.0
    %6167 = vmatpush1.msra.mxu0 0.0
    %6168 = vmatprep.subr.mxu0 0.0
    %6169 = vmatpush1.msra.mxu0 0.0
    %6170 = vmatprep.subr.mxu0 0.0
    %6171 = vmatpush1.msra.mxu0 0.0
    %6172 = vmatprep.subr.mxu0 0.0
    %6173 = vmatpush1.msra.mxu0 0.0
    %6174 = vmatprep.subr.mxu0 0.0
    %6175 = vmatpush1.msra.mxu0 0.0
    %6176 = vmatprep.subr.mxu0 0.0
    %6177 = vmatpush1.msra.mxu0 0.0
    %6178 = vmatprep.mubr.f32.mxu0 0.0
    %v6179 = vand.u32 %v3596, 4294901760
    %6180 = vmatmul.mubr.f32.gmra.mrb[0].mxu0 %v6179
    %v6181 = vpop.f32.mrb[0].mxu0
    %v6182 = vadd.f32 %v6094, %v6181
    %v6183 = vpop.f32.mrb[0].mxu0
    %v6184 = vadd.f32 %v6096, %v6183
    %6185 = vdwg.mxu0
    %v6186 = vmul.f32 %v1156, %v2744
    %v6187 = vmul.f32 %v1158, %v2746
    %v6188 = vmul.f32 %v1950, %v3538
    %v6189 = vmul.f32 %v1952, %v3540
    %v6190 = vmul.f32 %v1163, %v2751
    %v6191 = vmul.f32 %v1165, %v2753
    %v6192 = vmul.f32 %v1957, %v3545
    %v6193 = vmul.f32 %v1959, %v3547
    %v6194 = vmul.f32 %v1170, %v2758
    %v6195 = vmul.f32 %v1172, %v2760
    %v6196 = vmul.f32 %v1964, %v3552
    %v6197 = vmul.f32 %v1966, %v3554
    %v6198 = vmul.f32 %v1177, %v2765
    %v6199 = vmul.f32 %v1179, %v2767
    %v6200 = vmul.f32 %v1971, %v3559
    %v6201 = vmul.f32 %v1973, %v3561
    %v6202 = vadd.f32 %v6186, %v6190
    %v6203 = vadd.f32 %v6202, %v6194
    %v6204 = vadd.f32 %v6203, %v6198
    %v6205 = vrot.slane %v6204, 4
    %v6206 = vadd.f32 %v6204, %v6205
    %v6207 = vrot.slane %v6206, 2
    %v6208 = vadd.f32 %v6206, %v6207
    %v6209 = vrot.slane %v6208, 1
    %v6210 = vadd.f32 %v6208, %v6209
    %v6211 = vadd.f32 %v6187, %v6191
    %v6212 = vadd.f32 %v6211, %v6195
    %v6213 = vadd.f32 %v6212, %v6199
    %v6214 = vrot.slane %v6213, 4
    %v6215 = vadd.f32 %v6213, %v6214
    %v6216 = vrot.slane %v6215, 2
    %v6217 = vadd.f32 %v6215, %v6216
    %v6218 = vrot.slane %v6217, 1
    %v6219 = vadd.f32 %v6217, %v6218
    %v6220 = vadd.f32 %v6188, %v6192
    %v6221 = vadd.f32 %v6220, %v6196
    %v6222 = vadd.f32 %v6221, %v6200
    %v6223 = vrot.slane %v6222, 4
    %v6224 = vadd.f32 %v6222, %v6223
    %v6225 = vrot.slane %v6224, 2
    %v6226 = vadd.f32 %v6224, %v6225
    %v6227 = vrot.slane %v6226, 1
    %v6228 = vadd.f32 %v6226, %v6227
    %v6229 = vadd.f32 %v6189, %v6193
    %v6230 = vadd.f32 %v6229, %v6197
    %v6231 = vadd.f32 %v6230, %v6201
    %v6232 = vrot.slane %v6231, 4
    %v6233 = vadd.f32 %v6231, %v6232
    %v6234 = vrot.slane %v6233, 2
    %v6235 = vadd.f32 %v6233, %v6234
    %v6236 = vrot.slane %v6235, 1
    %v6237 = vadd.f32 %v6235, %v6236
    %v6238 = vmul.f32 %v4241, %v5535
    %v6239 = vmul.f32 %v4243, %v5537
    %v6240 = vmul.f32 %v4888, %v6182
    %v6241 = vmul.f32 %v4890, %v6184
    %vm6242 = vcmask 1041408
    %v6243 = vsel %vm6242, %v6238, 0.0
    %v6244 = vrot.slane %v6243, 4
    %v6245 = vadd.f32 %v6243, %v6244
    %v6246 = vrot.slane %v6245, 2
    %v6247 = vadd.f32 %v6245, %v6246
    %v6248 = vrot.slane %v6247, 1
    %v6249 = vadd.f32 %v6247, %v6248
    %v6250 = vsel %vm6242, %v6239, 0.0
    %v6251 = vrot.slane %v6250, 4
    %v6252 = vadd.f32 %v6250, %v6251
    %v6253 = vrot.slane %v6252, 2
    %v6254 = vadd.f32 %v6252, %v6253
    %v6255 = vrot.slane %v6254, 1
    %v6256 = vadd.f32 %v6254, %v6255
    %v6257 = vsel %vm6242, %v6240, 0.0
    %v6258 = vrot.slane %v6257, 4
    %v6259 = vadd.f32 %v6257, %v6258
    %v6260 = vrot.slane %v6259, 2
    %v6261 = vadd.f32 %v6259, %v6260
    %v6262 = vrot.slane %v6261, 1
    %v6263 = vadd.f32 %v6261, %v6262
    %v6264 = vsel %vm6242, %v6241, 0.0
    %v6265 = vrot.slane %v6264, 4
    %v6266 = vadd.f32 %v6264, %v6265
    %v6267 = vrot.slane %v6266, 2
    %v6268 = vadd.f32 %v6266, %v6267
    %v6269 = vrot.slane %v6268, 1
    %v6270 = vadd.f32 %v6268, %v6269
    %s6271 = sld [smem:[#allocation2]]
    %s6272 = sld [smem:[#allocation2 + $0x1]]
    %v6273 = vsub.f32 %v6210, 1.0
    %v6274 = vsub.f32 %v6219, 1.0
    %v6275 = vsub.f32 %v6228, 1.0
    %v6276 = vsub.f32 %v6237, 1.0
    %v6277 = vmul.f32 %v6273, %v6273
    %v6278 = vmul.f32 %v6274, %v6274
    %v6279 = vmul.f32 %v6275, %v6275
    %v6280 = vmul.f32 %v6276, %v6276
    %v6281 = vstv %s6271
    %v6282 = vsub.f32 %v6210, %v6281
    %v6283 = vsub.f32 %v6219, %v6281
    %v6284 = vsub.f32 %v6228, %v6281
    %v6285 = vsub.f32 %v6237, %v6281
    %v6286 = vmax.f32 %v6282, 0.0
    %v6287 = vmax.f32 %v6283, 0.0
    %v6288 = vmax.f32 %v6284, 0.0
    %v6289 = vmax.f32 %v6285, 0.0
    %v6290 = vmul.f32 %v6286, %v6286
    %v6291 = vmul.f32 %v6287, %v6287
    %v6292 = vmul.f32 %v6288, %v6288
    %v6293 = vmul.f32 %v6289, %v6289
    %v6294 = vmul.f32 %v6277, %v6249
    %v6295 = vmul.f32 %v6278, %v6256
    %v6296 = vmul.f32 %v6279, %v6263
    %v6297 = vmul.f32 %v6280, %v6270
    %v6298 = vsub.f32 1.0, %v6249
    %v6299 = vsub.f32 1.0, %v6256
    %v6300 = vsub.f32 1.0, %v6263
    %v6301 = vsub.f32 1.0, %v6270
    %v6302 = vmul.f32 %v6290, %v6298
    %v6303 = vmul.f32 %v6291, %v6299
    %v6304 = vmul.f32 %v6292, %v6300
    %v6305 = vmul.f32 %v6293, %v6301
    %v6306 = vadd.f32 %v6294, %v6302
    %v6307 = vadd.f32 %v6295, %v6303
    %v6308 = vadd.f32 %v6296, %v6304
    %v6309 = vadd.f32 %v6297, %v6305
    %vm6310 = vcmask 1040384
    %v6311 = vsel %vm6310, %v6306, 0.0
    %v6312 = vsel %vm6310, %v6307, 0.0
    %v6313 = vadd.f32 %v6311, %v6312
    %v6314 = vsel %vm6310, %v6308, 0.0
    %v6315 = vadd.f32 %v6313, %v6314
    %v6316 = vsel %vm6310, %v6309, 0.0
    %v6317 = vadd.f32 %v6315, %v6316
    %6318 = vadd.xlane.f32.xlu0 %v6317
    %v6319 = vpop.xlane.xlu0 %6318
    %v6320 = vrot.slane %v6319, 4
    %v6321 = vadd.f32 %v6319, %v6320
    %v6322 = vrot.slane %v6321, 2
    %v6323 = vadd.f32 %v6321, %v6322
    %v6324 = vrot.slane %v6323, 1
    %v6325 = vadd.f32 %v6323, %v6324
    %s6326 = vtos %v6325
    %v6327 = vstv %s6326
    %v6328 = vstv %s6272
    %v6329 = vmul.f32 %v6327, %v6328
    %vm6330 = vcmask 0
    %6331 = vst.msk [vmem:[#allocation5] sm:$0x1] %vm6330, %v6329
    // Predicated region
    $region26: #{contrastive_loss.1} parent=1 // pred_check
      _
    $region27: #{contrastive_loss.1} parent=1 // pred_check_branch
      %6333 = sbr.rel (0) target = $region29
    $region28: #{contrastive_loss.1} parent=1 // pred_region
      %s6335 = ssub.s32 16, 16
      %6336 = vsyncadd [#allocation3], %s6335
      %s6338 = sshll.u32 [#allocation5], 4
      %s6339 = int_to_ptr.vmem [resolvable:$true] %s6338
      %6341 = dma.vmem_to_hbm [thread:$0]  %s6339, 16, %s5, [#allocation3]
    $region29: #{contrastive_loss.1} parent=1 // pred_fallthru
      _
    // Predicated region
    $region30: #{contrastive_loss.1} parent=1 // pred_check
      _
    $region31: #{contrastive_loss.1} parent=1 // pred_check_branch
      %6343 = sbr.rel (0) target = $region33
    $region32: #{contrastive_loss.1} parent=1 // pred_region
      %6344 = dma.done [#allocation3], 16
    $region33: #{contrastive_loss.1} parent=1 // pred_fallthru
      _
    %6345 = vsyncpa [#allocation3], 1
    %6346 = vsyncpa [#allocation4], 1

</llo_original>
